<compile_context>
chip_gen: v7x
topology: tpu7x:2x2x1
jax: 0.10.0
libtpu: 0.0.40
codegen_flags: <defaults>
</compile_context>

<pallas_src>
import math

import jax
import jax.numpy as jnp
from jax.experimental import pallas as pl
from jax.experimental.pallas import tpu as pltpu

# ---------------- small ViT-MLA config (scaled-down version of the module defaults) ----
IMG = 16          # img_shape
PATCH = 8         # patch_size
CH = 3            # channel
DIM = 32          # dim
INTER = 64        # inter_dim
N_HEAD = 2        # n_head
KV_RANK = 16      # kv_lora_rank   (q_lora_rank = 0)
NOPE = 8          # qk_nope_head_dim
ROPE = 4          # qk_rope_head_dim
VDIM = 8          # v_head_dim
N_LAYER = 2       # n_layer
N_CLASS = 10      # num_classes

GRID_H = IMG // PATCH
GRID_W = IMG // PATCH
N_PATCH = GRID_H * GRID_W            # 4
SEQ = N_PATCH + 1                    # 5  (cls + patches)
SEQ_PAD = 8                          # sublane-aligned sequence
PATCH_DIM = CH * PATCH * PATCH       # 192
QK_DIM = NOPE + ROPE
EPS = 1e-6
ATTN_SCALE = 1.0 / math.sqrt(QK_DIM)

# fused projection (from xn) column layout
_QN0, _QN1 = 0, N_HEAD * NOPE                         # q_nope
_QR0, _QR1 = _QN1, _QN1 + N_HEAD * ROPE               # q_rope
_QRR0, _QRR1 = _QR1, _QR1 + N_HEAD * ROPE             # q_rope @ R (pre-rotated)
_KC0, _KC1 = _QRR1, _QRR1 + KV_RANK                   # compressed kv latent
_KR0, _KR1 = _KC1, _KC1 + ROPE                        # k_rope (shared across heads)
_KRR0, _KRR1 = _KR1, _KR1 + ROPE                      # k_rope @ R
PROJ_COLS = _KRR1                                     # 56


# ---------------- in-kernel helpers ----------------------------------------------------
def _rmsnorm(x, g):
    var = jnp.mean(x * x, axis=-1, keepdims=True)
    return x * jax.lax.rsqrt(var + EPS) * g


# ---------------- the fused ViT kernel --------------------------------------------------
def vit_kernel(p_ref, pg_ref, pw_ref, ta_ref,
               cosq_ref, sinq_ref, cosk_ref, sink_ref,
               ag_ref, wproj_ref, kg_ref, wkvb_ref, wo_ref,
               fg_ref, w13_ref, w2_ref,
               hg_ref, hw_ref, hb_ref,
               o_ref):
    f32 = jnp.float32

    # mask for padded key rows SEQ..SEQ_PAD-1 (applied additively to scores)
    col = jax.lax.broadcasted_iota(jnp.int32, (1, SEQ_PAD), 1)
    key_mask = jnp.where(col < SEQ, 0.0, -1e30).astype(f32)

    # ---- patch embedding + cls token: one aligned matmul + additive table ----
    # p_ref row 0 and rows >= SEQ are zeros (rmsnorm(0)=0); ta_ref row 0 holds the
    # cls token, rows 1..SEQ-1 hold the patch-linear bias.
    pn = _rmsnorm(p_ref[0], pg_ref[...])                                   # (SEQ_PAD, PATCH_DIM)
    x = jnp.dot(pn, pw_ref[...], preferred_element_type=f32) + ta_ref[...]  # (SEQ_PAD, DIM)

    cos_q = cosq_ref[...]
    sin_q = sinq_ref[...]
    cos_k = cosk_ref[...]
    sin_k = sink_ref[...]

    for l in range(N_LAYER):                     # unrolled; weights indexed statically
        # ---- MLA attention (q_lora_rank = 0), pre-RMSNorm, residual add ----
        xn = _rmsnorm(x, ag_ref[pl.ds(l, 1), :])
        proj = jnp.dot(xn, wproj_ref[l], preferred_element_type=f32)       # (SEQ_PAD, 56)
        q_nope = proj[:, _QN0:_QN1]
        q_rope = proj[:, _QR0:_QR1]
        q_rr = proj[:, _QRR0:_QRR1]
        kv_c = _rmsnorm(proj[:, _KC0:_KC1], kg_ref[pl.ds(l, 1), :])        # (SEQ_PAD, KV_RANK)
        k_rope = proj[:, _KR0:_KR1]
        k_rr = proj[:, _KRR0:_KRR1]

        kv = jnp.dot(kv_c, wkvb_ref[l], preferred_element_type=f32)        # (SEQ_PAD, 32)
        k_nope = kv[:, :N_HEAD * NOPE]
        v = kv[:, N_HEAD * NOPE:]

        # rotate-half RoPE without concat/roll: rope(x) = x*cos + (x@R)*sin and the
        # constant rotation R was folded into the *_rr weight columns in the wrapper.
        q_pe = q_rope * cos_q + q_rr * sin_q                               # (SEQ_PAD, H*ROPE)
        k_pe = k_rope * cos_k + k_rr * sin_k                               # (SEQ_PAD, ROPE)

        heads = []
        for h in range(N_HEAD):                  # tiny dims: plain 2D dots per head
            qh = jnp.concatenate(
                [q_nope[:, h * NOPE:(h + 1) * NOPE],
                 q_pe[:, h * ROPE:(h + 1) * ROPE]], axis=-1)               # (SEQ_PAD, QK_DIM)
            kh = jnp.concatenate(
                [k_nope[:, h * NOPE:(h + 1) * NOPE], k_pe], axis=-1)       # (SEQ_PAD, QK_DIM)
            s = jax.lax.dot_general(
                qh, kh, (((1,), (1,)), ((), ())),
                preferred_element_type=f32) * ATTN_SCALE + key_mask        # (SEQ_PAD, SEQ_PAD)
            m = jnp.max(s, axis=-1, keepdims=True)
            p = jnp.exp(s - m)
            p = p * pl.reciprocal(jnp.sum(p, axis=-1, keepdims=True), approx=True)
            heads.append(jnp.dot(p, v[:, h * VDIM:(h + 1) * VDIM],
                                 preferred_element_type=f32))              # (SEQ_PAD, VDIM)
        attn = jnp.concatenate(heads, axis=-1)                             # (SEQ_PAD, H*VDIM)

        x = x + jnp.dot(attn, wo_ref[l], preferred_element_type=f32)

        # ---- gated (SwiGLU-style) MLP, pre-RMSNorm, residual add ----
        xn2 = _rmsnorm(x, fg_ref[pl.ds(l, 1), :])
        gu = jnp.dot(xn2, w13_ref[l], preferred_element_type=f32)          # (SEQ_PAD, 128)
        gate = gu[:, :INTER]
        up = gu[:, INTER:]
        x = x + jnp.dot(jax.nn.silu(gate) * up, w2_ref[l],
                        preferred_element_type=f32)

    # ---- classification head on the cls row ----
    xc = _rmsnorm(x[0:1, :], hg_ref[...])                                  # (1, DIM)
    logits = jnp.dot(xc, hw_ref[...], preferred_element_type=f32) + hb_ref[...]
    o_ref[...] = logits.reshape(1, 1, N_CLASS)


# ---------------- parameters & rope tables ----------------------------------------------
def precompute_rope(dim, seq_len, base=10000.0):
    inv_freq = 1.0 / (base ** (jnp.arange(0, dim, 2, dtype=jnp.float32) / dim))
    t = jnp.arange(seq_len, dtype=jnp.float32)
    ang = jnp.outer(t, inv_freq)                                   # (S, dim/2)
    cos = jnp.concatenate([jnp.cos(ang), jnp.cos(ang)], axis=-1)   # (S, dim)
    sin = jnp.concatenate([jnp.sin(ang), jnp.sin(ang)], axis=-1)
    return cos, sin


def _rot_half_matrix(d):
    # x @ R == concat([-x[d/2:], x[:d/2]])  (rotate-half)
    half = d // 2
    r = jnp.zeros((d, d), jnp.float32)
    r = r.at[half:, :half].set(-jnp.eye(half, dtype=jnp.float32))
    r = r.at[:half, half:].set(jnp.eye(half, dtype=jnp.float32))
    return r


def init_params(key):
    keys = jax.random.split(key, 16)
    s = 0.02
    nrm = lambda k, shape: (s * jax.random.normal(k, shape)).astype(jnp.float32)
    return {
        "patch_g": jnp.ones((1, PATCH_DIM), jnp.float32),
        "patch_w": nrm(keys[0], (PATCH_DIM, DIM)),
        "patch_b": jnp.zeros((1, DIM), jnp.float32),
        "cls": jax.random.normal(keys[1], (1, 1, DIM), jnp.float32),
        "attn_g": jnp.ones((N_LAYER, DIM), jnp.float32),
        "wq_nope": nrm(keys[2], (N_LAYER, DIM, N_HEAD * NOPE)),
        "wq_rope": nrm(keys[3], (N_LAYER, DIM, N_HEAD * ROPE)),
        "wkva_c": nrm(keys[4], (N_LAYER, DIM, KV_RANK)),
        "wkva_r": nrm(keys[5], (N_LAYER, DIM, ROPE)),
        "kv_g": jnp.ones((N_LAYER, KV_RANK), jnp.float32),
        "wkvb_k": nrm(keys[6], (N_LAYER, KV_RANK, N_HEAD * NOPE)),
        "wkvb_v": nrm(keys[7], (N_LAYER, KV_RANK, N_HEAD * VDIM)),
        "wo": nrm(keys[8], (N_LAYER, N_HEAD * VDIM, DIM)),
        "ffn_g": jnp.ones((N_LAYER, DIM), jnp.float32),
        "w1": nrm(keys[9], (N_LAYER, DIM, INTER)),
        "w3": nrm(keys[10], (N_LAYER, DIM, INTER)),
        "w2": nrm(keys[11], (N_LAYER, INTER, DIM)),
        "head_g": jnp.ones((1, DIM), jnp.float32),
        "head_w": nrm(keys[12], (DIM, N_CLASS)),
        "head_b": jnp.zeros((1, N_CLASS), jnp.float32),
    }


# ---------------- full forward -----------------------------------------------------------
def vit_forward(x, params):
    # x is NCHW (B, C, H, W), same as the PyTorch module.
    B = x.shape[0]

    # Rearrange 'b c (h p_h) (w p_w) -> b (h w) (c p_h p_w)'  (pure glue)
    xr = x.reshape(B, CH, GRID_H, PATCH, GRID_W, PATCH)
    xr = xr.transpose(0, 2, 4, 1, 3, 5)
    patches = xr.reshape(B, N_PATCH, PATCH_DIM)

    # sublane-padded patch tensor: row 0 = cls slot (zeros), rows SEQ.. = pad (zeros)
    p_pad = jnp.zeros((B, SEQ_PAD, PATCH_DIM), jnp.float32)
    p_pad = p_pad.at[:, 1:1 + N_PATCH, :].set(patches)

    # additive token table: row 0 = cls token, rows 1..SEQ-1 = patch-linear bias
    tok_add = jnp.zeros((SEQ_PAD, DIM), jnp.float32)
    tok_add = tok_add.at[0, :].set(params["cls"].reshape(DIM))
    tok_add = tok_add.at[1:SEQ, :].set(params["patch_b"].reshape(DIM))

    # rope tables + rotate-half rotation folded into pre-rotated weight columns (glue)
    cos, sin = precompute_rope(ROPE, SEQ_PAD)                     # (SEQ_PAD, ROPE)
    cos_q = jnp.tile(cos, (1, N_HEAD))                            # (SEQ_PAD, H*ROPE)
    sin_q = jnp.tile(sin, (1, N_HEAD))
    rot = _rot_half_matrix(ROPE)
    wq_rope_rot = jnp.einsum(
        'ldhr,rp->ldhp',
        params["wq_rope"].reshape(N_LAYER, DIM, N_HEAD, ROPE), rot
    ).reshape(N_LAYER, DIM, N_HEAD * ROPE)
    wkva_r_rot = jnp.einsum('ldr,rp->ldp', params["wkva_r"], rot)

    # fused (wide, lane-dense) weights
    wproj = jnp.concatenate(
        [params["wq_nope"], params["wq_rope"], wq_rope_rot,
         params["wkva_c"], params["wkva_r"], wkva_r_rot], axis=2)        # (L, DIM, 56)
    wkvb = jnp.concatenate([params["wkvb_k"], params["wkvb_v"]], axis=2)  # (L, KV_RANK, 32)
    w13 = jnp.concatenate([params["w1"], params["w3"]], axis=2)           # (L, DIM, 128)

    const2 = lambda b: (0, 0)
    const3 = lambda b: (0, 0, 0)
    in_specs = [
        pl.BlockSpec((1, SEQ_PAD, PATCH_DIM), lambda b: (b, 0, 0)),       # p_pad
        pl.BlockSpec((1, PATCH_DIM), const2),                             # patch_g
        pl.BlockSpec((PATCH_DIM, DIM), const2),                           # patch_w
        pl.BlockSpec((SEQ_PAD, DIM), const2),                             # tok_add
        pl.BlockSpec((SEQ_PAD, N_HEAD * ROPE), const2),                   # cos_q
        pl.BlockSpec((SEQ_PAD, N_HEAD * ROPE), const2),                   # sin_q
        pl.BlockSpec((SEQ_PAD, ROPE), const2),                            # cos_k
        pl.BlockSpec((SEQ_PAD, ROPE), const2),                            # sin_k
        pl.BlockSpec((N_LAYER, DIM), const2),                             # attn_g
        pl.BlockSpec((N_LAYER, DIM, PROJ_COLS), const3),                  # wproj (fused)
        pl.BlockSpec((N_LAYER, KV_RANK), const2),                         # kv_g
        pl.BlockSpec((N_LAYER, KV_RANK, N_HEAD * (NOPE + VDIM)), const3),  # wkvb (fused)
        pl.BlockSpec((N_LAYER, N_HEAD * VDIM, DIM), const3),              # wo
        pl.BlockSpec((N_LAYER, DIM), const2),                             # ffn_g
        pl.BlockSpec((N_LAYER, DIM, 2 * INTER), const3),                  # w13 (fused)
        pl.BlockSpec((N_LAYER, INTER, DIM), const3),                      # w2
        pl.BlockSpec((1, DIM), const2),                                   # head_g
        pl.BlockSpec((DIM, N_CLASS), const2),                             # head_w
        pl.BlockSpec((1, N_CLASS), const2),                               # head_b
    ]

    out = pl.pallas_call(
        vit_kernel,
        out_shape=jax.ShapeDtypeStruct((B, 1, N_CLASS), jnp.float32),
        grid=(B,),                                     # one image per step: real
        in_specs=in_specs,                             # parallel axis for v7x megacore
        out_specs=pl.BlockSpec((1, 1, N_CLASS), lambda b: (b, 0, 0)),
        compiler_params=pltpu.CompilerParams(
            dimension_semantics=("parallel",)),
    )(p_pad, params["patch_g"], params["patch_w"], tok_add,
      cos_q, sin_q, cos, sin,
      params["attn_g"], wproj, params["kv_g"], wkvb, params["wo"],
      params["ffn_g"], w13, params["w2"],
      params["head_g"], params["head_w"], params["head_b"])
    return out.reshape(B, N_CLASS)


if __name__ == "__main__":
    key = jax.random.PRNGKey(0)
    k_x, k_p = jax.random.split(key)
    x = jax.random.normal(k_x, (2, CH, IMG, IMG), jnp.float32)   # (B, C, H, W) NCHW
    params = init_params(k_p)

    out = jax.jit(vit_forward)(x, params)
    out = jax.block_until_ready(out)
    assert out.shape == (2, N_CLASS), out.shape
    assert bool(jnp.all(jnp.isfinite(out))), "non-finite logits"
    print("KERNEL_OK")
</pallas_src>

<mosaic_0001>
module attributes {stable_mosaic.version = 11 : i64} {
  func.func @vit_kernel(%arg0: i32, %arg1: memref<1x8x192xf32, #tpu.memory_space<vmem>>, %arg2: memref<1x192xf32, #tpu.memory_space<vmem>>, %arg3: memref<192x32xf32, #tpu.memory_space<vmem>>, %arg4: memref<8x32xf32, #tpu.memory_space<vmem>>, %arg5: memref<8x8xf32, #tpu.memory_space<vmem>>, %arg6: memref<8x8xf32, #tpu.memory_space<vmem>>, %arg7: memref<8x4xf32, #tpu.memory_space<vmem>>, %arg8: memref<8x4xf32, #tpu.memory_space<vmem>>, %arg9: memref<2x32xf32, #tpu.memory_space<vmem>>, %arg10: memref<2x32x56xf32, #tpu.memory_space<vmem>>, %arg11: memref<2x16xf32, #tpu.memory_space<vmem>>, %arg12: memref<2x16x32xf32, #tpu.memory_space<vmem>>, %arg13: memref<2x16x32xf32, #tpu.memory_space<vmem>>, %arg14: memref<2x32xf32, #tpu.memory_space<vmem>>, %arg15: memref<2x32x128xf32, #tpu.memory_space<vmem>>, %arg16: memref<2x64x32xf32, #tpu.memory_space<vmem>>, %arg17: memref<1x32xf32, #tpu.memory_space<vmem>>, %arg18: memref<32x10xf32, #tpu.memory_space<vmem>>, %arg19: memref<1x10xf32, #tpu.memory_space<vmem>>, %arg20: memref<1x1x10xf32, #tpu.memory_space<vmem>>) attributes {dimension_semantics = [#tpu.dimension_semantics<parallel>], iteration_bounds = array<i64: 2>, scalar_prefetch = 0 : i64, scratch_operands = 0 : i64, tpu.core_type = #tpu.core_type<tc>, window_params = [{transform_indices = @transform_0, window_bounds = array<i64: 1, 8, 192>}, {pipeline_mode = #tpu.pipeline_mode<synchronous>, transform_indices = @transform_1, window_bounds = array<i64: 1, 192>}, {pipeline_mode = #tpu.pipeline_mode<synchronous>, transform_indices = @transform_2, window_bounds = array<i64: 192, 32>}, {pipeline_mode = #tpu.pipeline_mode<synchronous>, transform_indices = @transform_3, window_bounds = array<i64: 8, 32>}, {pipeline_mode = #tpu.pipeline_mode<synchronous>, transform_indices = @transform_4, window_bounds = array<i64: 8, 8>}, {pipeline_mode = #tpu.pipeline_mode<synchronous>, transform_indices = @transform_5, window_bounds = array<i64: 8, 8>}, {pipeline_mode = #tpu.pipeline_mode<synchronous>, transform_indices = @transform_6, window_bounds = array<i64: 8, 4>}, {pipeline_mode = #tpu.pipeline_mode<synchronous>, transform_indices = @transform_7, window_bounds = array<i64: 8, 4>}, {pipeline_mode = #tpu.pipeline_mode<synchronous>, transform_indices = @transform_8, window_bounds = array<i64: 2, 32>}, {pipeline_mode = #tpu.pipeline_mode<synchronous>, transform_indices = @transform_9, window_bounds = array<i64: 2, 32, 56>}, {pipeline_mode = #tpu.pipeline_mode<synchronous>, transform_indices = @transform_10, window_bounds = array<i64: 2, 16>}, {pipeline_mode = #tpu.pipeline_mode<synchronous>, transform_indices = @transform_11, window_bounds = array<i64: 2, 16, 32>}, {pipeline_mode = #tpu.pipeline_mode<synchronous>, transform_indices = @transform_12, window_bounds = array<i64: 2, 16, 32>}, {pipeline_mode = #tpu.pipeline_mode<synchronous>, transform_indices = @transform_13, window_bounds = array<i64: 2, 32>}, {pipeline_mode = #tpu.pipeline_mode<synchronous>, transform_indices = @transform_14, window_bounds = array<i64: 2, 32, 128>}, {pipeline_mode = #tpu.pipeline_mode<synchronous>, transform_indices = @transform_15, window_bounds = array<i64: 2, 64, 32>}, {pipeline_mode = #tpu.pipeline_mode<synchronous>, transform_indices = @transform_16, window_bounds = array<i64: 1, 32>}, {pipeline_mode = #tpu.pipeline_mode<synchronous>, transform_indices = @transform_17, window_bounds = array<i64: 32, 10>}, {pipeline_mode = #tpu.pipeline_mode<synchronous>, transform_indices = @transform_18, window_bounds = array<i64: 1, 10>}, {transform_indices = @transform_19, window_bounds = array<i64: 1, 1, 10>}]} {
    %0 = tpu.iota {dimensions = array<i32: 1>} : vector<1x8xi32>
    %c5_i32 = arith.constant 5 : i32
    %1 = vector.broadcast %c5_i32 : i32 to vector<1x8xi32>
    %2 = arith.cmpi slt, %0, %1 : vector<1x8xi32>
    %cst = arith.constant 0.000000e+00 : f32
    %cst_0 = arith.constant -1.000000e+30 : f32
    %3 = vector.broadcast %cst : f32 to vector<1x8xf32>
    %4 = vector.broadcast %cst_0 : f32 to vector<1x8xf32>
    %5 = arith.select %2, %3, %4 : vector<1x8xi1>, vector<1x8xf32>
    %c0 = arith.constant 0 : index
    %c0_1 = arith.constant 0 : index
    %c0_2 = arith.constant 0 : index
    %6 = vector.load %arg1[%c0, %c0_1, %c0_2] : memref<1x8x192xf32, #tpu.memory_space<vmem>>, vector<1x8x192xf32>
    %7 = vector.shape_cast %6 : vector<1x8x192xf32> to vector<8x192xf32>
    %c0_3 = arith.constant 0 : index
    %c0_4 = arith.constant 0 : index
    %8 = vector.load %arg2[%c0_3, %c0_4] : memref<1x192xf32, #tpu.memory_space<vmem>>, vector<1x192xf32>
    %9 = arith.mulf %7, %7 : vector<8x192xf32>
    %cst_5 = arith.constant dense<0.000000e+00> : vector<8xf32>
    %10 = vector.multi_reduction <add>, %9, %cst_5 [1] : vector<8x192xf32> to vector<8xf32>
    %11 = vector.shape_cast %10 : vector<8xf32> to vector<8x1xf32>
    %cst_6 = arith.constant 1.920000e+02 : f32
    %12 = vector.broadcast %cst_6 : f32 to vector<8x1xf32>
    %13 = arith.divf %11, %12 : vector<8x1xf32>
    %cst_7 = arith.constant 9.99999997E-7 : f32
    %14 = vector.broadcast %cst_7 : f32 to vector<8x1xf32>
    %15 = arith.addf %13, %14 : vector<8x1xf32>
    %16 = math.rsqrt %15 : vector<8x1xf32>
    %17 = vector.broadcast %16 : vector<8x1xf32> to vector<8x192xf32>
    %18 = arith.mulf %7, %17 : vector<8x192xf32>
    %19 = vector.broadcast %8 : vector<1x192xf32> to vector<8x192xf32>
    %20 = arith.mulf %18, %19 : vector<8x192xf32>
    %c0_8 = arith.constant 0 : index
    %c0_9 = arith.constant 0 : index
    %21 = vector.load %arg3[%c0_8, %c0_9] : memref<192x32xf32, #tpu.memory_space<vmem>>, vector<192x32xf32>
    %cst_10 = arith.constant dense<0.000000e+00> : vector<8x32xf32>
    %22 = tpu.matmul %20, %21, %cst_10 {dimension_numbers = #tpu.dot_dimension_numbers<[1], [0], [0], [1], [0, 0, 1, 1], [], []>} : vector<8x192xf32>, vector<192x32xf32>, vector<8x32xf32> -> vector<8x32xf32>
    %c0_11 = arith.constant 0 : index
    %c0_12 = arith.constant 0 : index
    %23 = vector.load %arg4[%c0_11, %c0_12] : memref<8x32xf32, #tpu.memory_space<vmem>>, vector<8x32xf32>
    %24 = arith.addf %22, %23 : vector<8x32xf32>
    %c0_13 = arith.constant 0 : index
    %c0_14 = arith.constant 0 : index
    %25 = vector.load %arg5[%c0_13, %c0_14] : memref<8x8xf32, #tpu.memory_space<vmem>>, vector<8x8xf32>
    %c0_15 = arith.constant 0 : index
    %c0_16 = arith.constant 0 : index
    %26 = vector.load %arg6[%c0_15, %c0_16] : memref<8x8xf32, #tpu.memory_space<vmem>>, vector<8x8xf32>
    %c0_17 = arith.constant 0 : index
    %c0_18 = arith.constant 0 : index
    %27 = vector.load %arg7[%c0_17, %c0_18] : memref<8x4xf32, #tpu.memory_space<vmem>>, vector<8x4xf32>
    %c0_19 = arith.constant 0 : index
    %c0_20 = arith.constant 0 : index
    %28 = vector.load %arg8[%c0_19, %c0_20] : memref<8x4xf32, #tpu.memory_space<vmem>>, vector<8x4xf32>
    %c0_21 = arith.constant 0 : index
    %c0_22 = arith.constant 0 : index
    %29 = vector.load %arg9[%c0_21, %c0_22] : memref<2x32xf32, #tpu.memory_space<vmem>>, vector<1x32xf32>
    %30 = arith.mulf %24, %24 : vector<8x32xf32>
    %cst_23 = arith.constant dense<0.000000e+00> : vector<8xf32>
    %31 = vector.multi_reduction <add>, %30, %cst_23 [1] : vector<8x32xf32> to vector<8xf32>
    %32 = vector.shape_cast %31 : vector<8xf32> to vector<8x1xf32>
    %cst_24 = arith.constant 3.200000e+01 : f32
    %33 = vector.broadcast %cst_24 : f32 to vector<8x1xf32>
    %34 = arith.divf %32, %33 : vector<8x1xf32>
    %cst_25 = arith.constant 9.99999997E-7 : f32
    %35 = vector.broadcast %cst_25 : f32 to vector<8x1xf32>
    %36 = arith.addf %34, %35 : vector<8x1xf32>
    %37 = math.rsqrt %36 : vector<8x1xf32>
    %38 = vector.broadcast %37 : vector<8x1xf32> to vector<8x32xf32>
    %39 = arith.mulf %24, %38 : vector<8x32xf32>
    %40 = vector.broadcast %29 : vector<1x32xf32> to vector<8x32xf32>
    %41 = arith.mulf %39, %40 : vector<8x32xf32>
    %c0_26 = arith.constant 0 : index
    %c0_27 = arith.constant 0 : index
    %c0_28 = arith.constant 0 : index
    %42 = vector.load %arg10[%c0_26, %c0_27, %c0_28] : memref<2x32x56xf32, #tpu.memory_space<vmem>>, vector<1x32x56xf32>
    %43 = vector.shape_cast %42 : vector<1x32x56xf32> to vector<32x56xf32>
    %cst_29 = arith.constant dense<0.000000e+00> : vector<8x56xf32>
    %44 = tpu.matmul %41, %43, %cst_29 {dimension_numbers = #tpu.dot_dimension_numbers<[1], [0], [0], [1], [0, 0, 1, 1], [], []>} : vector<8x32xf32>, vector<32x56xf32>, vector<8x56xf32> -> vector<8x56xf32>
    %45 = vector.extract_strided_slice %44 {offsets = [0, 0], sizes = [8, 16], strides = [1, 1]} : vector<8x56xf32> to vector<8x16xf32>
    %46 = vector.extract_strided_slice %44 {offsets = [0, 16], sizes = [8, 8], strides = [1, 1]} : vector<8x56xf32> to vector<8x8xf32>
    %47 = vector.extract_strided_slice %44 {offsets = [0, 24], sizes = [8, 8], strides = [1, 1]} : vector<8x56xf32> to vector<8x8xf32>
    %48 = vector.extract_strided_slice %44 {offsets = [0, 32], sizes = [8, 16], strides = [1, 1]} : vector<8x56xf32> to vector<8x16xf32>
    %c0_30 = arith.constant 0 : index
    %c0_31 = arith.constant 0 : index
    %49 = vector.load %arg11[%c0_30, %c0_31] : memref<2x16xf32, #tpu.memory_space<vmem>>, vector<1x16xf32>
    %50 = arith.mulf %48, %48 : vector<8x16xf32>
    %cst_32 = arith.constant dense<0.000000e+00> : vector<8xf32>
    %51 = vector.multi_reduction <add>, %50, %cst_32 [1] : vector<8x16xf32> to vector<8xf32>
    %52 = vector.shape_cast %51 : vector<8xf32> to vector<8x1xf32>
    %cst_33 = arith.constant 1.600000e+01 : f32
    %53 = vector.broadcast %cst_33 : f32 to vector<8x1xf32>
    %54 = arith.divf %52, %53 : vector<8x1xf32>
    %cst_34 = arith.constant 9.99999997E-7 : f32
    %55 = vector.broadcast %cst_34 : f32 to vector<8x1xf32>
    %56 = arith.addf %54, %55 : vector<8x1xf32>
    %57 = math.rsqrt %56 : vector<8x1xf32>
    %58 = vector.broadcast %57 : vector<8x1xf32> to vector<8x16xf32>
    %59 = arith.mulf %48, %58 : vector<8x16xf32>
    %60 = vector.broadcast %49 : vector<1x16xf32> to vector<8x16xf32>
    %61 = arith.mulf %59, %60 : vector<8x16xf32>
    %62 = vector.extract_strided_slice %44 {offsets = [0, 48], sizes = [8, 4], strides = [1, 1]} : vector<8x56xf32> to vector<8x4xf32>
    %63 = vector.extract_strided_slice %44 {offsets = [0, 52], sizes = [8, 4], strides = [1, 1]} : vector<8x56xf32> to vector<8x4xf32>
    %c0_35 = arith.constant 0 : index
    %c0_36 = arith.constant 0 : index
    %c0_37 = arith.constant 0 : index
    %64 = vector.load %arg12[%c0_35, %c0_36, %c0_37] : memref<2x16x32xf32, #tpu.memory_space<vmem>>, vector<1x16x32xf32>
    %65 = vector.shape_cast %64 : vector<1x16x32xf32> to vector<16x32xf32>
    %cst_38 = arith.constant dense<0.000000e+00> : vector<8x32xf32>
    %66 = tpu.matmul %61, %65, %cst_38 {dimension_numbers = #tpu.dot_dimension_numbers<[1], [0], [0], [1], [0, 0, 1, 1], [], []>} : vector<8x16xf32>, vector<16x32xf32>, vector<8x32xf32> -> vector<8x32xf32>
    %67 = vector.extract_strided_slice %66 {offsets = [0, 0], sizes = [8, 16], strides = [1, 1]} : vector<8x32xf32> to vector<8x16xf32>
    %68 = vector.extract_strided_slice %66 {offsets = [0, 16], sizes = [8, 16], strides = [1, 1]} : vector<8x32xf32> to vector<8x16xf32>
    %69 = arith.mulf %46, %25 : vector<8x8xf32>
    %70 = arith.mulf %47, %26 : vector<8x8xf32>
    %71 = arith.addf %69, %70 : vector<8x8xf32>
    %72 = arith.mulf %62, %27 : vector<8x4xf32>
    %73 = arith.mulf %63, %28 : vector<8x4xf32>
    %74 = arith.addf %72, %73 : vector<8x4xf32>
    %75 = vector.extract_strided_slice %45 {offsets = [0, 0], sizes = [8, 8], strides = [1, 1]} : vector<8x16xf32> to vector<8x8xf32>
    %76 = vector.extract_strided_slice %71 {offsets = [0, 0], sizes = [8, 4], strides = [1, 1]} : vector<8x8xf32> to vector<8x4xf32>
    %77 = tpu.concatenate %75, %76 in 1 : vector<8x8xf32>, vector<8x4xf32> -> vector<8x12xf32>
    %78 = vector.extract_strided_slice %67 {offsets = [0, 0], sizes = [8, 8], strides = [1, 1]} : vector<8x16xf32> to vector<8x8xf32>
    %79 = tpu.concatenate %78, %74 in 1 : vector<8x8xf32>, vector<8x4xf32> -> vector<8x12xf32>
    %cst_39 = arith.constant dense<0.000000e+00> : vector<8x8xf32>
    %80 = tpu.matmul %77, %79, %cst_39 {dimension_numbers = #tpu.dot_dimension_numbers<[1], [1], [0], [0], [0, 0, 1, 0], [], []>} : vector<8x12xf32>, vector<8x12xf32>, vector<8x8xf32> -> vector<8x8xf32>
    %cst_40 = arith.constant 0.288675129 : f32
    %81 = vector.broadcast %cst_40 : f32 to vector<8x8xf32>
    %82 = arith.mulf %80, %81 : vector<8x8xf32>
    %83 = vector.broadcast %5 : vector<1x8xf32> to vector<8x8xf32>
    %84 = arith.addf %82, %83 : vector<8x8xf32>
    %cst_41 = arith.constant dense<0xFF800000> : vector<8xf32>
    %85 = vector.multi_reduction <maximumf>, %84, %cst_41 [1] : vector<8x8xf32> to vector<8xf32>
    %86 = vector.shape_cast %85 : vector<8xf32> to vector<8x1xf32>
    %87 = vector.broadcast %86 : vector<8x1xf32> to vector<8x8xf32>
    %88 = arith.subf %84, %87 : vector<8x8xf32>
    %89 = math.exp %88 : vector<8x8xf32>
    %cst_42 = arith.constant dense<0.000000e+00> : vector<8xf32>
    %90 = vector.multi_reduction <add>, %89, %cst_42 [1] : vector<8x8xf32> to vector<8xf32>
    %91 = vector.shape_cast %90 : vector<8xf32> to vector<8x1xf32>
    %92 = tpu.reciprocal %91 {approx = true} : vector<8x1xf32> -> vector<8x1xf32>
    %93 = vector.broadcast %92 : vector<8x1xf32> to vector<8x8xf32>
    %94 = arith.mulf %89, %93 : vector<8x8xf32>
    %95 = vector.extract_strided_slice %68 {offsets = [0, 0], sizes = [8, 8], strides = [1, 1]} : vector<8x16xf32> to vector<8x8xf32>
    %cst_43 = arith.constant dense<0.000000e+00> : vector<8x8xf32>
    %96 = tpu.matmul %94, %95, %cst_43 {dimension_numbers = #tpu.dot_dimension_numbers<[1], [0], [0], [1], [0, 0, 1, 1], [], []>} : vector<8x8xf32>, vector<8x8xf32>, vector<8x8xf32> -> vector<8x8xf32>
    %97 = vector.extract_strided_slice %45 {offsets = [0, 8], sizes = [8, 8], strides = [1, 1]} : vector<8x16xf32> to vector<8x8xf32>
    %98 = vector.extract_strided_slice %71 {offsets = [0, 4], sizes = [8, 4], strides = [1, 1]} : vector<8x8xf32> to vector<8x4xf32>
    %99 = tpu.concatenate %97, %98 in 1 : vector<8x8xf32>, vector<8x4xf32> -> vector<8x12xf32>
    %100 = vector.extract_strided_slice %67 {offsets = [0, 8], sizes = [8, 8], strides = [1, 1]} : vector<8x16xf32> to vector<8x8xf32>
    %101 = tpu.concatenate %100, %74 in 1 : vector<8x8xf32>, vector<8x4xf32> -> vector<8x12xf32>
    %cst_44 = arith.constant dense<0.000000e+00> : vector<8x8xf32>
    %102 = tpu.matmul %99, %101, %cst_44 {dimension_numbers = #tpu.dot_dimension_numbers<[1], [1], [0], [0], [0, 0, 1, 0], [], []>} : vector<8x12xf32>, vector<8x12xf32>, vector<8x8xf32> -> vector<8x8xf32>
    %cst_45 = arith.constant 0.288675129 : f32
    %103 = vector.broadcast %cst_45 : f32 to vector<8x8xf32>
    %104 = arith.mulf %102, %103 : vector<8x8xf32>
    %105 = vector.broadcast %5 : vector<1x8xf32> to vector<8x8xf32>
    %106 = arith.addf %104, %105 : vector<8x8xf32>
    %cst_46 = arith.constant dense<0xFF800000> : vector<8xf32>
    %107 = vector.multi_reduction <maximumf>, %106, %cst_46 [1] : vector<8x8xf32> to vector<8xf32>
    %108 = vector.shape_cast %107 : vector<8xf32> to vector<8x1xf32>
    %109 = vector.broadcast %108 : vector<8x1xf32> to vector<8x8xf32>
    %110 = arith.subf %106, %109 : vector<8x8xf32>
    %111 = math.exp %110 : vector<8x8xf32>
    %cst_47 = arith.constant dense<0.000000e+00> : vector<8xf32>
    %112 = vector.multi_reduction <add>, %111, %cst_47 [1] : vector<8x8xf32> to vector<8xf32>
    %113 = vector.shape_cast %112 : vector<8xf32> to vector<8x1xf32>
    %114 = tpu.reciprocal %113 {approx = true} : vector<8x1xf32> -> vector<8x1xf32>
    %115 = vector.broadcast %114 : vector<8x1xf32> to vector<8x8xf32>
    %116 = arith.mulf %111, %115 : vector<8x8xf32>
    %117 = vector.extract_strided_slice %68 {offsets = [0, 8], sizes = [8, 8], strides = [1, 1]} : vector<8x16xf32> to vector<8x8xf32>
    %cst_48 = arith.constant dense<0.000000e+00> : vector<8x8xf32>
    %118 = tpu.matmul %116, %117, %cst_48 {dimension_numbers = #tpu.dot_dimension_numbers<[1], [0], [0], [1], [0, 0, 1, 1], [], []>} : vector<8x8xf32>, vector<8x8xf32>, vector<8x8xf32> -> vector<8x8xf32>
    %119 = tpu.concatenate %96, %118 in 1 : vector<8x8xf32>, vector<8x8xf32> -> vector<8x16xf32>
    %c0_49 = arith.constant 0 : index
    %c0_50 = arith.constant 0 : index
    %c0_51 = arith.constant 0 : index
    %120 = vector.load %arg13[%c0_49, %c0_50, %c0_51] : memref<2x16x32xf32, #tpu.memory_space<vmem>>, vector<1x16x32xf32>
    %121 = vector.shape_cast %120 : vector<1x16x32xf32> to vector<16x32xf32>
    %cst_52 = arith.constant dense<0.000000e+00> : vector<8x32xf32>
    %122 = tpu.matmul %119, %121, %cst_52 {dimension_numbers = #tpu.dot_dimension_numbers<[1], [0], [0], [1], [0, 0, 1, 1], [], []>} : vector<8x16xf32>, vector<16x32xf32>, vector<8x32xf32> -> vector<8x32xf32>
    %123 = arith.addf %24, %122 : vector<8x32xf32>
    %c0_53 = arith.constant 0 : index
    %c0_54 = arith.constant 0 : index
    %124 = vector.load %arg14[%c0_53, %c0_54] : memref<2x32xf32, #tpu.memory_space<vmem>>, vector<1x32xf32>
    %125 = arith.mulf %123, %123 : vector<8x32xf32>
    %cst_55 = arith.constant dense<0.000000e+00> : vector<8xf32>
    %126 = vector.multi_reduction <add>, %125, %cst_55 [1] : vector<8x32xf32> to vector<8xf32>
    %127 = vector.shape_cast %126 : vector<8xf32> to vector<8x1xf32>
    %cst_56 = arith.constant 3.200000e+01 : f32
    %128 = vector.broadcast %cst_56 : f32 to vector<8x1xf32>
    %129 = arith.divf %127, %128 : vector<8x1xf32>
    %cst_57 = arith.constant 9.99999997E-7 : f32
    %130 = vector.broadcast %cst_57 : f32 to vector<8x1xf32>
    %131 = arith.addf %129, %130 : vector<8x1xf32>
    %132 = math.rsqrt %131 : vector<8x1xf32>
    %133 = vector.broadcast %132 : vector<8x1xf32> to vector<8x32xf32>
    %134 = arith.mulf %123, %133 : vector<8x32xf32>
    %135 = vector.broadcast %124 : vector<1x32xf32> to vector<8x32xf32>
    %136 = arith.mulf %134, %135 : vector<8x32xf32>
    %c0_58 = arith.constant 0 : index
    %c0_59 = arith.constant 0 : index
    %c0_60 = arith.constant 0 : index
    %137 = vector.load %arg15[%c0_58, %c0_59, %c0_60] : memref<2x32x128xf32, #tpu.memory_space<vmem>>, vector<1x32x128xf32>
    %138 = vector.shape_cast %137 : vector<1x32x128xf32> to vector<32x128xf32>
    %cst_61 = arith.constant dense<0.000000e+00> : vector<8x128xf32>
    %139 = tpu.matmul %136, %138, %cst_61 {dimension_numbers = #tpu.dot_dimension_numbers<[1], [0], [0], [1], [0, 0, 1, 1], [], []>} : vector<8x32xf32>, vector<32x128xf32>, vector<8x128xf32> -> vector<8x128xf32>
    %140 = vector.extract_strided_slice %139 {offsets = [0, 0], sizes = [8, 64], strides = [1, 1]} : vector<8x128xf32> to vector<8x64xf32>
    %141 = vector.extract_strided_slice %139 {offsets = [0, 64], sizes = [8, 64], strides = [1, 1]} : vector<8x128xf32> to vector<8x64xf32>
    %142 = arith.negf %140 : vector<8x64xf32>
    %143 = math.exp %142 : vector<8x64xf32>
    %cst_62 = arith.constant 1.000000e+00 : f32
    %144 = vector.broadcast %cst_62 : f32 to vector<8x64xf32>
    %145 = arith.addf %144, %143 : vector<8x64xf32>
    %146 = arith.divf %144, %145 : vector<8x64xf32>
    %147 = arith.mulf %140, %146 : vector<8x64xf32>
    %148 = arith.mulf %147, %141 : vector<8x64xf32>
    %c0_63 = arith.constant 0 : index
    %c0_64 = arith.constant 0 : index
    %c0_65 = arith.constant 0 : index
    %149 = vector.load %arg16[%c0_63, %c0_64, %c0_65] : memref<2x64x32xf32, #tpu.memory_space<vmem>>, vector<1x64x32xf32>
    %150 = vector.shape_cast %149 : vector<1x64x32xf32> to vector<64x32xf32>
    %cst_66 = arith.constant dense<0.000000e+00> : vector<8x32xf32>
    %151 = tpu.matmul %148, %150, %cst_66 {dimension_numbers = #tpu.dot_dimension_numbers<[1], [0], [0], [1], [0, 0, 1, 1], [], []>} : vector<8x64xf32>, vector<64x32xf32>, vector<8x32xf32> -> vector<8x32xf32>
    %152 = arith.addf %123, %151 : vector<8x32xf32>
    %c1 = arith.constant 1 : index
    %c0_67 = arith.constant 0 : index
    %153 = vector.load %arg9[%c1, %c0_67] : memref<2x32xf32, #tpu.memory_space<vmem>>, vector<1x32xf32>
    %154 = arith.mulf %152, %152 : vector<8x32xf32>
    %cst_68 = arith.constant dense<0.000000e+00> : vector<8xf32>
    %155 = vector.multi_reduction <add>, %154, %cst_68 [1] : vector<8x32xf32> to vector<8xf32>
    %156 = vector.shape_cast %155 : vector<8xf32> to vector<8x1xf32>
    %cst_69 = arith.constant 3.200000e+01 : f32
    %157 = vector.broadcast %cst_69 : f32 to vector<8x1xf32>
    %158 = arith.divf %156, %157 : vector<8x1xf32>
    %cst_70 = arith.constant 9.99999997E-7 : f32
    %159 = vector.broadcast %cst_70 : f32 to vector<8x1xf32>
    %160 = arith.addf %158, %159 : vector<8x1xf32>
    %161 = math.rsqrt %160 : vector<8x1xf32>
    %162 = vector.broadcast %161 : vector<8x1xf32> to vector<8x32xf32>
    %163 = arith.mulf %152, %162 : vector<8x32xf32>
    %164 = vector.broadcast %153 : vector<1x32xf32> to vector<8x32xf32>
    %165 = arith.mulf %163, %164 : vector<8x32xf32>
    %c1_71 = arith.constant 1 : index
    %c0_72 = arith.constant 0 : index
    %c0_73 = arith.constant 0 : index
    %166 = vector.load %arg10[%c1_71, %c0_72, %c0_73] : memref<2x32x56xf32, #tpu.memory_space<vmem>>, vector<1x32x56xf32>
    %167 = vector.shape_cast %166 : vector<1x32x56xf32> to vector<32x56xf32>
    %cst_74 = arith.constant dense<0.000000e+00> : vector<8x56xf32>
    %168 = tpu.matmul %165, %167, %cst_74 {dimension_numbers = #tpu.dot_dimension_numbers<[1], [0], [0], [1], [0, 0, 1, 1], [], []>} : vector<8x32xf32>, vector<32x56xf32>, vector<8x56xf32> -> vector<8x56xf32>
    %169 = vector.extract_strided_slice %168 {offsets = [0, 0], sizes = [8, 16], strides = [1, 1]} : vector<8x56xf32> to vector<8x16xf32>
    %170 = vector.extract_strided_slice %168 {offsets = [0, 16], sizes = [8, 8], strides = [1, 1]} : vector<8x56xf32> to vector<8x8xf32>
    %171 = vector.extract_strided_slice %168 {offsets = [0, 24], sizes = [8, 8], strides = [1, 1]} : vector<8x56xf32> to vector<8x8xf32>
    %172 = vector.extract_strided_slice %168 {offsets = [0, 32], sizes = [8, 16], strides = [1, 1]} : vector<8x56xf32> to vector<8x16xf32>
    %c1_75 = arith.constant 1 : index
    %c0_76 = arith.constant 0 : index
    %173 = vector.load %arg11[%c1_75, %c0_76] : memref<2x16xf32, #tpu.memory_space<vmem>>, vector<1x16xf32>
    %174 = arith.mulf %172, %172 : vector<8x16xf32>
    %cst_77 = arith.constant dense<0.000000e+00> : vector<8xf32>
    %175 = vector.multi_reduction <add>, %174, %cst_77 [1] : vector<8x16xf32> to vector<8xf32>
    %176 = vector.shape_cast %175 : vector<8xf32> to vector<8x1xf32>
    %cst_78 = arith.constant 1.600000e+01 : f32
    %177 = vector.broadcast %cst_78 : f32 to vector<8x1xf32>
    %178 = arith.divf %176, %177 : vector<8x1xf32>
    %cst_79 = arith.constant 9.99999997E-7 : f32
    %179 = vector.broadcast %cst_79 : f32 to vector<8x1xf32>
    %180 = arith.addf %178, %179 : vector<8x1xf32>
    %181 = math.rsqrt %180 : vector<8x1xf32>
    %182 = vector.broadcast %181 : vector<8x1xf32> to vector<8x16xf32>
    %183 = arith.mulf %172, %182 : vector<8x16xf32>
    %184 = vector.broadcast %173 : vector<1x16xf32> to vector<8x16xf32>
    %185 = arith.mulf %183, %184 : vector<8x16xf32>
    %186 = vector.extract_strided_slice %168 {offsets = [0, 48], sizes = [8, 4], strides = [1, 1]} : vector<8x56xf32> to vector<8x4xf32>
    %187 = vector.extract_strided_slice %168 {offsets = [0, 52], sizes = [8, 4], strides = [1, 1]} : vector<8x56xf32> to vector<8x4xf32>
    %c1_80 = arith.constant 1 : index
    %c0_81 = arith.constant 0 : index
    %c0_82 = arith.constant 0 : index
    %188 = vector.load %arg12[%c1_80, %c0_81, %c0_82] : memref<2x16x32xf32, #tpu.memory_space<vmem>>, vector<1x16x32xf32>
    %189 = vector.shape_cast %188 : vector<1x16x32xf32> to vector<16x32xf32>
    %cst_83 = arith.constant dense<0.000000e+00> : vector<8x32xf32>
    %190 = tpu.matmul %185, %189, %cst_83 {dimension_numbers = #tpu.dot_dimension_numbers<[1], [0], [0], [1], [0, 0, 1, 1], [], []>} : vector<8x16xf32>, vector<16x32xf32>, vector<8x32xf32> -> vector<8x32xf32>
    %191 = vector.extract_strided_slice %190 {offsets = [0, 0], sizes = [8, 16], strides = [1, 1]} : vector<8x32xf32> to vector<8x16xf32>
    %192 = vector.extract_strided_slice %190 {offsets = [0, 16], sizes = [8, 16], strides = [1, 1]} : vector<8x32xf32> to vector<8x16xf32>
    %193 = arith.mulf %170, %25 : vector<8x8xf32>
    %194 = arith.mulf %171, %26 : vector<8x8xf32>
    %195 = arith.addf %193, %194 : vector<8x8xf32>
    %196 = arith.mulf %186, %27 : vector<8x4xf32>
    %197 = arith.mulf %187, %28 : vector<8x4xf32>
    %198 = arith.addf %196, %197 : vector<8x4xf32>
    %199 = vector.extract_strided_slice %169 {offsets = [0, 0], sizes = [8, 8], strides = [1, 1]} : vector<8x16xf32> to vector<8x8xf32>
    %200 = vector.extract_strided_slice %195 {offsets = [0, 0], sizes = [8, 4], strides = [1, 1]} : vector<8x8xf32> to vector<8x4xf32>
    %201 = tpu.concatenate %199, %200 in 1 : vector<8x8xf32>, vector<8x4xf32> -> vector<8x12xf32>
    %202 = vector.extract_strided_slice %191 {offsets = [0, 0], sizes = [8, 8], strides = [1, 1]} : vector<8x16xf32> to vector<8x8xf32>
    %203 = tpu.concatenate %202, %198 in 1 : vector<8x8xf32>, vector<8x4xf32> -> vector<8x12xf32>
    %cst_84 = arith.constant dense<0.000000e+00> : vector<8x8xf32>
    %204 = tpu.matmul %201, %203, %cst_84 {dimension_numbers = #tpu.dot_dimension_numbers<[1], [1], [0], [0], [0, 0, 1, 0], [], []>} : vector<8x12xf32>, vector<8x12xf32>, vector<8x8xf32> -> vector<8x8xf32>
    %cst_85 = arith.constant 0.288675129 : f32
    %205 = vector.broadcast %cst_85 : f32 to vector<8x8xf32>
    %206 = arith.mulf %204, %205 : vector<8x8xf32>
    %207 = vector.broadcast %5 : vector<1x8xf32> to vector<8x8xf32>
    %208 = arith.addf %206, %207 : vector<8x8xf32>
    %cst_86 = arith.constant dense<0xFF800000> : vector<8xf32>
    %209 = vector.multi_reduction <maximumf>, %208, %cst_86 [1] : vector<8x8xf32> to vector<8xf32>
    %210 = vector.shape_cast %209 : vector<8xf32> to vector<8x1xf32>
    %211 = vector.broadcast %210 : vector<8x1xf32> to vector<8x8xf32>
    %212 = arith.subf %208, %211 : vector<8x8xf32>
    %213 = math.exp %212 : vector<8x8xf32>
    %cst_87 = arith.constant dense<0.000000e+00> : vector<8xf32>
    %214 = vector.multi_reduction <add>, %213, %cst_87 [1] : vector<8x8xf32> to vector<8xf32>
    %215 = vector.shape_cast %214 : vector<8xf32> to vector<8x1xf32>
    %216 = tpu.reciprocal %215 {approx = true} : vector<8x1xf32> -> vector<8x1xf32>
    %217 = vector.broadcast %216 : vector<8x1xf32> to vector<8x8xf32>
    %218 = arith.mulf %213, %217 : vector<8x8xf32>
    %219 = vector.extract_strided_slice %192 {offsets = [0, 0], sizes = [8, 8], strides = [1, 1]} : vector<8x16xf32> to vector<8x8xf32>
    %cst_88 = arith.constant dense<0.000000e+00> : vector<8x8xf32>
    %220 = tpu.matmul %218, %219, %cst_88 {dimension_numbers = #tpu.dot_dimension_numbers<[1], [0], [0], [1], [0, 0, 1, 1], [], []>} : vector<8x8xf32>, vector<8x8xf32>, vector<8x8xf32> -> vector<8x8xf32>
    %221 = vector.extract_strided_slice %169 {offsets = [0, 8], sizes = [8, 8], strides = [1, 1]} : vector<8x16xf32> to vector<8x8xf32>
    %222 = vector.extract_strided_slice %195 {offsets = [0, 4], sizes = [8, 4], strides = [1, 1]} : vector<8x8xf32> to vector<8x4xf32>
    %223 = tpu.concatenate %221, %222 in 1 : vector<8x8xf32>, vector<8x4xf32> -> vector<8x12xf32>
    %224 = vector.extract_strided_slice %191 {offsets = [0, 8], sizes = [8, 8], strides = [1, 1]} : vector<8x16xf32> to vector<8x8xf32>
    %225 = tpu.concatenate %224, %198 in 1 : vector<8x8xf32>, vector<8x4xf32> -> vector<8x12xf32>
    %cst_89 = arith.constant dense<0.000000e+00> : vector<8x8xf32>
    %226 = tpu.matmul %223, %225, %cst_89 {dimension_numbers = #tpu.dot_dimension_numbers<[1], [1], [0], [0], [0, 0, 1, 0], [], []>} : vector<8x12xf32>, vector<8x12xf32>, vector<8x8xf32> -> vector<8x8xf32>
    %cst_90 = arith.constant 0.288675129 : f32
    %227 = vector.broadcast %cst_90 : f32 to vector<8x8xf32>
    %228 = arith.mulf %226, %227 : vector<8x8xf32>
    %229 = vector.broadcast %5 : vector<1x8xf32> to vector<8x8xf32>
    %230 = arith.addf %228, %229 : vector<8x8xf32>
    %cst_91 = arith.constant dense<0xFF800000> : vector<8xf32>
    %231 = vector.multi_reduction <maximumf>, %230, %cst_91 [1] : vector<8x8xf32> to vector<8xf32>
    %232 = vector.shape_cast %231 : vector<8xf32> to vector<8x1xf32>
    %233 = vector.broadcast %232 : vector<8x1xf32> to vector<8x8xf32>
    %234 = arith.subf %230, %233 : vector<8x8xf32>
    %235 = math.exp %234 : vector<8x8xf32>
    %cst_92 = arith.constant dense<0.000000e+00> : vector<8xf32>
    %236 = vector.multi_reduction <add>, %235, %cst_92 [1] : vector<8x8xf32> to vector<8xf32>
    %237 = vector.shape_cast %236 : vector<8xf32> to vector<8x1xf32>
    %238 = tpu.reciprocal %237 {approx = true} : vector<8x1xf32> -> vector<8x1xf32>
    %239 = vector.broadcast %238 : vector<8x1xf32> to vector<8x8xf32>
    %240 = arith.mulf %235, %239 : vector<8x8xf32>
    %241 = vector.extract_strided_slice %192 {offsets = [0, 8], sizes = [8, 8], strides = [1, 1]} : vector<8x16xf32> to vector<8x8xf32>
    %cst_93 = arith.constant dense<0.000000e+00> : vector<8x8xf32>
    %242 = tpu.matmul %240, %241, %cst_93 {dimension_numbers = #tpu.dot_dimension_numbers<[1], [0], [0], [1], [0, 0, 1, 1], [], []>} : vector<8x8xf32>, vector<8x8xf32>, vector<8x8xf32> -> vector<8x8xf32>
    %243 = tpu.concatenate %220, %242 in 1 : vector<8x8xf32>, vector<8x8xf32> -> vector<8x16xf32>
    %c1_94 = arith.constant 1 : index
    %c0_95 = arith.constant 0 : index
    %c0_96 = arith.constant 0 : index
    %244 = vector.load %arg13[%c1_94, %c0_95, %c0_96] : memref<2x16x32xf32, #tpu.memory_space<vmem>>, vector<1x16x32xf32>
    %245 = vector.shape_cast %244 : vector<1x16x32xf32> to vector<16x32xf32>
    %cst_97 = arith.constant dense<0.000000e+00> : vector<8x32xf32>
    %246 = tpu.matmul %243, %245, %cst_97 {dimension_numbers = #tpu.dot_dimension_numbers<[1], [0], [0], [1], [0, 0, 1, 1], [], []>} : vector<8x16xf32>, vector<16x32xf32>, vector<8x32xf32> -> vector<8x32xf32>
    %247 = arith.addf %152, %246 : vector<8x32xf32>
    %c1_98 = arith.constant 1 : index
    %c0_99 = arith.constant 0 : index
    %248 = vector.load %arg14[%c1_98, %c0_99] : memref<2x32xf32, #tpu.memory_space<vmem>>, vector<1x32xf32>
    %249 = arith.mulf %247, %247 : vector<8x32xf32>
    %cst_100 = arith.constant dense<0.000000e+00> : vector<8xf32>
    %250 = vector.multi_reduction <add>, %249, %cst_100 [1] : vector<8x32xf32> to vector<8xf32>
    %251 = vector.shape_cast %250 : vector<8xf32> to vector<8x1xf32>
    %cst_101 = arith.constant 3.200000e+01 : f32
    %252 = vector.broadcast %cst_101 : f32 to vector<8x1xf32>
    %253 = arith.divf %251, %252 : vector<8x1xf32>
    %cst_102 = arith.constant 9.99999997E-7 : f32
    %254 = vector.broadcast %cst_102 : f32 to vector<8x1xf32>
    %255 = arith.addf %253, %254 : vector<8x1xf32>
    %256 = math.rsqrt %255 : vector<8x1xf32>
    %257 = vector.broadcast %256 : vector<8x1xf32> to vector<8x32xf32>
    %258 = arith.mulf %247, %257 : vector<8x32xf32>
    %259 = vector.broadcast %248 : vector<1x32xf32> to vector<8x32xf32>
    %260 = arith.mulf %258, %259 : vector<8x32xf32>
    %c1_103 = arith.constant 1 : index
    %c0_104 = arith.constant 0 : index
    %c0_105 = arith.constant 0 : index
    %261 = vector.load %arg15[%c1_103, %c0_104, %c0_105] : memref<2x32x128xf32, #tpu.memory_space<vmem>>, vector<1x32x128xf32>
    %262 = vector.shape_cast %261 : vector<1x32x128xf32> to vector<32x128xf32>
    %cst_106 = arith.constant dense<0.000000e+00> : vector<8x128xf32>
    %263 = tpu.matmul %260, %262, %cst_106 {dimension_numbers = #tpu.dot_dimension_numbers<[1], [0], [0], [1], [0, 0, 1, 1], [], []>} : vector<8x32xf32>, vector<32x128xf32>, vector<8x128xf32> -> vector<8x128xf32>
    %264 = vector.extract_strided_slice %263 {offsets = [0, 0], sizes = [8, 64], strides = [1, 1]} : vector<8x128xf32> to vector<8x64xf32>
    %265 = vector.extract_strided_slice %263 {offsets = [0, 64], sizes = [8, 64], strides = [1, 1]} : vector<8x128xf32> to vector<8x64xf32>
    %266 = arith.negf %264 : vector<8x64xf32>
    %267 = math.exp %266 : vector<8x64xf32>
    %cst_107 = arith.constant 1.000000e+00 : f32
    %268 = vector.broadcast %cst_107 : f32 to vector<8x64xf32>
    %269 = arith.addf %268, %267 : vector<8x64xf32>
    %270 = arith.divf %268, %269 : vector<8x64xf32>
    %271 = arith.mulf %264, %270 : vector<8x64xf32>
    %272 = arith.mulf %271, %265 : vector<8x64xf32>
    %c1_108 = arith.constant 1 : index
    %c0_109 = arith.constant 0 : index
    %c0_110 = arith.constant 0 : index
    %273 = vector.load %arg16[%c1_108, %c0_109, %c0_110] : memref<2x64x32xf32, #tpu.memory_space<vmem>>, vector<1x64x32xf32>
    %274 = vector.shape_cast %273 : vector<1x64x32xf32> to vector<64x32xf32>
    %cst_111 = arith.constant dense<0.000000e+00> : vector<8x32xf32>
    %275 = tpu.matmul %272, %274, %cst_111 {dimension_numbers = #tpu.dot_dimension_numbers<[1], [0], [0], [1], [0, 0, 1, 1], [], []>} : vector<8x64xf32>, vector<64x32xf32>, vector<8x32xf32> -> vector<8x32xf32>
    %276 = arith.addf %247, %275 : vector<8x32xf32>
    %277 = vector.extract_strided_slice %276 {offsets = [0, 0], sizes = [1, 32], strides = [1, 1]} : vector<8x32xf32> to vector<1x32xf32>
    %c0_112 = arith.constant 0 : index
    %c0_113 = arith.constant 0 : index
    %278 = vector.load %arg17[%c0_112, %c0_113] : memref<1x32xf32, #tpu.memory_space<vmem>>, vector<1x32xf32>
    %279 = arith.mulf %277, %277 : vector<1x32xf32>
    %cst_114 = arith.constant dense<0.000000e+00> : vector<1xf32>
    %280 = vector.multi_reduction <add>, %279, %cst_114 [1] : vector<1x32xf32> to vector<1xf32>
    %281 = vector.shape_cast %280 : vector<1xf32> to vector<1x1xf32>
    %cst_115 = arith.constant 3.200000e+01 : f32
    %282 = vector.broadcast %cst_115 : f32 to vector<1x1xf32>
    %283 = arith.divf %281, %282 : vector<1x1xf32>
    %cst_116 = arith.constant 9.99999997E-7 : f32
    %284 = vector.broadcast %cst_116 : f32 to vector<1x1xf32>
    %285 = arith.addf %283, %284 : vector<1x1xf32>
    %286 = math.rsqrt %285 : vector<1x1xf32>
    %287 = vector.broadcast %286 : vector<1x1xf32> to vector<1x32xf32>
    %288 = arith.mulf %277, %287 : vector<1x32xf32>
    %289 = arith.mulf %288, %278 : vector<1x32xf32>
    %c0_117 = arith.constant 0 : index
    %c0_118 = arith.constant 0 : index
    %290 = vector.load %arg18[%c0_117, %c0_118] : memref<32x10xf32, #tpu.memory_space<vmem>>, vector<32x10xf32>
    %cst_119 = arith.constant dense<0.000000e+00> : vector<1x10xf32>
    %291 = tpu.matmul %289, %290, %cst_119 {dimension_numbers = #tpu.dot_dimension_numbers<[1], [0], [0], [1], [0, 0, 1, 1], [], []>} : vector<1x32xf32>, vector<32x10xf32>, vector<1x10xf32> -> vector<1x10xf32>
    %c0_120 = arith.constant 0 : index
    %c0_121 = arith.constant 0 : index
    %292 = vector.load %arg19[%c0_120, %c0_121] : memref<1x10xf32, #tpu.memory_space<vmem>>, vector<1x10xf32>
    %293 = arith.addf %291, %292 : vector<1x10xf32>
    %294 = vector.shape_cast %293 : vector<1x10xf32> to vector<1x1x10xf32>
    %c0_122 = arith.constant 0 : index
    %c0_123 = arith.constant 0 : index
    %c0_124 = arith.constant 0 : index
    %295 = vector.load %arg20[%c0_122, %c0_123, %c0_124] : memref<1x1x10xf32, #tpu.memory_space<vmem>>, vector<1x1x10xf32>
    tpu.vector_store %arg20[%c0_122, %c0_123, %c0_124], %294 {strides = array<i32>} : memref<1x1x10xf32, #tpu.memory_space<vmem>>, vector<1x1x10xf32>,
    return
  }
  func.func @transform_0(%arg0: i32) -> (i32, i32, i32) {
    %c0_i32 = arith.constant 0 : i32
    %c0_i32_0 = arith.constant 0 : i32
    %c0_i32_1 = arith.constant 0 : i32
    return %arg0, %c0_i32, %c0_i32_0 : i32, i32, i32
  }
  func.func @transform_1(%arg0: i32) -> (i32, i32) {
    %c0_i32 = arith.constant 0 : i32
    %c0_i32_0 = arith.constant 0 : i32
    %c0_i32_1 = arith.constant 0 : i32
    return %c0_i32, %c0_i32_0 : i32, i32
  }
  func.func @transform_2(%arg0: i32) -> (i32, i32) {
    %c0_i32 = arith.constant 0 : i32
    %c0_i32_0 = arith.constant 0 : i32
    %c0_i32_1 = arith.constant 0 : i32
    return %c0_i32, %c0_i32_0 : i32, i32
  }
  func.func @transform_3(%arg0: i32) -> (i32, i32) {
    %c0_i32 = arith.constant 0 : i32
    %c0_i32_0 = arith.constant 0 : i32
    %c0_i32_1 = arith.constant 0 : i32
    return %c0_i32, %c0_i32_0 : i32, i32
  }
  func.func @transform_4(%arg0: i32) -> (i32, i32) {
    %c0_i32 = arith.constant 0 : i32
    %c0_i32_0 = arith.constant 0 : i32
    %c0_i32_1 = arith.constant 0 : i32
    return %c0_i32, %c0_i32_0 : i32, i32
  }
  func.func @transform_5(%arg0: i32) -> (i32, i32) {
    %c0_i32 = arith.constant 0 : i32
    %c0_i32_0 = arith.constant 0 : i32
    %c0_i32_1 = arith.constant 0 : i32
    return %c0_i32, %c0_i32_0 : i32, i32
  }
  func.func @transform_6(%arg0: i32) -> (i32, i32) {
    %c0_i32 = arith.constant 0 : i32
    %c0_i32_0 = arith.constant 0 : i32
    %c0_i32_1 = arith.constant 0 : i32
    return %c0_i32, %c0_i32_0 : i32, i32
  }
  func.func @transform_7(%arg0: i32) -> (i32, i32) {
    %c0_i32 = arith.constant 0 : i32
    %c0_i32_0 = arith.constant 0 : i32
    %c0_i32_1 = arith.constant 0 : i32
    return %c0_i32, %c0_i32_0 : i32, i32
  }
  func.func @transform_8(%arg0: i32) -> (i32, i32) {
    %c0_i32 = arith.constant 0 : i32
    %c0_i32_0 = arith.constant 0 : i32
    %c0_i32_1 = arith.constant 0 : i32
    return %c0_i32, %c0_i32_0 : i32, i32
  }
  func.func @transform_9(%arg0: i32) -> (i32, i32, i32) {
    %c0_i32 = arith.constant 0 : i32
    %c0_i32_0 = arith.constant 0 : i32
    %c0_i32_1 = arith.constant 0 : i32
    %c0_i32_2 = arith.constant 0 : i32
    return %c0_i32, %c0_i32_0, %c0_i32_1 : i32, i32, i32
  }
  func.func @transform_10(%arg0: i32) -> (i32, i32) {
    %c0_i32 = arith.constant 0 : i32
    %c0_i32_0 = arith.constant 0 : i32
    %c0_i32_1 = arith.constant 0 : i32
    return %c0_i32, %c0_i32_0 : i32, i32
  }
  func.func @transform_11(%arg0: i32) -> (i32, i32, i32) {
    %c0_i32 = arith.constant 0 : i32
    %c0_i32_0 = arith.constant 0 : i32
    %c0_i32_1 = arith.constant 0 : i32
    %c0_i32_2 = arith.constant 0 : i32
    return %c0_i32, %c0_i32_0, %c0_i32_1 : i32, i32, i32
  }
  func.func @transform_12(%arg0: i32) -> (i32, i32, i32) {
    %c0_i32 = arith.constant 0 : i32
    %c0_i32_0 = arith.constant 0 : i32
    %c0_i32_1 = arith.constant 0 : i32
    %c0_i32_2 = arith.constant 0 : i32
    return %c0_i32, %c0_i32_0, %c0_i32_1 : i32, i32, i32
  }
  func.func @transform_13(%arg0: i32) -> (i32, i32) {
    %c0_i32 = arith.constant 0 : i32
    %c0_i32_0 = arith.constant 0 : i32
    %c0_i32_1 = arith.constant 0 : i32
    return %c0_i32, %c0_i32_0 : i32, i32
  }
  func.func @transform_14(%arg0: i32) -> (i32, i32, i32) {
    %c0_i32 = arith.constant 0 : i32
    %c0_i32_0 = arith.constant 0 : i32
    %c0_i32_1 = arith.constant 0 : i32
    %c0_i32_2 = arith.constant 0 : i32
    return %c0_i32, %c0_i32_0, %c0_i32_1 : i32, i32, i32
  }
  func.func @transform_15(%arg0: i32) -> (i32, i32, i32) {
    %c0_i32 = arith.constant 0 : i32
    %c0_i32_0 = arith.constant 0 : i32
    %c0_i32_1 = arith.constant 0 : i32
    %c0_i32_2 = arith.constant 0 : i32
    return %c0_i32, %c0_i32_0, %c0_i32_1 : i32, i32, i32
  }
  func.func @transform_16(%arg0: i32) -> (i32, i32) {
    %c0_i32 = arith.constant 0 : i32
    %c0_i32_0 = arith.constant 0 : i32
    %c0_i32_1 = arith.constant 0 : i32
    return %c0_i32, %c0_i32_0 : i32, i32
  }
  func.func @transform_17(%arg0: i32) -> (i32, i32) {
    %c0_i32 = arith.constant 0 : i32
    %c0_i32_0 = arith.constant 0 : i32
    %c0_i32_1 = arith.constant 0 : i32
    return %c0_i32, %c0_i32_0 : i32, i32
  }
  func.func @transform_18(%arg0: i32) -> (i32, i32) {
    %c0_i32 = arith.constant 0 : i32
    %c0_i32_0 = arith.constant 0 : i32
    %c0_i32_1 = arith.constant 0 : i32
    return %c0_i32, %c0_i32_0 : i32, i32
  }
  func.func @transform_19(%arg0: i32) -> (i32, i32, i32) {
    %c0_i32 = arith.constant 0 : i32
    %c0_i32_0 = arith.constant 0 : i32
    %c0_i32_1 = arith.constant 0 : i32
    return %arg0, %c0_i32, %c0_i32_0 : i32, i32, i32
  }
}

</mosaic_0001>

<llo_original>
// kernel: vit_forward.1
$region0: #{vit_forward.1}
  #allocation0 [shape = 'u32[]', space=smem, size = 0x4, offset = 0x4, fixed_abs, tag = 'smem constant byte address 0x4 - core index']
  #allocation1 [shape = 'u32[144,128]{1,0:T(1,128)}', space=vmem, size = 0x12000, scoped, tag = 'internal scratch']
  %s0 = inlined_call_operand.vmem [shape: f32[2,8,192], index: 0, kind: input, shape index: {}]
  %s1 = inlined_call_operand.vmem [shape: f32[1,192], index: 1, kind: input, shape index: {}]
  %s2 = inlined_call_operand.vmem [shape: f32[192,32], index: 2, kind: input, shape index: {}]
  %s3 = inlined_call_operand.vmem [shape: f32[8,32], index: 3, kind: input, shape index: {}]
  %s4 = inlined_call_operand.vmem [shape: f32[8,8], index: 4, kind: input, shape index: {}]
  %s5 = inlined_call_operand.vmem [shape: f32[8,8], index: 5, kind: input, shape index: {}]
  %s6 = inlined_call_operand.vmem [shape: f32[8,4], index: 6, kind: input, shape index: {}]
  %s7 = inlined_call_operand.vmem [shape: f32[8,4], index: 7, kind: input, shape index: {}]
  %s8 = inlined_call_operand.vmem [shape: f32[2,32], index: 8, kind: input, shape index: {}]
  %s9 = inlined_call_operand.vmem [shape: f32[2,32,56], index: 9, kind: input, shape index: {}]
  %s10 = inlined_call_operand.vmem [shape: f32[2,16], index: 10, kind: input, shape index: {}]
  %s11 = inlined_call_operand.vmem [shape: f32[2,16,32], index: 11, kind: input, shape index: {}]
  %s12 = inlined_call_operand.vmem [shape: f32[2,16,32], index: 12, kind: input, shape index: {}]
  %s13 = inlined_call_operand.vmem [shape: f32[2,32], index: 13, kind: input, shape index: {}]
  %s14 = inlined_call_operand.vmem [shape: f32[2,32,128], index: 14, kind: input, shape index: {}]
  %s15 = inlined_call_operand.vmem [shape: f32[2,64,32], index: 15, kind: input, shape index: {}]
  %s16 = inlined_call_operand.vmem [shape: f32[1,32], index: 16, kind: input, shape index: {}]
  %s17 = inlined_call_operand.vmem [shape: f32[32,10], index: 17, kind: input, shape index: {}]
  %s18 = inlined_call_operand.vmem [shape: f32[1,10], index: 18, kind: input, shape index: {}]
  %s19 = inlined_call_operand.hbm [shape: f32[2,1,10], index: 19, kind: output, shape index: {}]
  %s20 = sld [smem:[#allocation0]]
  $region109: #{vit_forward.1} parent=0
    _
  %s22 = ssub.s32 1, %s20
  %s23 = scalar_select 0, %s22, %s20
  $region1: #{vit_forward.1} parent=0
    #allocation2 [shape = 'u8[1024]{0}', space=vmem, size = 0x400, scoped, tag = 'output window, operand 0']
    #allocation3 [shape = 's32[2]{0}', space=sflag, size = 0x8, scoped, tag = 'scoped memory for vit_forward.1']
    %24 = vsyncpa [#allocation3], 0
    %s25 = scalar_lea.sflag [#allocation3], 1
    %26 = vsyncpa %s25, 0
    loop: start=0, step=1, limit=4
    $region2: #{vit_forward.1} parent=1 // loop_pre_header
      _
    $region3: #{vit_forward.1} parent=1 // loop_header
      %s28 = sphi 0, %s32
      %p29 = scmp.ge.s32.totalorder %s28, 4
      %s38 = sphi 0, %s40
      %s41 = sphi 0, %s38
      %s42 = sphi 0, %s41
      %s58 = sphi 0, %s42
      %s62 = sphi 0, %s62
      %s64 = sphi 0, %s62
      %s65 = sphi 0, %s64
      %s79 = sphi 0, %s65
      %s83 = sphi 0, %s83
      %s85 = sphi 0, %s83
      %s86 = sphi 0, %s85
      %s100 = sphi 0, %s86
      %s104 = sphi 0, %s104
      %s106 = sphi 0, %s104
      %s107 = sphi 0, %s106
      %s121 = sphi 0, %s107
      %s125 = sphi 0, %s125
      %s127 = sphi 0, %s125
      %s128 = sphi 0, %s127
      %s142 = sphi 0, %s128
      %s146 = sphi 0, %s146
      %s148 = sphi 0, %s146
      %s149 = sphi 0, %s148
      %s163 = sphi 0, %s149
      %s167 = sphi 0, %s167
      %s169 = sphi 0, %s167
      %s170 = sphi 0, %s169
      %s184 = sphi 0, %s170
      %s188 = sphi 0, %s188
      %s190 = sphi 0, %s188
      %s191 = sphi 0, %s190
      %s205 = sphi 0, %s191
      %s209 = sphi 0, %s209
      %s211 = sphi 0, %s209
      %s212 = sphi 0, %s211
      %s226 = sphi 0, %s212
      %s230 = sphi 0, %s230
      %s232 = sphi 0, %s230
      %s233 = sphi 0, %s232
      %s247 = sphi 0, %s233
      %s251 = sphi 0, %s251
      %s253 = sphi 0, %s251
      %s254 = sphi 0, %s253
      %s268 = sphi 0, %s254
      %s272 = sphi 0, %s272
      %s274 = sphi 0, %s272
      %s275 = sphi 0, %s274
      %s289 = sphi 0, %s275
      %s293 = sphi 0, %s293
      %s295 = sphi 0, %s293
      %s296 = sphi 0, %s295
      %s310 = sphi 0, %s296
      %s314 = sphi 0, %s314
      %s316 = sphi 0, %s314
      %s317 = sphi 0, %s316
      %s331 = sphi 0, %s317
      %s335 = sphi 0, %s335
      %s337 = sphi 0, %s335
      %s338 = sphi 0, %s337
      %s352 = sphi 0, %s338
      %s356 = sphi 0, %s356
      %s358 = sphi 0, %s356
      %s359 = sphi 0, %s358
      %s373 = sphi 0, %s359
      %s377 = sphi 0, %s377
      %s379 = sphi 0, %s377
      %s380 = sphi 0, %s379
      %s394 = sphi 0, %s380
      %s398 = sphi 0, %s398
      %s400 = sphi 0, %s398
      %s401 = sphi 0, %s400
      %s415 = sphi 0, %s401
      %s419 = sphi 0, %s419
      %s421 = sphi 0, %s419
      %s422 = sphi 0, %s421
      %s436 = sphi 0, %s422
      %s442 = sphi 0, %s444
      %s445 = sphi 0, %s442
      %s446 = sphi 0, %s445
      %s462 = sphi 0, %s446
    $region4: #{vit_forward.1} parent=1 // loop_header_branch
      %31 = sbr.rel (%p29) target = $region8
    $region5: #{vit_forward.1} parent=1 // loop_body
      %s33 = ssub.s32 %s28, 1
      %s34 = ssub.s32 %s28, 2
      %s35 = sadd.s32 %s28, 1
      %s36 = ssub.s32 %s28, %s35
      %p37 = scmp.eq.s32.totalorder %s36, 0
      %s39 = sadd.s32 %s38, 1
      %s40 = scalar_select %p37, %s38, %s39
      %p43 = pneg %p37
      %p44 = scmp.eq.s32.totalorder %s28, 1
      %p45 = por %p43, %p44
      %p46 = scmp.ne.s32.totalorder %s38, %s41
      %p47 = scmp.eq.s32.totalorder %s28, 0
      %p48 = por %p46, %p47
      %p49 = scmp.ne.s32.totalorder %s38, %s41
      %p50 = scmp.eq.s32.totalorder %s33, 1
      %p51 = por %p49, %p50
      %p52 = scmp.ne.s32.totalorder %s41, %s42
      %p53 = scmp.eq.s32.totalorder %s33, 0
      %p54 = por %p52, %p53
      %p55 = scmp.ne.s32.totalorder %s41, %s42
      %p56 = scmp.eq.s32.totalorder %s34, 1
      %p57 = por %p55, %p56
      %p59 = scmp.ne.s32.totalorder %s42, %s58
      %p60 = scmp.eq.s32.totalorder %s34, 0
      %p61 = por %p59, %p60
      %s63 = sadd.s32 %s62, 1
      %p66 = scmp.eq.s32.totalorder %s28, 1
      %p67 = scmp.ne.s32.totalorder %s62, %s64
      %p68 = scmp.eq.s32.totalorder %s28, 0
      %p69 = por %p67, %p68
      %p70 = scmp.ne.s32.totalorder %s62, %s64
      %p71 = scmp.eq.s32.totalorder %s33, 1
      %p72 = por %p70, %p71
      %p73 = scmp.ne.s32.totalorder %s64, %s65
      %p74 = scmp.eq.s32.totalorder %s33, 0
      %p75 = por %p73, %p74
      %p76 = scmp.ne.s32.totalorder %s64, %s65
      %p77 = scmp.eq.s32.totalorder %s34, 1
      %p78 = por %p76, %p77
      %p80 = scmp.ne.s32.totalorder %s65, %s79
      %p81 = scmp.eq.s32.totalorder %s34, 0
      %p82 = por %p80, %p81
      %s84 = sadd.s32 %s83, 1
      %p87 = scmp.eq.s32.totalorder %s28, 1
      %p88 = scmp.ne.s32.totalorder %s83, %s85
      %p89 = scmp.eq.s32.totalorder %s28, 0
      %p90 = por %p88, %p89
      %p91 = scmp.ne.s32.totalorder %s83, %s85
      %p92 = scmp.eq.s32.totalorder %s33, 1
      %p93 = por %p91, %p92
      %p94 = scmp.ne.s32.totalorder %s85, %s86
      %p95 = scmp.eq.s32.totalorder %s33, 0
      %p96 = por %p94, %p95
      %p97 = scmp.ne.s32.totalorder %s85, %s86
      %p98 = scmp.eq.s32.totalorder %s34, 1
      %p99 = por %p97, %p98
      %p101 = scmp.ne.s32.totalorder %s86, %s100
      %p102 = scmp.eq.s32.totalorder %s34, 0
      %p103 = por %p101, %p102
      %s105 = sadd.s32 %s104, 1
      %p108 = scmp.eq.s32.totalorder %s28, 1
      %p109 = scmp.ne.s32.totalorder %s104, %s106
      %p110 = scmp.eq.s32.totalorder %s28, 0
      %p111 = por %p109, %p110
      %p112 = scmp.ne.s32.totalorder %s104, %s106
      %p113 = scmp.eq.s32.totalorder %s33, 1
      %p114 = por %p112, %p113
      %p115 = scmp.ne.s32.totalorder %s106, %s107
      %p116 = scmp.eq.s32.totalorder %s33, 0
      %p117 = por %p115, %p116
      %p118 = scmp.ne.s32.totalorder %s106, %s107
      %p119 = scmp.eq.s32.totalorder %s34, 1
      %p120 = por %p118, %p119
      %p122 = scmp.ne.s32.totalorder %s107, %s121
      %p123 = scmp.eq.s32.totalorder %s34, 0
      %p124 = por %p122, %p123
      %s126 = sadd.s32 %s125, 1
      %p129 = scmp.eq.s32.totalorder %s28, 1
      %p130 = scmp.ne.s32.totalorder %s125, %s127
      %p131 = scmp.eq.s32.totalorder %s28, 0
      %p132 = por %p130, %p131
      %p133 = scmp.ne.s32.totalorder %s125, %s127
      %p134 = scmp.eq.s32.totalorder %s33, 1
      %p135 = por %p133, %p134
      %p136 = scmp.ne.s32.totalorder %s127, %s128
      %p137 = scmp.eq.s32.totalorder %s33, 0
      %p138 = por %p136, %p137
      %p139 = scmp.ne.s32.totalorder %s127, %s128
      %p140 = scmp.eq.s32.totalorder %s34, 1
      %p141 = por %p139, %p140
      %p143 = scmp.ne.s32.totalorder %s128, %s142
      %p144 = scmp.eq.s32.totalorder %s34, 0
      %p145 = por %p143, %p144
      %s147 = sadd.s32 %s146, 1
      %p150 = scmp.eq.s32.totalorder %s28, 1
      %p151 = scmp.ne.s32.totalorder %s146, %s148
      %p152 = scmp.eq.s32.totalorder %s28, 0
      %p153 = por %p151, %p152
      %p154 = scmp.ne.s32.totalorder %s146, %s148
      %p155 = scmp.eq.s32.totalorder %s33, 1
      %p156 = por %p154, %p155
      %p157 = scmp.ne.s32.totalorder %s148, %s149
      %p158 = scmp.eq.s32.totalorder %s33, 0
      %p159 = por %p157, %p158
      %p160 = scmp.ne.s32.totalorder %s148, %s149
      %p161 = scmp.eq.s32.totalorder %s34, 1
      %p162 = por %p160, %p161
      %p164 = scmp.ne.s32.totalorder %s149, %s163
      %p165 = scmp.eq.s32.totalorder %s34, 0
      %p166 = por %p164, %p165
      %s168 = sadd.s32 %s167, 1
      %p171 = scmp.eq.s32.totalorder %s28, 1
      %p172 = scmp.ne.s32.totalorder %s167, %s169
      %p173 = scmp.eq.s32.totalorder %s28, 0
      %p174 = por %p172, %p173
      %p175 = scmp.ne.s32.totalorder %s167, %s169
      %p176 = scmp.eq.s32.totalorder %s33, 1
      %p177 = por %p175, %p176
      %p178 = scmp.ne.s32.totalorder %s169, %s170
      %p179 = scmp.eq.s32.totalorder %s33, 0
      %p180 = por %p178, %p179
      %p181 = scmp.ne.s32.totalorder %s169, %s170
      %p182 = scmp.eq.s32.totalorder %s34, 1
      %p183 = por %p181, %p182
      %p185 = scmp.ne.s32.totalorder %s170, %s184
      %p186 = scmp.eq.s32.totalorder %s34, 0
      %p187 = por %p185, %p186
      %s189 = sadd.s32 %s188, 1
      %p192 = scmp.eq.s32.totalorder %s28, 1
      %p193 = scmp.ne.s32.totalorder %s188, %s190
      %p194 = scmp.eq.s32.totalorder %s28, 0
      %p195 = por %p193, %p194
      %p196 = scmp.ne.s32.totalorder %s188, %s190
      %p197 = scmp.eq.s32.totalorder %s33, 1
      %p198 = por %p196, %p197
      %p199 = scmp.ne.s32.totalorder %s190, %s191
      %p200 = scmp.eq.s32.totalorder %s33, 0
      %p201 = por %p199, %p200
      %p202 = scmp.ne.s32.totalorder %s190, %s191
      %p203 = scmp.eq.s32.totalorder %s34, 1
      %p204 = por %p202, %p203
      %p206 = scmp.ne.s32.totalorder %s191, %s205
      %p207 = scmp.eq.s32.totalorder %s34, 0
      %p208 = por %p206, %p207
      %s210 = sadd.s32 %s209, 1
      %p213 = scmp.eq.s32.totalorder %s28, 1
      %p214 = scmp.ne.s32.totalorder %s209, %s211
      %p215 = scmp.eq.s32.totalorder %s28, 0
      %p216 = por %p214, %p215
      %p217 = scmp.ne.s32.totalorder %s209, %s211
      %p218 = scmp.eq.s32.totalorder %s33, 1
      %p219 = por %p217, %p218
      %p220 = scmp.ne.s32.totalorder %s211, %s212
      %p221 = scmp.eq.s32.totalorder %s33, 0
      %p222 = por %p220, %p221
      %p223 = scmp.ne.s32.totalorder %s211, %s212
      %p224 = scmp.eq.s32.totalorder %s34, 1
      %p225 = por %p223, %p224
      %p227 = scmp.ne.s32.totalorder %s212, %s226
      %p228 = scmp.eq.s32.totalorder %s34, 0
      %p229 = por %p227, %p228
      %s231 = sadd.s32 %s230, 1
      %p234 = scmp.eq.s32.totalorder %s28, 1
      %p235 = scmp.ne.s32.totalorder %s230, %s232
      %p236 = scmp.eq.s32.totalorder %s28, 0
      %p237 = por %p235, %p236
      %p238 = scmp.ne.s32.totalorder %s230, %s232
      %p239 = scmp.eq.s32.totalorder %s33, 1
      %p240 = por %p238, %p239
      %p241 = scmp.ne.s32.totalorder %s232, %s233
      %p242 = scmp.eq.s32.totalorder %s33, 0
      %p243 = por %p241, %p242
      %p244 = scmp.ne.s32.totalorder %s232, %s233
      %p245 = scmp.eq.s32.totalorder %s34, 1
      %p246 = por %p244, %p245
      %p248 = scmp.ne.s32.totalorder %s233, %s247
      %p249 = scmp.eq.s32.totalorder %s34, 0
      %p250 = por %p248, %p249
      %s252 = sadd.s32 %s251, 1
      %p255 = scmp.eq.s32.totalorder %s28, 1
      %p256 = scmp.ne.s32.totalorder %s251, %s253
      %p257 = scmp.eq.s32.totalorder %s28, 0
      %p258 = por %p256, %p257
      %p259 = scmp.ne.s32.totalorder %s251, %s253
      %p260 = scmp.eq.s32.totalorder %s33, 1
      %p261 = por %p259, %p260
      %p262 = scmp.ne.s32.totalorder %s253, %s254
      %p263 = scmp.eq.s32.totalorder %s33, 0
      %p264 = por %p262, %p263
      %p265 = scmp.ne.s32.totalorder %s253, %s254
      %p266 = scmp.eq.s32.totalorder %s34, 1
      %p267 = por %p265, %p266
      %p269 = scmp.ne.s32.totalorder %s254, %s268
      %p270 = scmp.eq.s32.totalorder %s34, 0
      %p271 = por %p269, %p270
      %s273 = sadd.s32 %s272, 1
      %p276 = scmp.eq.s32.totalorder %s28, 1
      %p277 = scmp.ne.s32.totalorder %s272, %s274
      %p278 = scmp.eq.s32.totalorder %s28, 0
      %p279 = por %p277, %p278
      %p280 = scmp.ne.s32.totalorder %s272, %s274
      %p281 = scmp.eq.s32.totalorder %s33, 1
      %p282 = por %p280, %p281
      %p283 = scmp.ne.s32.totalorder %s274, %s275
      %p284 = scmp.eq.s32.totalorder %s33, 0
      %p285 = por %p283, %p284
      %p286 = scmp.ne.s32.totalorder %s274, %s275
      %p287 = scmp.eq.s32.totalorder %s34, 1
      %p288 = por %p286, %p287
      %p290 = scmp.ne.s32.totalorder %s275, %s289
      %p291 = scmp.eq.s32.totalorder %s34, 0
      %p292 = por %p290, %p291
      %s294 = sadd.s32 %s293, 1
      %p297 = scmp.eq.s32.totalorder %s28, 1
      %p298 = scmp.ne.s32.totalorder %s293, %s295
      %p299 = scmp.eq.s32.totalorder %s28, 0
      %p300 = por %p298, %p299
      %p301 = scmp.ne.s32.totalorder %s293, %s295
      %p302 = scmp.eq.s32.totalorder %s33, 1
      %p303 = por %p301, %p302
      %p304 = scmp.ne.s32.totalorder %s295, %s296
      %p305 = scmp.eq.s32.totalorder %s33, 0
      %p306 = por %p304, %p305
      %p307 = scmp.ne.s32.totalorder %s295, %s296
      %p308 = scmp.eq.s32.totalorder %s34, 1
      %p309 = por %p307, %p308
      %p311 = scmp.ne.s32.totalorder %s296, %s310
      %p312 = scmp.eq.s32.totalorder %s34, 0
      %p313 = por %p311, %p312
      %s315 = sadd.s32 %s314, 1
      %p318 = scmp.eq.s32.totalorder %s28, 1
      %p319 = scmp.ne.s32.totalorder %s314, %s316
      %p320 = scmp.eq.s32.totalorder %s28, 0
      %p321 = por %p319, %p320
      %p322 = scmp.ne.s32.totalorder %s314, %s316
      %p323 = scmp.eq.s32.totalorder %s33, 1
      %p324 = por %p322, %p323
      %p325 = scmp.ne.s32.totalorder %s316, %s317
      %p326 = scmp.eq.s32.totalorder %s33, 0
      %p327 = por %p325, %p326
      %p328 = scmp.ne.s32.totalorder %s316, %s317
      %p329 = scmp.eq.s32.totalorder %s34, 1
      %p330 = por %p328, %p329
      %p332 = scmp.ne.s32.totalorder %s317, %s331
      %p333 = scmp.eq.s32.totalorder %s34, 0
      %p334 = por %p332, %p333
      %s336 = sadd.s32 %s335, 1
      %p339 = scmp.eq.s32.totalorder %s28, 1
      %p340 = scmp.ne.s32.totalorder %s335, %s337
      %p341 = scmp.eq.s32.totalorder %s28, 0
      %p342 = por %p340, %p341
      %p343 = scmp.ne.s32.totalorder %s335, %s337
      %p344 = scmp.eq.s32.totalorder %s33, 1
      %p345 = por %p343, %p344
      %p346 = scmp.ne.s32.totalorder %s337, %s338
      %p347 = scmp.eq.s32.totalorder %s33, 0
      %p348 = por %p346, %p347
      %p349 = scmp.ne.s32.totalorder %s337, %s338
      %p350 = scmp.eq.s32.totalorder %s34, 1
      %p351 = por %p349, %p350
      %p353 = scmp.ne.s32.totalorder %s338, %s352
      %p354 = scmp.eq.s32.totalorder %s34, 0
      %p355 = por %p353, %p354
      %s357 = sadd.s32 %s356, 1
      %p360 = scmp.eq.s32.totalorder %s28, 1
      %p361 = scmp.ne.s32.totalorder %s356, %s358
      %p362 = scmp.eq.s32.totalorder %s28, 0
      %p363 = por %p361, %p362
      %p364 = scmp.ne.s32.totalorder %s356, %s358
      %p365 = scmp.eq.s32.totalorder %s33, 1
      %p366 = por %p364, %p365
      %p367 = scmp.ne.s32.totalorder %s358, %s359
      %p368 = scmp.eq.s32.totalorder %s33, 0
      %p369 = por %p367, %p368
      %p370 = scmp.ne.s32.totalorder %s358, %s359
      %p371 = scmp.eq.s32.totalorder %s34, 1
      %p372 = por %p370, %p371
      %p374 = scmp.ne.s32.totalorder %s359, %s373
      %p375 = scmp.eq.s32.totalorder %s34, 0
      %p376 = por %p374, %p375
      %s378 = sadd.s32 %s377, 1
      %p381 = scmp.eq.s32.totalorder %s28, 1
      %p382 = scmp.ne.s32.totalorder %s377, %s379
      %p383 = scmp.eq.s32.totalorder %s28, 0
      %p384 = por %p382, %p383
      %p385 = scmp.ne.s32.totalorder %s377, %s379
      %p386 = scmp.eq.s32.totalorder %s33, 1
      %p387 = por %p385, %p386
      %p388 = scmp.ne.s32.totalorder %s379, %s380
      %p389 = scmp.eq.s32.totalorder %s33, 0
      %p390 = por %p388, %p389
      %p391 = scmp.ne.s32.totalorder %s379, %s380
      %p392 = scmp.eq.s32.totalorder %s34, 1
      %p393 = por %p391, %p392
      %p395 = scmp.ne.s32.totalorder %s380, %s394
      %p396 = scmp.eq.s32.totalorder %s34, 0
      %p397 = por %p395, %p396
      %s399 = sadd.s32 %s398, 1
      %p402 = scmp.eq.s32.totalorder %s28, 1
      %p403 = scmp.ne.s32.totalorder %s398, %s400
      %p404 = scmp.eq.s32.totalorder %s28, 0
      %p405 = por %p403, %p404
      %p406 = scmp.ne.s32.totalorder %s398, %s400
      %p407 = scmp.eq.s32.totalorder %s33, 1
      %p408 = por %p406, %p407
      %p409 = scmp.ne.s32.totalorder %s400, %s401
      %p410 = scmp.eq.s32.totalorder %s33, 0
      %p411 = por %p409, %p410
      %p412 = scmp.ne.s32.totalorder %s400, %s401
      %p413 = scmp.eq.s32.totalorder %s34, 1
      %p414 = por %p412, %p413
      %p416 = scmp.ne.s32.totalorder %s401, %s415
      %p417 = scmp.eq.s32.totalorder %s34, 0
      %p418 = por %p416, %p417
      %s420 = sadd.s32 %s419, 1
      %p423 = scmp.eq.s32.totalorder %s28, 1
      %p424 = scmp.ne.s32.totalorder %s419, %s421
      %p425 = scmp.eq.s32.totalorder %s28, 0
      %p426 = por %p424, %p425
      %p427 = scmp.ne.s32.totalorder %s419, %s421
      %p428 = scmp.eq.s32.totalorder %s33, 1
      %p429 = por %p427, %p428
      %p430 = scmp.ne.s32.totalorder %s421, %s422
      %p431 = scmp.eq.s32.totalorder %s33, 0
      %p432 = por %p430, %p431
      %p433 = scmp.ne.s32.totalorder %s421, %s422
      %p434 = scmp.eq.s32.totalorder %s34, 1
      %p435 = por %p433, %p434
      %p437 = scmp.ne.s32.totalorder %s422, %s436
      %p438 = scmp.eq.s32.totalorder %s34, 0
      %p439 = por %p437, %p438
      %s440 = ssub.s32 %s28, %s35
      %p441 = scmp.eq.s32.totalorder %s440, 0
      %s443 = sadd.s32 %s442, 1
      %s444 = scalar_select %p441, %s442, %s443
      %p447 = pneg %p441
      %p448 = scmp.eq.s32.totalorder %s28, 1
      %p449 = por %p447, %p448
      %p450 = scmp.ne.s32.totalorder %s442, %s445
      %p451 = scmp.eq.s32.totalorder %s28, 0
      %p452 = por %p450, %p451
      %p453 = scmp.ne.s32.totalorder %s442, %s445
      %p454 = scmp.eq.s32.totalorder %s33, 1
      %p455 = por %p453, %p454
      %p456 = scmp.ne.s32.totalorder %s445, %s446
      %p457 = scmp.eq.s32.totalorder %s33, 0
      %p458 = por %p456, %p457
      %p459 = scmp.ne.s32.totalorder %s445, %s446
      %p460 = scmp.eq.s32.totalorder %s34, 1
      %p461 = por %p459, %p460
      %p463 = scmp.ne.s32.totalorder %s446, %s462
      %p464 = scmp.eq.s32.totalorder %s34, 0
      %p465 = por %p463, %p464
      %p466 = scmp.le.s32.totalorder 1, %s28
      %p467 = scmp.lt.s32.totalorder %s28, 3
      %p468 = pnand %p466, %p467
      %p469 = pneg %p468
      // Predicated region
      $region9: #{vit_forward.1} parent=5 // pred_check
        _
      $region10: #{vit_forward.1} parent=5 // pred_check_branch
        %471 = sbr.rel (%p468) target = $region12
      $region11: #{vit_forward.1} parent=5 // pred_region
        %s472 = ssub.s32 %s28, 1
        // Predicated region
        $region13: #{vit_forward.1} parent=11 // pred_check
          %p473 = pneg %p75
        $region14: #{vit_forward.1} parent=11 // pred_check_branch
          %475 = sbr.rel (%p473) target = $region16
        $region15: #{vit_forward.1} parent=11 // pred_region
          _
        $region16: #{vit_forward.1} parent=11 // pred_fallthru
          _
        // Predicated region
        $region17: #{vit_forward.1} parent=11 // pred_check
          %p476 = pneg %p96
        $region18: #{vit_forward.1} parent=11 // pred_check_branch
          %478 = sbr.rel (%p476) target = $region20
        $region19: #{vit_forward.1} parent=11 // pred_region
          _
        $region20: #{vit_forward.1} parent=11 // pred_fallthru
          _
        // Predicated region
        $region21: #{vit_forward.1} parent=11 // pred_check
          %p479 = pneg %p117
        $region22: #{vit_forward.1} parent=11 // pred_check_branch
          %481 = sbr.rel (%p479) target = $region24
        $region23: #{vit_forward.1} parent=11 // pred_region
          _
        $region24: #{vit_forward.1} parent=11 // pred_fallthru
          _
        // Predicated region
        $region25: #{vit_forward.1} parent=11 // pred_check
          %p482 = pneg %p138
        $region26: #{vit_forward.1} parent=11 // pred_check_branch
          %484 = sbr.rel (%p482) target = $region28
        $region27: #{vit_forward.1} parent=11 // pred_region
          _
        $region28: #{vit_forward.1} parent=11 // pred_fallthru
          _
        // Predicated region
        $region29: #{vit_forward.1} parent=11 // pred_check
          %p485 = pneg %p159
        $region30: #{vit_forward.1} parent=11 // pred_check_branch
          %487 = sbr.rel (%p485) target = $region32
        $region31: #{vit_forward.1} parent=11 // pred_region
          _
        $region32: #{vit_forward.1} parent=11 // pred_fallthru
          _
        // Predicated region
        $region33: #{vit_forward.1} parent=11 // pred_check
          %p488 = pneg %p180
        $region34: #{vit_forward.1} parent=11 // pred_check_branch
          %490 = sbr.rel (%p488) target = $region36
        $region35: #{vit_forward.1} parent=11 // pred_region
          _
        $region36: #{vit_forward.1} parent=11 // pred_fallthru
          _
        // Predicated region
        $region37: #{vit_forward.1} parent=11 // pred_check
          %p491 = pneg %p201
        $region38: #{vit_forward.1} parent=11 // pred_check_branch
          %493 = sbr.rel (%p491) target = $region40
        $region39: #{vit_forward.1} parent=11 // pred_region
          _
        $region40: #{vit_forward.1} parent=11 // pred_fallthru
          _
        // Predicated region
        $region41: #{vit_forward.1} parent=11 // pred_check
          %p494 = pneg %p222
        $region42: #{vit_forward.1} parent=11 // pred_check_branch
          %496 = sbr.rel (%p494) target = $region44
        $region43: #{vit_forward.1} parent=11 // pred_region
          _
        $region44: #{vit_forward.1} parent=11 // pred_fallthru
          _
        // Predicated region
        $region45: #{vit_forward.1} parent=11 // pred_check
          %p497 = pneg %p243
        $region46: #{vit_forward.1} parent=11 // pred_check_branch
          %499 = sbr.rel (%p497) target = $region48
        $region47: #{vit_forward.1} parent=11 // pred_region
          _
        $region48: #{vit_forward.1} parent=11 // pred_fallthru
          _
        // Predicated region
        $region49: #{vit_forward.1} parent=11 // pred_check
          %p500 = pneg %p264
        $region50: #{vit_forward.1} parent=11 // pred_check_branch
          %502 = sbr.rel (%p500) target = $region52
        $region51: #{vit_forward.1} parent=11 // pred_region
          _
        $region52: #{vit_forward.1} parent=11 // pred_fallthru
          _
        // Predicated region
        $region53: #{vit_forward.1} parent=11 // pred_check
          %p503 = pneg %p285
        $region54: #{vit_forward.1} parent=11 // pred_check_branch
          %505 = sbr.rel (%p503) target = $region56
        $region55: #{vit_forward.1} parent=11 // pred_region
          _
        $region56: #{vit_forward.1} parent=11 // pred_fallthru
          _
        // Predicated region
        $region57: #{vit_forward.1} parent=11 // pred_check
          %p506 = pneg %p306
        $region58: #{vit_forward.1} parent=11 // pred_check_branch
          %508 = sbr.rel (%p506) target = $region60
        $region59: #{vit_forward.1} parent=11 // pred_region
          _
        $region60: #{vit_forward.1} parent=11 // pred_fallthru
          _
        // Predicated region
        $region61: #{vit_forward.1} parent=11 // pred_check
          %p509 = pneg %p327
        $region62: #{vit_forward.1} parent=11 // pred_check_branch
          %511 = sbr.rel (%p509) target = $region64
        $region63: #{vit_forward.1} parent=11 // pred_region
          _
        $region64: #{vit_forward.1} parent=11 // pred_fallthru
          _
        // Predicated region
        $region65: #{vit_forward.1} parent=11 // pred_check
          %p512 = pneg %p348
        $region66: #{vit_forward.1} parent=11 // pred_check_branch
          %514 = sbr.rel (%p512) target = $region68
        $region67: #{vit_forward.1} parent=11 // pred_region
          _
        $region68: #{vit_forward.1} parent=11 // pred_fallthru
          _
        // Predicated region
        $region69: #{vit_forward.1} parent=11 // pred_check
          %p515 = pneg %p369
        $region70: #{vit_forward.1} parent=11 // pred_check_branch
          %517 = sbr.rel (%p515) target = $region72
        $region71: #{vit_forward.1} parent=11 // pred_region
          _
        $region72: #{vit_forward.1} parent=11 // pred_fallthru
          _
        // Predicated region
        $region73: #{vit_forward.1} parent=11 // pred_check
          %p518 = pneg %p390
        $region74: #{vit_forward.1} parent=11 // pred_check_branch
          %520 = sbr.rel (%p518) target = $region76
        $region75: #{vit_forward.1} parent=11 // pred_region
          _
        $region76: #{vit_forward.1} parent=11 // pred_fallthru
          _
        // Predicated region
        $region77: #{vit_forward.1} parent=11 // pred_check
          %p521 = pneg %p411
        $region78: #{vit_forward.1} parent=11 // pred_check_branch
          %523 = sbr.rel (%p521) target = $region80
        $region79: #{vit_forward.1} parent=11 // pred_region
          _
        $region80: #{vit_forward.1} parent=11 // pred_fallthru
          _
        // Predicated region
        $region81: #{vit_forward.1} parent=11 // pred_check
          %p524 = pneg %p432
        $region82: #{vit_forward.1} parent=11 // pred_check_branch
          %526 = sbr.rel (%p524) target = $region84
        $region83: #{vit_forward.1} parent=11 // pred_region
          _
        $region84: #{vit_forward.1} parent=11 // pred_fallthru
          _
      $region12: #{vit_forward.1} parent=5 // pred_fallthru
        _
      %p527 = scmp.lt.s32.totalorder %s28, 2
      // Predicated region
      $region85: #{vit_forward.1} parent=5 // pred_check
        %p528 = pneg %p527
      $region86: #{vit_forward.1} parent=5 // pred_check_branch
        %530 = sbr.rel (%p528) target = $region88
      $region87: #{vit_forward.1} parent=5 // pred_region
        // Predicated region
        $region89: #{vit_forward.1} parent=87 // pred_check
          %p531 = pneg %p48
        $region90: #{vit_forward.1} parent=87 // pred_check_branch
          %533 = sbr.rel (%p531) target = $region92
        $region91: #{vit_forward.1} parent=87 // pred_region
          %p534 = scmp.lt.s32.totalorder %s28, 1
          %s535 = scalar_select %p534, %s28, 1
          %s536 = smul.addr %s535, 2
          %s537 = smul.addr %s536, 8
          %s538 = scalar_lea.vmem %s0, %s537
        $region92: #{vit_forward.1} parent=87 // pred_fallthru
          _
      $region88: #{vit_forward.1} parent=5 // pred_fallthru
        _
      %p539 = scmp.le.s32.totalorder 1, %s28
      %p540 = scmp.lt.s32.totalorder %s28, 3
      %p541 = pnand %p539, %p540
      %p542 = pneg %p541
      // Predicated region
      $region93: #{vit_forward.1} parent=5 // pred_check
        _
      $region94: #{vit_forward.1} parent=5 // pred_check_branch
        %544 = sbr.rel (%p541) target = $region96
      $region95: #{vit_forward.1} parent=5 // pred_region
        %s545 = ssub.s32 %s28, 1
        %p546 = scmp.lt.s32.totalorder %s33, 1
        %s547 = scalar_select %p546, %s33, 1
        %s548 = smul.addr %s547, 2
        %s549 = smul.addr %s548, 8
        %s550 = scalar_lea.vmem %s0, %s549
        %p551 = pneg %p54
        %p552 = pneg %p51
        %p553 = pneg %p75
        %p554 = pneg %p72
        %p555 = pneg %p96
        %p556 = pneg %p93
        %p557 = pneg %p117
        %p558 = pneg %p114
        %p559 = pneg %p138
        %p560 = pneg %p135
        %p561 = pneg %p159
        %p562 = pneg %p156
        %p563 = pneg %p180
        %p564 = pneg %p177
        %p565 = pneg %p201
        %p566 = pneg %p198
        %p567 = pneg %p222
        %p568 = pneg %p219
        %p569 = pneg %p243
        %p570 = pneg %p240
        %p571 = pneg %p264
        %p572 = pneg %p261
        %p573 = pneg %p285
        %p574 = pneg %p282
        %p575 = pneg %p306
        %p576 = pneg %p303
        %p577 = pneg %p327
        %p578 = pneg %p324
        %p579 = pneg %p348
        %p580 = pneg %p345
        %p581 = pneg %p369
        %p582 = pneg %p366
        %p583 = pneg %p390
        %p584 = pneg %p387
        %p585 = pneg %p411
        %p586 = pneg %p408
        %p587 = pneg %p432
        %p588 = pneg %p429
        %p589 = pneg %p458
        %p590 = pneg %p455
        %s591 = sand.u32 %s445, 1
        %s592 = scalar_lea.sflag [#allocation3], %s591
        %s593 = sand.u32 %s445, 1
        %s594 = scalar_lea.vmem [#allocation2], %s593
        %p595 = scmp.lt.s32.totalorder %s33, 1
        %s596 = scalar_select %p595, %s33, 1
        %s597 = smul.addr %s596, 2
        %s598 = smul.addr %s597, 8
        %s599 = scalar_lea.vmem %s0, %s598
        %v600 = vlaneseq
        %v601 = vand.u32 %v600, 127
        %vm602 = vcmp.lt.s32.totalorder %v601, 5
        %v603 = vsel %vm602, 0.0, -1e+30
        %v604 = vld [vmem:[%s599] sm:$0xff]
        %v605 = vld [vmem:[%s599 + $0x8] sm:$0xff]
        %v606 = vld [vmem:[%s1] sm:$0x3]
        %v607 = vmul.f32 %v604, %v604
        %v608 = vmul.f32 %v605, %v605
        %vm609 = vcmask 523264
        %v610 = vsel %vm609, %v608, 0.0
        %v611 = vadd.f32 %v607, %v610
        %612 = vadd.xlane.f32.xlu0 %v611
        %v613 = vpop.xlane.xlu0 %612
        %v614 = vrcp.pop 192.0
        %v615 = vmul.f32 %v613, %v614
        %v616 = vadd.f32 %v615, 1e-06
        %v617 = vrsqrt.pop %v616
        %v618 = vmul.f32 %v604, %v617
        %v619 = vmul.f32 %v605, %v617
        %v621 = vlaneseq
        %v622 = vshrl.u32 %v621, 7
        %v623 = vsub.s32 0, %v622
        %v624 = vrot.slane %v606, %v623
        %v625 = vlaneseq
        %v626 = vshrl.u32 %v625, 7
        %v627 = vsub.s32 1, %v626
        %v628 = vrot.slane %v606, %v627
        %v631 = vmul.f32 %v618, %v624
        %v632 = vmul.f32 %v619, %v628
        %v633 = vld [vmem:[%s2] sm:$0xff]
        %v634 = vld [vmem:[%s2 + $0x8] sm:$0xff]
        %v635 = vld [vmem:[%s2 + $0x10] sm:$0xff]
        %v636 = vld [vmem:[%s2 + $0x18] sm:$0xff]
        %v637 = vld [vmem:[%s2 + $0x20] sm:$0xff]
        %v638 = vld [vmem:[%s2 + $0x28] sm:$0xff]
        %v639 = vld [vmem:[%s2 + $0x30] sm:$0xff]
        %v640 = vld [vmem:[%s2 + $0x38] sm:$0xff]
        %v641 = vld [vmem:[%s2 + $0x40] sm:$0xff]
        %v642 = vld [vmem:[%s2 + $0x48] sm:$0xff]
        %v643 = vld [vmem:[%s2 + $0x50] sm:$0xff]
        %v644 = vld [vmem:[%s2 + $0x58] sm:$0xff]
        %v645 = vld [vmem:[%s2 + $0x60] sm:$0xff]
        %v646 = vld [vmem:[%s2 + $0x68] sm:$0xff]
        %v647 = vld [vmem:[%s2 + $0x70] sm:$0xff]
        %v648 = vld [vmem:[%s2 + $0x78] sm:$0xff]
        %v649 = vld [vmem:[%s2 + $0x80] sm:$0xff]
        %v650 = vld [vmem:[%s2 + $0x88] sm:$0xff]
        %v651 = vld [vmem:[%s2 + $0x90] sm:$0xff]
        %v652 = vld [vmem:[%s2 + $0x98] sm:$0xff]
        %v653 = vld [vmem:[%s2 + $0xa0] sm:$0xff]
        %v654 = vld [vmem:[%s2 + $0xa8] sm:$0xff]
        %v655 = vld [vmem:[%s2 + $0xb0] sm:$0xff]
        %v656 = vld [vmem:[%s2 + $0xb8] sm:$0xff]
        %v657 = vld [vmem:[%s3] sm:$0xff]
        %v659 = vsel %vm609, %v632, 0
        %661 = vmatprep.subr.mxu0 0.0
        %662 = vmatpush1.msra.mxu0 %v633
        %663 = vmatprep.subr.mxu0 0.0
        %664 = vmatpush1.msra.mxu0 %v634
        %665 = vmatprep.subr.mxu0 0.0
        %666 = vmatpush1.msra.mxu0 %v635
        %667 = vmatprep.subr.mxu0 0.0
        %668 = vmatpush1.msra.mxu0 %v636
        %669 = vmatprep.subr.mxu0 0.0
        %670 = vmatpush1.msra.mxu0 %v637
        %671 = vmatprep.subr.mxu0 0.0
        %672 = vmatpush1.msra.mxu0 %v638
        %673 = vmatprep.subr.mxu0 0.0
        %674 = vmatpush1.msra.mxu0 %v639
        %675 = vmatprep.subr.mxu0 0.0
        %676 = vmatpush1.msra.mxu0 %v640
        %677 = vmatprep.subr.mxu0 0.0
        %678 = vmatpush1.msra.mxu0 %v641
        %679 = vmatprep.subr.mxu0 0.0
        %680 = vmatpush1.msra.mxu0 %v642
        %681 = vmatprep.subr.mxu0 0.0
        %682 = vmatpush1.msra.mxu0 %v643
        %683 = vmatprep.subr.mxu0 0.0
        %684 = vmatpush1.msra.mxu0 %v644
        %685 = vmatprep.subr.mxu0 0.0
        %686 = vmatpush1.msra.mxu0 %v645
        %687 = vmatprep.subr.mxu0 0.0
        %688 = vmatpush1.msra.mxu0 %v646
        %689 = vmatprep.subr.mxu0 0.0
        %690 = vmatpush1.msra.mxu0 %v647
        %691 = vmatprep.subr.mxu0 0.0
        %692 = vmatpush1.msra.mxu0 %v648
        %693 = vmatprep.subr.mxu0 0.0
        %694 = vmatpush1.msra.mxu0 %v649
        %695 = vmatprep.subr.mxu0 0.0
        %696 = vmatpush1.msra.mxu0 %v650
        %697 = vmatprep.subr.mxu0 0.0
        %698 = vmatpush1.msra.mxu0 %v651
        %699 = vmatprep.subr.mxu0 0.0
        %700 = vmatpush1.msra.mxu0 %v652
        %701 = vmatprep.subr.mxu0 0.0
        %702 = vmatpush1.msra.mxu0 %v653
        %703 = vmatprep.subr.mxu0 0.0
        %704 = vmatpush1.msra.mxu0 %v654
        %705 = vmatprep.subr.mxu0 0.0
        %706 = vmatpush1.msra.mxu0 %v655
        %707 = vmatprep.subr.mxu0 0.0
        %708 = vmatpush1.msra.mxu0 %v656
        %709 = vmatprep.subr.mxu0 0.0
        %710 = vmatpush1.msra.mxu0 0.0
        %711 = vmatprep.subr.mxu0 0.0
        %712 = vmatpush1.msra.mxu0 0.0
        %713 = vmatprep.subr.mxu0 0.0
        %714 = vmatpush1.msra.mxu0 0.0
        %715 = vmatprep.subr.mxu0 0.0
        %716 = vmatpush1.msra.mxu0 0.0
        %717 = vmatprep.subr.mxu0 0.0
        %718 = vmatpush1.msra.mxu0 0.0
        %719 = vmatprep.subr.mxu0 0.0
        %720 = vmatpush1.msra.mxu0 0.0
        %721 = vmatprep.subr.mxu0 0.0
        %722 = vmatpush1.msra.mxu0 0.0
        %723 = vmatprep.subr.mxu0 0.0
        %724 = vmatpush1.msra.mxu0 0.0
        %725 = vmatprep.mubr.f32.mxu0 %v659
        %726 = vmatmul.mubr.f32.gmra.mrb[0].mxu0 %v631
        %v727 = vpop.f32.mrb[0].mxu0
        %v728 = vadd.f32 %v657, %v727
        %v729 = vpop.f32.mrb[0].mxu0
        %730 = vdwg.mxu0
        %v731 = vld [vmem:[%s4] sm:$0xff]
        %v732 = vld [vmem:[%s5] sm:$0xff]
        %v733 = vld [vmem:[%s6] sm:$0xff]
        %v734 = vld [vmem:[%s7] sm:$0xff]
        %v735 = vld [vmem:[%s8] sm:$0x1]
        %v736 = vmul.f32 %v728, %v728
        %vm737 = vcmask 261120
        %v738 = vsel %vm737, %v736, 0.0
        %739 = vadd.xlane.f32.xlu0 %v738
        %v740 = vpop.xlane.xlu0 %739
        %v741 = vrcp.pop 32.0
        %v742 = vmul.f32 %v740, %v741
        %v743 = vadd.f32 %v742, 1e-06
        %v744 = vrsqrt.pop %v743
        %v745 = vmul.f32 %v728, %v744
        %v746 = vlaneseq
        %v747 = vshrl.u32 %v746, 7
        %v748 = vsub.s32 0, %v747
        %v749 = vrot.slane %v735, %v748
        %v750 = vmul.f32 %v745, %v749
        %v751 = vld [vmem:[%s9] sm:$0xff]
        %v752 = vld [vmem:[%s9 + $0x8] sm:$0xff]
        %v753 = vld [vmem:[%s9 + $0x10] sm:$0xff]
        %v754 = vld [vmem:[%s9 + $0x18] sm:$0xff]
        %v756 = vsel %vm737, %v750, 0
        %758 = vmatprep.subr.mxu0 0.0
        %759 = vmatpush1.msra.mxu0 %v751
        %760 = vmatprep.subr.mxu0 0.0
        %761 = vmatpush1.msra.mxu0 %v752
        %762 = vmatprep.subr.mxu0 0.0
        %763 = vmatpush1.msra.mxu0 %v753
        %764 = vmatprep.subr.mxu0 0.0
        %765 = vmatpush1.msra.mxu0 %v754
        %766 = vmatprep.subr.mxu0 0.0
        %767 = vmatpush1.msra.mxu0 0.0
        %768 = vmatprep.subr.mxu0 0.0
        %769 = vmatpush1.msra.mxu0 0.0
        %770 = vmatprep.subr.mxu0 0.0
        %771 = vmatpush1.msra.mxu0 0.0
        %772 = vmatprep.subr.mxu0 0.0
        %773 = vmatpush1.msra.mxu0 0.0
        %774 = vmatprep.subr.mxu0 0.0
        %775 = vmatpush1.msra.mxu0 0.0
        %776 = vmatprep.subr.mxu0 0.0
        %777 = vmatpush1.msra.mxu0 0.0
        %778 = vmatprep.subr.mxu0 0.0
        %779 = vmatpush1.msra.mxu0 0.0
        %780 = vmatprep.subr.mxu0 0.0
        %781 = vmatpush1.msra.mxu0 0.0
        %782 = vmatprep.subr.mxu0 0.0
        %783 = vmatpush1.msra.mxu0 0.0
        %784 = vmatprep.subr.mxu0 0.0
        %785 = vmatpush1.msra.mxu0 0.0
        %786 = vmatprep.subr.mxu0 0.0
        %787 = vmatpush1.msra.mxu0 0.0
        %788 = vmatprep.subr.mxu0 0.0
        %789 = vmatpush1.msra.mxu0 0.0
        %790 = vmatprep.subr.mxu0 0.0
        %791 = vmatpush1.msra.mxu0 0.0
        %792 = vmatprep.subr.mxu0 0.0
        %793 = vmatpush1.msra.mxu0 0.0
        %794 = vmatprep.subr.mxu0 0.0
        %795 = vmatpush1.msra.mxu0 0.0
        %796 = vmatprep.subr.mxu0 0.0
        %797 = vmatpush1.msra.mxu0 0.0
        %798 = vmatprep.subr.mxu0 0.0
        %799 = vmatpush1.msra.mxu0 0.0
        %800 = vmatprep.subr.mxu0 0.0
        %801 = vmatpush1.msra.mxu0 0.0
        %802 = vmatprep.subr.mxu0 0.0
        %803 = vmatpush1.msra.mxu0 0.0
        %804 = vmatprep.subr.mxu0 0.0
        %805 = vmatpush1.msra.mxu0 0.0
        %806 = vmatprep.subr.mxu0 0.0
        %807 = vmatpush1.msra.mxu0 0.0
        %808 = vmatprep.subr.mxu0 0.0
        %809 = vmatpush1.msra.mxu0 0.0
        %810 = vmatprep.subr.mxu0 0.0
        %811 = vmatpush1.msra.mxu0 0.0
        %812 = vmatprep.subr.mxu0 0.0
        %813 = vmatpush1.msra.mxu0 0.0
        %814 = vmatprep.subr.mxu0 0.0
        %815 = vmatpush1.msra.mxu0 0.0
        %816 = vmatprep.subr.mxu0 0.0
        %817 = vmatpush1.msra.mxu0 0.0
        %818 = vmatprep.subr.mxu0 0.0
        %819 = vmatpush1.msra.mxu0 0.0
        %820 = vmatprep.subr.mxu0 0.0
        %821 = vmatpush1.msra.mxu0 0.0
        %822 = vmatprep.mubr.f32.mxu0 0.0
        %823 = vmatmul.mubr.f32.gmra.mrb[0].mxu0 %v756
        %v824 = vpop.f32.mrb[0].mxu0
        %v825 = vadd.f32 0.0, %v824
        %v826 = vpop.f32.mrb[0].mxu0
        %827 = vdwg.mxu0
        %v828 = vld [vmem:[%s10] sm:$0x1]
        %v829 = vmul.f32 %v825, %v825
        %831 = vrot.lane.b32.xlu0 %v829, 96
        %v832 = vpop.permute.xlu0 %831
        %vm834 = vcmask 130048
        %v835 = vsel %vm834, %v832, 0.0
        %836 = vadd.xlane.f32.xlu0 %v835
        %v837 = vpop.xlane.xlu0 %836
        %v838 = vrcp.pop 16.0
        %v839 = vmul.f32 %v837, %v838
        %v840 = vadd.f32 %v839, 1e-06
        %v841 = vrsqrt.pop %v840
        %v842 = vmul.f32 %v825, %v841
        %v843 = vlaneseq
        %v844 = vshrl.u32 %v843, 7
        %v845 = vsub.s32 0, %v844
        %v846 = vrot.slane %v828, %v845
        %848 = vrot.lane.b32.xlu0 %v846, 32
        %v849 = vpop.permute.xlu0 %848
        %v851 = vmul.f32 %v842, %v849
        %v852 = vld [vmem:[%s11] sm:$0xff]
        %v853 = vld [vmem:[%s11 + $0x8] sm:$0xff]
        %855 = vrot.lane.b32.xlu0 %v851, 96
        %v856 = vpop.permute.xlu0 %855
        %v857 = vsel %vm834, %v856, 0
        %859 = vmatprep.subr.mxu0 0.0
        %860 = vmatpush1.msra.mxu0 %v852
        %861 = vmatprep.subr.mxu0 0.0
        %862 = vmatpush1.msra.mxu0 %v853
        %863 = vmatprep.subr.mxu0 0.0
        %864 = vmatpush1.msra.mxu0 0.0
        %865 = vmatprep.subr.mxu0 0.0
        %866 = vmatpush1.msra.mxu0 0.0
        %867 = vmatprep.subr.mxu0 0.0
        %868 = vmatpush1.msra.mxu0 0.0
        %869 = vmatprep.subr.mxu0 0.0
        %870 = vmatpush1.msra.mxu0 0.0
        %871 = vmatprep.subr.mxu0 0.0
        %872 = vmatpush1.msra.mxu0 0.0
        %873 = vmatprep.subr.mxu0 0.0
        %874 = vmatpush1.msra.mxu0 0.0
        %875 = vmatprep.subr.mxu0 0.0
        %876 = vmatpush1.msra.mxu0 0.0
        %877 = vmatprep.subr.mxu0 0.0
        %878 = vmatpush1.msra.mxu0 0.0
        %879 = vmatprep.subr.mxu0 0.0
        %880 = vmatpush1.msra.mxu0 0.0
        %881 = vmatprep.subr.mxu0 0.0
        %882 = vmatpush1.msra.mxu0 0.0
        %883 = vmatprep.subr.mxu0 0.0
        %884 = vmatpush1.msra.mxu0 0.0
        %885 = vmatprep.subr.mxu0 0.0
        %886 = vmatpush1.msra.mxu0 0.0
        %887 = vmatprep.subr.mxu0 0.0
        %888 = vmatpush1.msra.mxu0 0.0
        %889 = vmatprep.subr.mxu0 0.0
        %890 = vmatpush1.msra.mxu0 0.0
        %891 = vmatprep.subr.mxu0 0.0
        %892 = vmatpush1.msra.mxu0 0.0
        %893 = vmatprep.subr.mxu0 0.0
        %894 = vmatpush1.msra.mxu0 0.0
        %895 = vmatprep.subr.mxu0 0.0
        %896 = vmatpush1.msra.mxu0 0.0
        %897 = vmatprep.subr.mxu0 0.0
        %898 = vmatpush1.msra.mxu0 0.0
        %899 = vmatprep.subr.mxu0 0.0
        %900 = vmatpush1.msra.mxu0 0.0
        %901 = vmatprep.subr.mxu0 0.0
        %902 = vmatpush1.msra.mxu0 0.0
        %903 = vmatprep.subr.mxu0 0.0
        %904 = vmatpush1.msra.mxu0 0.0
        %905 = vmatprep.subr.mxu0 0.0
        %906 = vmatpush1.msra.mxu0 0.0
        %907 = vmatprep.subr.mxu0 0.0
        %908 = vmatpush1.msra.mxu0 0.0
        %909 = vmatprep.subr.mxu0 0.0
        %910 = vmatpush1.msra.mxu0 0.0
        %911 = vmatprep.subr.mxu0 0.0
        %912 = vmatpush1.msra.mxu0 0.0
        %913 = vmatprep.subr.mxu0 0.0
        %914 = vmatpush1.msra.mxu0 0.0
        %915 = vmatprep.subr.mxu0 0.0
        %916 = vmatpush1.msra.mxu0 0.0
        %917 = vmatprep.subr.mxu0 0.0
        %918 = vmatpush1.msra.mxu0 0.0
        %919 = vmatprep.subr.mxu0 0.0
        %920 = vmatpush1.msra.mxu0 0.0
        %921 = vmatprep.subr.mxu0 0.0
        %922 = vmatpush1.msra.mxu0 0.0
        %923 = vmatprep.mubr.f32.mxu0 0.0
        %924 = vmatmul.mubr.f32.gmra.mrb[0].mxu0 %v857
        %v925 = vpop.f32.mrb[0].mxu0
        %v926 = vadd.f32 0.0, %v925
        %v927 = vpop.f32.mrb[0].mxu0
        %928 = vdwg.mxu0
        %930 = vrot.lane.b32.xlu0 %v731, 16
        %v931 = vpop.permute.xlu0 %930
        %v933 = vmul.f32 %v825, %v931
        %935 = vrot.lane.b32.xlu0 %v732, 24
        %v936 = vpop.permute.xlu0 %935
        %v938 = vmul.f32 %v825, %v936
        %940 = vrot.lane.b32.xlu0 %v938, 120
        %v941 = vpop.permute.xlu0 %940
        %v943 = vadd.f32 %v933, %v941
        %945 = vrot.lane.b32.xlu0 %v733, 48
        %v946 = vpop.permute.xlu0 %945
        %v948 = vmul.f32 %v825, %v946
        %950 = vrot.lane.b32.xlu0 %v734, 52
        %v951 = vpop.permute.xlu0 %950
        %v953 = vmul.f32 %v825, %v951
        %955 = vrot.lane.b32.xlu0 %v953, 124
        %v956 = vpop.permute.xlu0 %955
        %v958 = vadd.f32 %v948, %v956
        %960 = vrot.lane.b32.xlu0 %v943, 120
        %v961 = vpop.permute.xlu0 %960
        %vm963 = vcmask 64512
        %v964 = vsel %vm963, %v825, %v961
        %966 = vrot.lane.b32.xlu0 %v958, 88
        %v967 = vpop.permute.xlu0 %966
        %v969 = vsel %vm963, %v926, %v967
        %vm970 = vcmask 97280
        %v972 = vsel %vm970, %v964, 0
        %v975 = vsel %vm970, %v969, 0
        %977 = vmatprep.subr.mxu0 0.0
        %978 = vmatpush1.xpose.msra.mxu0 %v975
        %979 = vmatprep.subr.mxu0 0.0
        %980 = vmatpush1.xpose.msra.mxu0 0.0
        %981 = vmatprep.subr.mxu0 0.0
        %982 = vmatpush1.xpose.msra.mxu0 0.0
        %983 = vmatprep.subr.mxu0 0.0
        %984 = vmatpush1.xpose.msra.mxu0 0.0
        %985 = vmatprep.subr.mxu0 0.0
        %986 = vmatpush1.xpose.msra.mxu0 0.0
        %987 = vmatprep.subr.mxu0 0.0
        %988 = vmatpush1.xpose.msra.mxu0 0.0
        %989 = vmatprep.subr.mxu0 0.0
        %990 = vmatpush1.xpose.msra.mxu0 0.0
        %991 = vmatprep.subr.mxu0 0.0
        %992 = vmatpush1.xpose.msra.mxu0 0.0
        %993 = vmatprep.subr.mxu0 0.0
        %994 = vmatpush1.xpose.msra.mxu0 0.0
        %995 = vmatprep.subr.mxu0 0.0
        %996 = vmatpush1.xpose.msra.mxu0 0.0
        %997 = vmatprep.subr.mxu0 0.0
        %998 = vmatpush1.xpose.msra.mxu0 0.0
        %999 = vmatprep.subr.mxu0 0.0
        %1000 = vmatpush1.xpose.msra.mxu0 0.0
        %1001 = vmatprep.subr.mxu0 0.0
        %1002 = vmatpush1.xpose.msra.mxu0 0.0
        %1003 = vmatprep.subr.mxu0 0.0
        %1004 = vmatpush1.xpose.msra.mxu0 0.0
        %1005 = vmatprep.subr.mxu0 0.0
        %1006 = vmatpush1.xpose.msra.mxu0 0.0
        %1007 = vmatprep.subr.mxu0 0.0
        %1008 = vmatpush1.xpose.msra.mxu0 0.0
        %1009 = vmatprep.subr.mxu0 0.0
        %1010 = vmatpush1.xpose.msra.mxu0 0.0
        %1011 = vmatprep.subr.mxu0 0.0
        %1012 = vmatpush1.xpose.msra.mxu0 0.0
        %1013 = vmatprep.subr.mxu0 0.0
        %1014 = vmatpush1.xpose.msra.mxu0 0.0
        %1015 = vmatprep.subr.mxu0 0.0
        %1016 = vmatpush1.xpose.msra.mxu0 0.0
        %1017 = vmatprep.subr.mxu0 0.0
        %1018 = vmatpush1.xpose.msra.mxu0 0.0
        %1019 = vmatprep.subr.mxu0 0.0
        %1020 = vmatpush1.xpose.msra.mxu0 0.0
        %1021 = vmatprep.subr.mxu0 0.0
        %1022 = vmatpush1.xpose.msra.mxu0 0.0
        %1023 = vmatprep.subr.mxu0 0.0
        %1024 = vmatpush1.xpose.msra.mxu0 0.0
        %1025 = vmatprep.subr.mxu0 0.0
        %1026 = vmatpush1.xpose.msra.mxu0 0.0
        %1027 = vmatprep.subr.mxu0 0.0
        %1028 = vmatpush1.xpose.msra.mxu0 0.0
        %1029 = vmatprep.subr.mxu0 0.0
        %1030 = vmatpush1.xpose.msra.mxu0 0.0
        %1031 = vmatprep.subr.mxu0 0.0
        %1032 = vmatpush1.xpose.msra.mxu0 0.0
        %1033 = vmatprep.subr.mxu0 0.0
        %1034 = vmatpush1.xpose.msra.mxu0 0.0
        %1035 = vmatprep.subr.mxu0 0.0
        %1036 = vmatpush1.xpose.msra.mxu0 0.0
        %1037 = vmatprep.subr.mxu0 0.0
        %1038 = vmatpush1.xpose.msra.mxu0 0.0
        %1039 = vmatprep.subr.mxu0 0.0
        %1040 = vmatpush1.xpose.msra.mxu0 0.0
        %1041 = vmatprep.mubr.f32.mxu0 0.0
        %1042 = vmatmul.mubr.f32.gmra.mrb[0].mxu0 %v972
        %v1043 = vpop.f32.mrb[0].mxu0
        %v1044 = vadd.f32 0.0, %v1043
        %v1045 = vpop.f32.mrb[0].mxu0
        %1046 = vdwg.mxu0
        %v1047 = vmul.f32 %v1044, 0.28867513
        %v1048 = vadd.f32 %v1047, %v603
        %v1049 = vsel %vm963, %v1048, -inf
        %1050 = vmax.xlane.f32.xlu0 %v1049
        %v1051 = vpop.xlane.xlu0 %1050
        %v1052 = vsub.f32 %v1048, %v1051
        %v1053 = vmul.f32 %v1052, 1.442695
        %v1054 = vpow.pop %v1053
        %v1055 = vsel %vm963, %v1054, 0.0
        %1056 = vadd.xlane.f32.xlu0 %v1055
        %v1057 = vpop.xlane.xlu0 %1056
        %v1058 = vrcp.pop %v1057
        %v1059 = vmul.f32 %v1054, %v1058
        %1061 = vrot.lane.b32.xlu0 %v926, 112
        %v1062 = vpop.permute.xlu0 %1061
        %v1065 = vsel %vm963, %v1059, 0
        %1067 = vmatprep.subr.mxu0 0.0
        %1068 = vmatpush1.msra.mxu0 %v1062
        %1069 = vmatprep.subr.mxu0 0.0
        %1070 = vmatpush1.msra.mxu0 0.0
        %1071 = vmatprep.subr.mxu0 0.0
        %1072 = vmatpush1.msra.mxu0 0.0
        %1073 = vmatprep.subr.mxu0 0.0
        %1074 = vmatpush1.msra.mxu0 0.0
        %1075 = vmatprep.subr.mxu0 0.0
        %1076 = vmatpush1.msra.mxu0 0.0
        %1077 = vmatprep.subr.mxu0 0.0
        %1078 = vmatpush1.msra.mxu0 0.0
        %1079 = vmatprep.subr.mxu0 0.0
        %1080 = vmatpush1.msra.mxu0 0.0
        %1081 = vmatprep.subr.mxu0 0.0
        %1082 = vmatpush1.msra.mxu0 0.0
        %1083 = vmatprep.subr.mxu0 0.0
        %1084 = vmatpush1.msra.mxu0 0.0
        %1085 = vmatprep.subr.mxu0 0.0
        %1086 = vmatpush1.msra.mxu0 0.0
        %1087 = vmatprep.subr.mxu0 0.0
        %1088 = vmatpush1.msra.mxu0 0.0
        %1089 = vmatprep.subr.mxu0 0.0
        %1090 = vmatpush1.msra.mxu0 0.0
        %1091 = vmatprep.subr.mxu0 0.0
        %1092 = vmatpush1.msra.mxu0 0.0
        %1093 = vmatprep.subr.mxu0 0.0
        %1094 = vmatpush1.msra.mxu0 0.0
        %1095 = vmatprep.subr.mxu0 0.0
        %1096 = vmatpush1.msra.mxu0 0.0
        %1097 = vmatprep.subr.mxu0 0.0
        %1098 = vmatpush1.msra.mxu0 0.0
        %1099 = vmatprep.subr.mxu0 0.0
        %1100 = vmatpush1.msra.mxu0 0.0
        %1101 = vmatprep.subr.mxu0 0.0
        %1102 = vmatpush1.msra.mxu0 0.0
        %1103 = vmatprep.subr.mxu0 0.0
        %1104 = vmatpush1.msra.mxu0 0.0
        %1105 = vmatprep.subr.mxu0 0.0
        %1106 = vmatpush1.msra.mxu0 0.0
        %1107 = vmatprep.subr.mxu0 0.0
        %1108 = vmatpush1.msra.mxu0 0.0
        %1109 = vmatprep.subr.mxu0 0.0
        %1110 = vmatpush1.msra.mxu0 0.0
        %1111 = vmatprep.subr.mxu0 0.0
        %1112 = vmatpush1.msra.mxu0 0.0
        %1113 = vmatprep.subr.mxu0 0.0
        %1114 = vmatpush1.msra.mxu0 0.0
        %1115 = vmatprep.subr.mxu0 0.0
        %1116 = vmatpush1.msra.mxu0 0.0
        %1117 = vmatprep.subr.mxu0 0.0
        %1118 = vmatpush1.msra.mxu0 0.0
        %1119 = vmatprep.subr.mxu0 0.0
        %1120 = vmatpush1.msra.mxu0 0.0
        %1121 = vmatprep.subr.mxu0 0.0
        %1122 = vmatpush1.msra.mxu0 0.0
        %1123 = vmatprep.subr.mxu0 0.0
        %1124 = vmatpush1.msra.mxu0 0.0
        %1125 = vmatprep.subr.mxu0 0.0
        %1126 = vmatpush1.msra.mxu0 0.0
        %1127 = vmatprep.subr.mxu0 0.0
        %1128 = vmatpush1.msra.mxu0 0.0
        %1129 = vmatprep.subr.mxu0 0.0
        %1130 = vmatpush1.msra.mxu0 0.0
        %1131 = vmatprep.mubr.f32.mxu0 0.0
        %1132 = vmatmul.mubr.f32.gmra.mrb[0].mxu0 %v1065
        %v1133 = vpop.f32.mrb[0].mxu0
        %v1134 = vadd.f32 0.0, %v1133
        %v1135 = vpop.f32.mrb[0].mxu0
        %1136 = vdwg.mxu0
        %1138 = vrot.lane.b32.xlu0 %v825, 120
        %v1139 = vpop.permute.xlu0 %1138
        %1141 = vrot.lane.b32.xlu0 %v943, 116
        %v1142 = vpop.permute.xlu0 %1141
        %v1144 = vsel %vm963, %v1139, %v1142
        %1145 = vrot.lane.b32.xlu0 %v926, 120
        %v1146 = vpop.permute.xlu0 %1145
        %v1148 = vsel %vm963, %v1146, %v967
        %v1150 = vsel %vm970, %v1144, 0
        %v1153 = vsel %vm970, %v1148, 0
        %1155 = vmatprep.subr.mxu0 0.0
        %1156 = vmatpush1.xpose.msra.mxu0 %v1153
        %1157 = vmatprep.subr.mxu0 0.0
        %1158 = vmatpush1.xpose.msra.mxu0 0.0
        %1159 = vmatprep.subr.mxu0 0.0
        %1160 = vmatpush1.xpose.msra.mxu0 0.0
        %1161 = vmatprep.subr.mxu0 0.0
        %1162 = vmatpush1.xpose.msra.mxu0 0.0
        %1163 = vmatprep.subr.mxu0 0.0
        %1164 = vmatpush1.xpose.msra.mxu0 0.0
        %1165 = vmatprep.subr.mxu0 0.0
        %1166 = vmatpush1.xpose.msra.mxu0 0.0
        %1167 = vmatprep.subr.mxu0 0.0
        %1168 = vmatpush1.xpose.msra.mxu0 0.0
        %1169 = vmatprep.subr.mxu0 0.0
        %1170 = vmatpush1.xpose.msra.mxu0 0.0
        %1171 = vmatprep.subr.mxu0 0.0
        %1172 = vmatpush1.xpose.msra.mxu0 0.0
        %1173 = vmatprep.subr.mxu0 0.0
        %1174 = vmatpush1.xpose.msra.mxu0 0.0
        %1175 = vmatprep.subr.mxu0 0.0
        %1176 = vmatpush1.xpose.msra.mxu0 0.0
        %1177 = vmatprep.subr.mxu0 0.0
        %1178 = vmatpush1.xpose.msra.mxu0 0.0
        %1179 = vmatprep.subr.mxu0 0.0
        %1180 = vmatpush1.xpose.msra.mxu0 0.0
        %1181 = vmatprep.subr.mxu0 0.0
        %1182 = vmatpush1.xpose.msra.mxu0 0.0
        %1183 = vmatprep.subr.mxu0 0.0
        %1184 = vmatpush1.xpose.msra.mxu0 0.0
        %1185 = vmatprep.subr.mxu0 0.0
        %1186 = vmatpush1.xpose.msra.mxu0 0.0
        %1187 = vmatprep.subr.mxu0 0.0
        %1188 = vmatpush1.xpose.msra.mxu0 0.0
        %1189 = vmatprep.subr.mxu0 0.0
        %1190 = vmatpush1.xpose.msra.mxu0 0.0
        %1191 = vmatprep.subr.mxu0 0.0
        %1192 = vmatpush1.xpose.msra.mxu0 0.0
        %1193 = vmatprep.subr.mxu0 0.0
        %1194 = vmatpush1.xpose.msra.mxu0 0.0
        %1195 = vmatprep.subr.mxu0 0.0
        %1196 = vmatpush1.xpose.msra.mxu0 0.0
        %1197 = vmatprep.subr.mxu0 0.0
        %1198 = vmatpush1.xpose.msra.mxu0 0.0
        %1199 = vmatprep.subr.mxu0 0.0
        %1200 = vmatpush1.xpose.msra.mxu0 0.0
        %1201 = vmatprep.subr.mxu0 0.0
        %1202 = vmatpush1.xpose.msra.mxu0 0.0
        %1203 = vmatprep.subr.mxu0 0.0
        %1204 = vmatpush1.xpose.msra.mxu0 0.0
        %1205 = vmatprep.subr.mxu0 0.0
        %1206 = vmatpush1.xpose.msra.mxu0 0.0
        %1207 = vmatprep.subr.mxu0 0.0
        %1208 = vmatpush1.xpose.msra.mxu0 0.0
        %1209 = vmatprep.subr.mxu0 0.0
        %1210 = vmatpush1.xpose.msra.mxu0 0.0
        %1211 = vmatprep.subr.mxu0 0.0
        %1212 = vmatpush1.xpose.msra.mxu0 0.0
        %1213 = vmatprep.subr.mxu0 0.0
        %1214 = vmatpush1.xpose.msra.mxu0 0.0
        %1215 = vmatprep.subr.mxu0 0.0
        %1216 = vmatpush1.xpose.msra.mxu0 0.0
        %1217 = vmatprep.subr.mxu0 0.0
        %1218 = vmatpush1.xpose.msra.mxu0 0.0
        %1219 = vmatprep.mubr.f32.mxu0 0.0
        %1220 = vmatmul.mubr.f32.gmra.mrb[0].mxu0 %v1150
        %v1221 = vpop.f32.mrb[0].mxu0
        %v1222 = vadd.f32 0.0, %v1221
        %v1223 = vpop.f32.mrb[0].mxu0
        %1224 = vdwg.mxu0
        %v1225 = vmul.f32 %v1222, 0.28867513
        %v1226 = vadd.f32 %v1225, %v603
        %v1227 = vsel %vm963, %v1226, -inf
        %1228 = vmax.xlane.f32.xlu0 %v1227
        %v1229 = vpop.xlane.xlu0 %1228
        %v1230 = vsub.f32 %v1226, %v1229
        %v1231 = vmul.f32 %v1230, 1.442695
        %v1232 = vpow.pop %v1231
        %v1233 = vsel %vm963, %v1232, 0.0
        %1234 = vadd.xlane.f32.xlu0 %v1233
        %v1235 = vpop.xlane.xlu0 %1234
        %v1236 = vrcp.pop %v1235
        %v1237 = vmul.f32 %v1232, %v1236
        %1238 = vrot.lane.b32.xlu0 %v926, 104
        %v1239 = vpop.permute.xlu0 %1238
        %v1242 = vsel %vm963, %v1237, 0
        %1244 = vmatprep.subr.mxu0 0.0
        %1245 = vmatpush1.msra.mxu0 %v1239
        %1246 = vmatprep.subr.mxu0 0.0
        %1247 = vmatpush1.msra.mxu0 0.0
        %1248 = vmatprep.subr.mxu0 0.0
        %1249 = vmatpush1.msra.mxu0 0.0
        %1250 = vmatprep.subr.mxu0 0.0
        %1251 = vmatpush1.msra.mxu0 0.0
        %1252 = vmatprep.subr.mxu0 0.0
        %1253 = vmatpush1.msra.mxu0 0.0
        %1254 = vmatprep.subr.mxu0 0.0
        %1255 = vmatpush1.msra.mxu0 0.0
        %1256 = vmatprep.subr.mxu0 0.0
        %1257 = vmatpush1.msra.mxu0 0.0
        %1258 = vmatprep.subr.mxu0 0.0
        %1259 = vmatpush1.msra.mxu0 0.0
        %1260 = vmatprep.subr.mxu0 0.0
        %1261 = vmatpush1.msra.mxu0 0.0
        %1262 = vmatprep.subr.mxu0 0.0
        %1263 = vmatpush1.msra.mxu0 0.0
        %1264 = vmatprep.subr.mxu0 0.0
        %1265 = vmatpush1.msra.mxu0 0.0
        %1266 = vmatprep.subr.mxu0 0.0
        %1267 = vmatpush1.msra.mxu0 0.0
        %1268 = vmatprep.subr.mxu0 0.0
        %1269 = vmatpush1.msra.mxu0 0.0
        %1270 = vmatprep.subr.mxu0 0.0
        %1271 = vmatpush1.msra.mxu0 0.0
        %1272 = vmatprep.subr.mxu0 0.0
        %1273 = vmatpush1.msra.mxu0 0.0
        %1274 = vmatprep.subr.mxu0 0.0
        %1275 = vmatpush1.msra.mxu0 0.0
        %1276 = vmatprep.subr.mxu0 0.0
        %1277 = vmatpush1.msra.mxu0 0.0
        %1278 = vmatprep.subr.mxu0 0.0
        %1279 = vmatpush1.msra.mxu0 0.0
        %1280 = vmatprep.subr.mxu0 0.0
        %1281 = vmatpush1.msra.mxu0 0.0
        %1282 = vmatprep.subr.mxu0 0.0
        %1283 = vmatpush1.msra.mxu0 0.0
        %1284 = vmatprep.subr.mxu0 0.0
        %1285 = vmatpush1.msra.mxu0 0.0
        %1286 = vmatprep.subr.mxu0 0.0
        %1287 = vmatpush1.msra.mxu0 0.0
        %1288 = vmatprep.subr.mxu0 0.0
        %1289 = vmatpush1.msra.mxu0 0.0
        %1290 = vmatprep.subr.mxu0 0.0
        %1291 = vmatpush1.msra.mxu0 0.0
        %1292 = vmatprep.subr.mxu0 0.0
        %1293 = vmatpush1.msra.mxu0 0.0
        %1294 = vmatprep.subr.mxu0 0.0
        %1295 = vmatpush1.msra.mxu0 0.0
        %1296 = vmatprep.subr.mxu0 0.0
        %1297 = vmatpush1.msra.mxu0 0.0
        %1298 = vmatprep.subr.mxu0 0.0
        %1299 = vmatpush1.msra.mxu0 0.0
        %1300 = vmatprep.subr.mxu0 0.0
        %1301 = vmatpush1.msra.mxu0 0.0
        %1302 = vmatprep.subr.mxu0 0.0
        %1303 = vmatpush1.msra.mxu0 0.0
        %1304 = vmatprep.subr.mxu0 0.0
        %1305 = vmatpush1.msra.mxu0 0.0
        %1306 = vmatprep.subr.mxu0 0.0
        %1307 = vmatpush1.msra.mxu0 0.0
        %1308 = vmatprep.mubr.f32.mxu0 0.0
        %1309 = vmatmul.mubr.f32.gmra.mrb[0].mxu0 %v1242
        %v1310 = vpop.f32.mrb[0].mxu0
        %v1311 = vadd.f32 0.0, %v1310
        %v1312 = vpop.f32.mrb[0].mxu0
        %1313 = vdwg.mxu0
        %1315 = vrot.lane.b32.xlu0 %v1311, 8
        %v1316 = vpop.permute.xlu0 %1315
        %v1318 = vsel %vm963, %v1134, %v1316
        %v1319 = vld [vmem:[%s12] sm:$0xff]
        %v1320 = vld [vmem:[%s12 + $0x8] sm:$0xff]
        %v1322 = vsel %vm834, %v1318, 0
        %1324 = vmatprep.subr.mxu0 0.0
        %1325 = vmatpush1.msra.mxu0 %v1319
        %1326 = vmatprep.subr.mxu0 0.0
        %1327 = vmatpush1.msra.mxu0 %v1320
        %1328 = vmatprep.subr.mxu0 0.0
        %1329 = vmatpush1.msra.mxu0 0.0
        %1330 = vmatprep.subr.mxu0 0.0
        %1331 = vmatpush1.msra.mxu0 0.0
        %1332 = vmatprep.subr.mxu0 0.0
        %1333 = vmatpush1.msra.mxu0 0.0
        %1334 = vmatprep.subr.mxu0 0.0
        %1335 = vmatpush1.msra.mxu0 0.0
        %1336 = vmatprep.subr.mxu0 0.0
        %1337 = vmatpush1.msra.mxu0 0.0
        %1338 = vmatprep.subr.mxu0 0.0
        %1339 = vmatpush1.msra.mxu0 0.0
        %1340 = vmatprep.subr.mxu0 0.0
        %1341 = vmatpush1.msra.mxu0 0.0
        %1342 = vmatprep.subr.mxu0 0.0
        %1343 = vmatpush1.msra.mxu0 0.0
        %1344 = vmatprep.subr.mxu0 0.0
        %1345 = vmatpush1.msra.mxu0 0.0
        %1346 = vmatprep.subr.mxu0 0.0
        %1347 = vmatpush1.msra.mxu0 0.0
        %1348 = vmatprep.subr.mxu0 0.0
        %1349 = vmatpush1.msra.mxu0 0.0
        %1350 = vmatprep.subr.mxu0 0.0
        %1351 = vmatpush1.msra.mxu0 0.0
        %1352 = vmatprep.subr.mxu0 0.0
        %1353 = vmatpush1.msra.mxu0 0.0
        %1354 = vmatprep.subr.mxu0 0.0
        %1355 = vmatpush1.msra.mxu0 0.0
        %1356 = vmatprep.subr.mxu0 0.0
        %1357 = vmatpush1.msra.mxu0 0.0
        %1358 = vmatprep.subr.mxu0 0.0
        %1359 = vmatpush1.msra.mxu0 0.0
        %1360 = vmatprep.subr.mxu0 0.0
        %1361 = vmatpush1.msra.mxu0 0.0
        %1362 = vmatprep.subr.mxu0 0.0
        %1363 = vmatpush1.msra.mxu0 0.0
        %1364 = vmatprep.subr.mxu0 0.0
        %1365 = vmatpush1.msra.mxu0 0.0
        %1366 = vmatprep.subr.mxu0 0.0
        %1367 = vmatpush1.msra.mxu0 0.0
        %1368 = vmatprep.subr.mxu0 0.0
        %1369 = vmatpush1.msra.mxu0 0.0
        %1370 = vmatprep.subr.mxu0 0.0
        %1371 = vmatpush1.msra.mxu0 0.0
        %1372 = vmatprep.subr.mxu0 0.0
        %1373 = vmatpush1.msra.mxu0 0.0
        %1374 = vmatprep.subr.mxu0 0.0
        %1375 = vmatpush1.msra.mxu0 0.0
        %1376 = vmatprep.subr.mxu0 0.0
        %1377 = vmatpush1.msra.mxu0 0.0
        %1378 = vmatprep.subr.mxu0 0.0
        %1379 = vmatpush1.msra.mxu0 0.0
        %1380 = vmatprep.subr.mxu0 0.0
        %1381 = vmatpush1.msra.mxu0 0.0
        %1382 = vmatprep.subr.mxu0 0.0
        %1383 = vmatpush1.msra.mxu0 0.0
        %1384 = vmatprep.subr.mxu0 0.0
        %1385 = vmatpush1.msra.mxu0 0.0
        %1386 = vmatprep.subr.mxu0 0.0
        %1387 = vmatpush1.msra.mxu0 0.0
        %1388 = vmatprep.mubr.f32.mxu0 0.0
        %1389 = vmatmul.mubr.f32.gmra.mrb[0].mxu0 %v1322
        %v1390 = vpop.f32.mrb[0].mxu0
        %v1391 = vadd.f32 0.0, %v1390
        %v1392 = vpop.f32.mrb[0].mxu0
        %1393 = vdwg.mxu0
        %v1394 = vadd.f32 %v728, %v1391
        %v1395 = vld [vmem:[%s13] sm:$0x1]
        %v1396 = vmul.f32 %v1394, %v1394
        %v1397 = vsel %vm737, %v1396, 0.0
        %1398 = vadd.xlane.f32.xlu0 %v1397
        %v1399 = vpop.xlane.xlu0 %1398
        %v1400 = vmul.f32 %v1399, %v741
        %v1401 = vadd.f32 %v1400, 1e-06
        %v1402 = vrsqrt.pop %v1401
        %v1403 = vmul.f32 %v1394, %v1402
        %v1404 = vlaneseq
        %v1405 = vshrl.u32 %v1404, 7
        %v1406 = vsub.s32 0, %v1405
        %v1407 = vrot.slane %v1395, %v1406
        %v1408 = vmul.f32 %v1403, %v1407
        %v1409 = vld [vmem:[%s14] sm:$0xff]
        %v1410 = vld [vmem:[%s14 + $0x8] sm:$0xff]
        %v1411 = vld [vmem:[%s14 + $0x10] sm:$0xff]
        %v1412 = vld [vmem:[%s14 + $0x18] sm:$0xff]
        %v1414 = vsel %vm737, %v1408, 0
        %1416 = vmatprep.subr.mxu0 0.0
        %1417 = vmatpush1.msra.mxu0 %v1409
        %1418 = vmatprep.subr.mxu0 0.0
        %1419 = vmatpush1.msra.mxu0 %v1410
        %1420 = vmatprep.subr.mxu0 0.0
        %1421 = vmatpush1.msra.mxu0 %v1411
        %1422 = vmatprep.subr.mxu0 0.0
        %1423 = vmatpush1.msra.mxu0 %v1412
        %1424 = vmatprep.subr.mxu0 0.0
        %1425 = vmatpush1.msra.mxu0 0.0
        %1426 = vmatprep.subr.mxu0 0.0
        %1427 = vmatpush1.msra.mxu0 0.0
        %1428 = vmatprep.subr.mxu0 0.0
        %1429 = vmatpush1.msra.mxu0 0.0
        %1430 = vmatprep.subr.mxu0 0.0
        %1431 = vmatpush1.msra.mxu0 0.0
        %1432 = vmatprep.subr.mxu0 0.0
        %1433 = vmatpush1.msra.mxu0 0.0
        %1434 = vmatprep.subr.mxu0 0.0
        %1435 = vmatpush1.msra.mxu0 0.0
        %1436 = vmatprep.subr.mxu0 0.0
        %1437 = vmatpush1.msra.mxu0 0.0
        %1438 = vmatprep.subr.mxu0 0.0
        %1439 = vmatpush1.msra.mxu0 0.0
        %1440 = vmatprep.subr.mxu0 0.0
        %1441 = vmatpush1.msra.mxu0 0.0
        %1442 = vmatprep.subr.mxu0 0.0
        %1443 = vmatpush1.msra.mxu0 0.0
        %1444 = vmatprep.subr.mxu0 0.0
        %1445 = vmatpush1.msra.mxu0 0.0
        %1446 = vmatprep.subr.mxu0 0.0
        %1447 = vmatpush1.msra.mxu0 0.0
        %1448 = vmatprep.subr.mxu0 0.0
        %1449 = vmatpush1.msra.mxu0 0.0
        %1450 = vmatprep.subr.mxu0 0.0
        %1451 = vmatpush1.msra.mxu0 0.0
        %1452 = vmatprep.subr.mxu0 0.0
        %1453 = vmatpush1.msra.mxu0 0.0
        %1454 = vmatprep.subr.mxu0 0.0
        %1455 = vmatpush1.msra.mxu0 0.0
        %1456 = vmatprep.subr.mxu0 0.0
        %1457 = vmatpush1.msra.mxu0 0.0
        %1458 = vmatprep.subr.mxu0 0.0
        %1459 = vmatpush1.msra.mxu0 0.0
        %1460 = vmatprep.subr.mxu0 0.0
        %1461 = vmatpush1.msra.mxu0 0.0
        %1462 = vmatprep.subr.mxu0 0.0
        %1463 = vmatpush1.msra.mxu0 0.0
        %1464 = vmatprep.subr.mxu0 0.0
        %1465 = vmatpush1.msra.mxu0 0.0
        %1466 = vmatprep.subr.mxu0 0.0
        %1467 = vmatpush1.msra.mxu0 0.0
        %1468 = vmatprep.subr.mxu0 0.0
        %1469 = vmatpush1.msra.mxu0 0.0
        %1470 = vmatprep.subr.mxu0 0.0
        %1471 = vmatpush1.msra.mxu0 0.0
        %1472 = vmatprep.subr.mxu0 0.0
        %1473 = vmatpush1.msra.mxu0 0.0
        %1474 = vmatprep.subr.mxu0 0.0
        %1475 = vmatpush1.msra.mxu0 0.0
        %1476 = vmatprep.subr.mxu0 0.0
        %1477 = vmatpush1.msra.mxu0 0.0
        %1478 = vmatprep.subr.mxu0 0.0
        %1479 = vmatpush1.msra.mxu0 0.0
        %1480 = vmatprep.mubr.f32.mxu0 0.0
        %1481 = vmatmul.mubr.f32.gmra.mrb[0].mxu0 %v1414
        %v1482 = vpop.f32.mrb[0].mxu0
        %v1483 = vadd.f32 0.0, %v1482
        %v1484 = vpop.f32.mrb[0].mxu0
        %1485 = vdwg.mxu0
        %v1486 = vxor.u32 %v1483, 2147483648
        %v1487 = vmul.f32 %v1486, 1.442695
        %v1488 = vpow.pop %v1487
        %v1489 = vadd.f32 %v1488, 1.0
        %v1490 = vrcp.pop %v1489
        %v1491 = vmul.f32 1.0, %v1490
        %v1492 = vmul.f32 %v1483, %v1491
        %1494 = vrot.lane.b32.xlu0 %v1483, 64
        %v1495 = vpop.permute.xlu0 %1494
        %v1497 = vmul.f32 %v1492, %v1495
        %v1498 = vld [vmem:[%s15] sm:$0xff]
        %v1499 = vld [vmem:[%s15 + $0x8] sm:$0xff]
        %v1500 = vld [vmem:[%s15 + $0x10] sm:$0xff]
        %v1501 = vld [vmem:[%s15 + $0x18] sm:$0xff]
        %v1502 = vld [vmem:[%s15 + $0x20] sm:$0xff]
        %v1503 = vld [vmem:[%s15 + $0x28] sm:$0xff]
        %v1504 = vld [vmem:[%s15 + $0x30] sm:$0xff]
        %v1505 = vld [vmem:[%s15 + $0x38] sm:$0xff]
        %v1507 = vsel %vm609, %v1497, 0
        %1509 = vmatprep.subr.mxu0 0.0
        %1510 = vmatpush1.msra.mxu0 %v1498
        %1511 = vmatprep.subr.mxu0 0.0
        %1512 = vmatpush1.msra.mxu0 %v1499
        %1513 = vmatprep.subr.mxu0 0.0
        %1514 = vmatpush1.msra.mxu0 %v1500
        %1515 = vmatprep.subr.mxu0 0.0
        %1516 = vmatpush1.msra.mxu0 %v1501
        %1517 = vmatprep.subr.mxu0 0.0
        %1518 = vmatpush1.msra.mxu0 %v1502
        %1519 = vmatprep.subr.mxu0 0.0
        %1520 = vmatpush1.msra.mxu0 %v1503
        %1521 = vmatprep.subr.mxu0 0.0
        %1522 = vmatpush1.msra.mxu0 %v1504
        %1523 = vmatprep.subr.mxu0 0.0
        %1524 = vmatpush1.msra.mxu0 %v1505
        %1525 = vmatprep.subr.mxu0 0.0
        %1526 = vmatpush1.msra.mxu0 0.0
        %1527 = vmatprep.subr.mxu0 0.0
        %1528 = vmatpush1.msra.mxu0 0.0
        %1529 = vmatprep.subr.mxu0 0.0
        %1530 = vmatpush1.msra.mxu0 0.0
        %1531 = vmatprep.subr.mxu0 0.0
        %1532 = vmatpush1.msra.mxu0 0.0
        %1533 = vmatprep.subr.mxu0 0.0
        %1534 = vmatpush1.msra.mxu0 0.0
        %1535 = vmatprep.subr.mxu0 0.0
        %1536 = vmatpush1.msra.mxu0 0.0
        %1537 = vmatprep.subr.mxu0 0.0
        %1538 = vmatpush1.msra.mxu0 0.0
        %1539 = vmatprep.subr.mxu0 0.0
        %1540 = vmatpush1.msra.mxu0 0.0
        %1541 = vmatprep.subr.mxu0 0.0
        %1542 = vmatpush1.msra.mxu0 0.0
        %1543 = vmatprep.subr.mxu0 0.0
        %1544 = vmatpush1.msra.mxu0 0.0
        %1545 = vmatprep.subr.mxu0 0.0
        %1546 = vmatpush1.msra.mxu0 0.0
        %1547 = vmatprep.subr.mxu0 0.0
        %1548 = vmatpush1.msra.mxu0 0.0
        %1549 = vmatprep.subr.mxu0 0.0
        %1550 = vmatpush1.msra.mxu0 0.0
        %1551 = vmatprep.subr.mxu0 0.0
        %1552 = vmatpush1.msra.mxu0 0.0
        %1553 = vmatprep.subr.mxu0 0.0
        %1554 = vmatpush1.msra.mxu0 0.0
        %1555 = vmatprep.subr.mxu0 0.0
        %1556 = vmatpush1.msra.mxu0 0.0
        %1557 = vmatprep.subr.mxu0 0.0
        %1558 = vmatpush1.msra.mxu0 0.0
        %1559 = vmatprep.subr.mxu0 0.0
        %1560 = vmatpush1.msra.mxu0 0.0
        %1561 = vmatprep.subr.mxu0 0.0
        %1562 = vmatpush1.msra.mxu0 0.0
        %1563 = vmatprep.subr.mxu0 0.0
        %1564 = vmatpush1.msra.mxu0 0.0
        %1565 = vmatprep.subr.mxu0 0.0
        %1566 = vmatpush1.msra.mxu0 0.0
        %1567 = vmatprep.subr.mxu0 0.0
        %1568 = vmatpush1.msra.mxu0 0.0
        %1569 = vmatprep.subr.mxu0 0.0
        %1570 = vmatpush1.msra.mxu0 0.0
        %1571 = vmatprep.subr.mxu0 0.0
        %1572 = vmatpush1.msra.mxu0 0.0
        %1573 = vmatprep.mubr.f32.mxu0 0.0
        %1574 = vmatmul.mubr.f32.gmra.mrb[0].mxu0 %v1507
        %v1575 = vpop.f32.mrb[0].mxu0
        %v1576 = vadd.f32 0.0, %v1575
        %v1577 = vpop.f32.mrb[0].mxu0
        %1578 = vdwg.mxu0
        %v1579 = vadd.f32 %v1394, %v1576
        %v1580 = vld [vmem:[%s8 + $0x1] sm:$0x1]
        %v1581 = vmul.f32 %v1579, %v1579
        %v1582 = vsel %vm737, %v1581, 0.0
        %1583 = vadd.xlane.f32.xlu0 %v1582
        %v1584 = vpop.xlane.xlu0 %1583
        %v1585 = vmul.f32 %v1584, %v741
        %v1586 = vadd.f32 %v1585, 1e-06
        %v1587 = vrsqrt.pop %v1586
        %v1588 = vmul.f32 %v1579, %v1587
        %v1589 = vlaneseq
        %v1590 = vshrl.u32 %v1589, 7
        %v1591 = vsub.s32 0, %v1590
        %v1592 = vrot.slane %v1580, %v1591
        %v1593 = vmul.f32 %v1588, %v1592
        %s1594 = scalar_lea.vmem %s9, 32
        %v1595 = vld [vmem:[%s1594] sm:$0xff]
        %v1596 = vld [vmem:[%s1594 + $0x8] sm:$0xff]
        %v1597 = vld [vmem:[%s1594 + $0x10] sm:$0xff]
        %v1598 = vld [vmem:[%s1594 + $0x18] sm:$0xff]
        %v1600 = vsel %vm737, %v1593, 0
        %1602 = vmatprep.subr.mxu0 0.0
        %1603 = vmatpush1.msra.mxu0 %v1595
        %1604 = vmatprep.subr.mxu0 0.0
        %1605 = vmatpush1.msra.mxu0 %v1596
        %1606 = vmatprep.subr.mxu0 0.0
        %1607 = vmatpush1.msra.mxu0 %v1597
        %1608 = vmatprep.subr.mxu0 0.0
        %1609 = vmatpush1.msra.mxu0 %v1598
        %1610 = vmatprep.subr.mxu0 0.0
        %1611 = vmatpush1.msra.mxu0 0.0
        %1612 = vmatprep.subr.mxu0 0.0
        %1613 = vmatpush1.msra.mxu0 0.0
        %1614 = vmatprep.subr.mxu0 0.0
        %1615 = vmatpush1.msra.mxu0 0.0
        %1616 = vmatprep.subr.mxu0 0.0
        %1617 = vmatpush1.msra.mxu0 0.0
        %1618 = vmatprep.subr.mxu0 0.0
        %1619 = vmatpush1.msra.mxu0 0.0
        %1620 = vmatprep.subr.mxu0 0.0
        %1621 = vmatpush1.msra.mxu0 0.0
        %1622 = vmatprep.subr.mxu0 0.0
        %1623 = vmatpush1.msra.mxu0 0.0
        %1624 = vmatprep.subr.mxu0 0.0
        %1625 = vmatpush1.msra.mxu0 0.0
        %1626 = vmatprep.subr.mxu0 0.0
        %1627 = vmatpush1.msra.mxu0 0.0
        %1628 = vmatprep.subr.mxu0 0.0
        %1629 = vmatpush1.msra.mxu0 0.0
        %1630 = vmatprep.subr.mxu0 0.0
        %1631 = vmatpush1.msra.mxu0 0.0
        %1632 = vmatprep.subr.mxu0 0.0
        %1633 = vmatpush1.msra.mxu0 0.0
        %1634 = vmatprep.subr.mxu0 0.0
        %1635 = vmatpush1.msra.mxu0 0.0
        %1636 = vmatprep.subr.mxu0 0.0
        %1637 = vmatpush1.msra.mxu0 0.0
        %1638 = vmatprep.subr.mxu0 0.0
        %1639 = vmatpush1.msra.mxu0 0.0
        %1640 = vmatprep.subr.mxu0 0.0
        %1641 = vmatpush1.msra.mxu0 0.0
        %1642 = vmatprep.subr.mxu0 0.0
        %1643 = vmatpush1.msra.mxu0 0.0
        %1644 = vmatprep.subr.mxu0 0.0
        %1645 = vmatpush1.msra.mxu0 0.0
        %1646 = vmatprep.subr.mxu0 0.0
        %1647 = vmatpush1.msra.mxu0 0.0
        %1648 = vmatprep.subr.mxu0 0.0
        %1649 = vmatpush1.msra.mxu0 0.0
        %1650 = vmatprep.subr.mxu0 0.0
        %1651 = vmatpush1.msra.mxu0 0.0
        %1652 = vmatprep.subr.mxu0 0.0
        %1653 = vmatpush1.msra.mxu0 0.0
        %1654 = vmatprep.subr.mxu0 0.0
        %1655 = vmatpush1.msra.mxu0 0.0
        %1656 = vmatprep.subr.mxu0 0.0
        %1657 = vmatpush1.msra.mxu0 0.0
        %1658 = vmatprep.subr.mxu0 0.0
        %1659 = vmatpush1.msra.mxu0 0.0
        %1660 = vmatprep.subr.mxu0 0.0
        %1661 = vmatpush1.msra.mxu0 0.0
        %1662 = vmatprep.subr.mxu0 0.0
        %1663 = vmatpush1.msra.mxu0 0.0
        %1664 = vmatprep.subr.mxu0 0.0
        %1665 = vmatpush1.msra.mxu0 0.0
        %1666 = vmatprep.mubr.f32.mxu0 0.0
        %1667 = vmatmul.mubr.f32.gmra.mrb[0].mxu0 %v1600
        %v1668 = vpop.f32.mrb[0].mxu0
        %v1669 = vadd.f32 0.0, %v1668
        %v1670 = vpop.f32.mrb[0].mxu0
        %1671 = vdwg.mxu0
        %v1672 = vld [vmem:[%s10 + $0x1] sm:$0x1]
        %v1673 = vmul.f32 %v1669, %v1669
        %1675 = vrot.lane.b32.xlu0 %v1673, 96
        %v1676 = vpop.permute.xlu0 %1675
        %v1678 = vsel %vm834, %v1676, 0.0
        %1679 = vadd.xlane.f32.xlu0 %v1678
        %v1680 = vpop.xlane.xlu0 %1679
        %v1681 = vmul.f32 %v1680, %v838
        %v1682 = vadd.f32 %v1681, 1e-06
        %v1683 = vrsqrt.pop %v1682
        %v1684 = vmul.f32 %v1669, %v1683
        %v1685 = vlaneseq
        %v1686 = vshrl.u32 %v1685, 7
        %v1687 = vsub.s32 0, %v1686
        %v1688 = vrot.slane %v1672, %v1687
        %1690 = vrot.lane.b32.xlu0 %v1688, 32
        %v1691 = vpop.permute.xlu0 %1690
        %v1693 = vmul.f32 %v1684, %v1691
        %s1694 = scalar_lea.vmem %s11, 16
        %v1695 = vld [vmem:[%s1694] sm:$0xff]
        %v1696 = vld [vmem:[%s1694 + $0x8] sm:$0xff]
        %1698 = vrot.lane.b32.xlu0 %v1693, 96
        %v1699 = vpop.permute.xlu0 %1698
        %v1700 = vsel %vm834, %v1699, 0
        %1702 = vmatprep.subr.mxu0 0.0
        %1703 = vmatpush1.msra.mxu0 %v1695
        %1704 = vmatprep.subr.mxu0 0.0
        %1705 = vmatpush1.msra.mxu0 %v1696
        %1706 = vmatprep.subr.mxu0 0.0
        %1707 = vmatpush1.msra.mxu0 0.0
        %1708 = vmatprep.subr.mxu0 0.0
        %1709 = vmatpush1.msra.mxu0 0.0
        %1710 = vmatprep.subr.mxu0 0.0
        %1711 = vmatpush1.msra.mxu0 0.0
        %1712 = vmatprep.subr.mxu0 0.0
        %1713 = vmatpush1.msra.mxu0 0.0
        %1714 = vmatprep.subr.mxu0 0.0
        %1715 = vmatpush1.msra.mxu0 0.0
        %1716 = vmatprep.subr.mxu0 0.0
        %1717 = vmatpush1.msra.mxu0 0.0
        %1718 = vmatprep.subr.mxu0 0.0
        %1719 = vmatpush1.msra.mxu0 0.0
        %1720 = vmatprep.subr.mxu0 0.0
        %1721 = vmatpush1.msra.mxu0 0.0
        %1722 = vmatprep.subr.mxu0 0.0
        %1723 = vmatpush1.msra.mxu0 0.0
        %1724 = vmatprep.subr.mxu0 0.0
        %1725 = vmatpush1.msra.mxu0 0.0
        %1726 = vmatprep.subr.mxu0 0.0
        %1727 = vmatpush1.msra.mxu0 0.0
        %1728 = vmatprep.subr.mxu0 0.0
        %1729 = vmatpush1.msra.mxu0 0.0
        %1730 = vmatprep.subr.mxu0 0.0
        %1731 = vmatpush1.msra.mxu0 0.0
        %1732 = vmatprep.subr.mxu0 0.0
        %1733 = vmatpush1.msra.mxu0 0.0
        %1734 = vmatprep.subr.mxu0 0.0
        %1735 = vmatpush1.msra.mxu0 0.0
        %1736 = vmatprep.subr.mxu0 0.0
        %1737 = vmatpush1.msra.mxu0 0.0
        %1738 = vmatprep.subr.mxu0 0.0
        %1739 = vmatpush1.msra.mxu0 0.0
        %1740 = vmatprep.subr.mxu0 0.0
        %1741 = vmatpush1.msra.mxu0 0.0
        %1742 = vmatprep.subr.mxu0 0.0
        %1743 = vmatpush1.msra.mxu0 0.0
        %1744 = vmatprep.subr.mxu0 0.0
        %1745 = vmatpush1.msra.mxu0 0.0
        %1746 = vmatprep.subr.mxu0 0.0
        %1747 = vmatpush1.msra.mxu0 0.0
        %1748 = vmatprep.subr.mxu0 0.0
        %1749 = vmatpush1.msra.mxu0 0.0
        %1750 = vmatprep.subr.mxu0 0.0
        %1751 = vmatpush1.msra.mxu0 0.0
        %1752 = vmatprep.subr.mxu0 0.0
        %1753 = vmatpush1.msra.mxu0 0.0
        %1754 = vmatprep.subr.mxu0 0.0
        %1755 = vmatpush1.msra.mxu0 0.0
        %1756 = vmatprep.subr.mxu0 0.0
        %1757 = vmatpush1.msra.mxu0 0.0
        %1758 = vmatprep.subr.mxu0 0.0
        %1759 = vmatpush1.msra.mxu0 0.0
        %1760 = vmatprep.subr.mxu0 0.0
        %1761 = vmatpush1.msra.mxu0 0.0
        %1762 = vmatprep.subr.mxu0 0.0
        %1763 = vmatpush1.msra.mxu0 0.0
        %1764 = vmatprep.subr.mxu0 0.0
        %1765 = vmatpush1.msra.mxu0 0.0
        %1766 = vmatprep.mubr.f32.mxu0 0.0
        %1767 = vmatmul.mubr.f32.gmra.mrb[0].mxu0 %v1700
        %v1768 = vpop.f32.mrb[0].mxu0
        %v1769 = vadd.f32 0.0, %v1768
        %v1770 = vpop.f32.mrb[0].mxu0
        %1771 = vdwg.mxu0
        %v1772 = vmul.f32 %v1669, %v931
        %v1773 = vmul.f32 %v1669, %v936
        %1775 = vrot.lane.b32.xlu0 %v1773, 120
        %v1776 = vpop.permute.xlu0 %1775
        %v1778 = vadd.f32 %v1772, %v1776
        %v1779 = vmul.f32 %v1669, %v946
        %v1780 = vmul.f32 %v1669, %v951
        %1782 = vrot.lane.b32.xlu0 %v1780, 124
        %v1783 = vpop.permute.xlu0 %1782
        %v1785 = vadd.f32 %v1779, %v1783
        %1787 = vrot.lane.b32.xlu0 %v1778, 120
        %v1788 = vpop.permute.xlu0 %1787
        %v1790 = vsel %vm963, %v1669, %v1788
        %1792 = vrot.lane.b32.xlu0 %v1785, 88
        %v1793 = vpop.permute.xlu0 %1792
        %v1795 = vsel %vm963, %v1769, %v1793
        %v1797 = vsel %vm970, %v1790, 0
        %v1800 = vsel %vm970, %v1795, 0
        %1802 = vmatprep.subr.mxu0 0.0
        %1803 = vmatpush1.xpose.msra.mxu0 %v1800
        %1804 = vmatprep.subr.mxu0 0.0
        %1805 = vmatpush1.xpose.msra.mxu0 0.0
        %1806 = vmatprep.subr.mxu0 0.0
        %1807 = vmatpush1.xpose.msra.mxu0 0.0
        %1808 = vmatprep.subr.mxu0 0.0
        %1809 = vmatpush1.xpose.msra.mxu0 0.0
        %1810 = vmatprep.subr.mxu0 0.0
        %1811 = vmatpush1.xpose.msra.mxu0 0.0
        %1812 = vmatprep.subr.mxu0 0.0
        %1813 = vmatpush1.xpose.msra.mxu0 0.0
        %1814 = vmatprep.subr.mxu0 0.0
        %1815 = vmatpush1.xpose.msra.mxu0 0.0
        %1816 = vmatprep.subr.mxu0 0.0
        %1817 = vmatpush1.xpose.msra.mxu0 0.0
        %1818 = vmatprep.subr.mxu0 0.0
        %1819 = vmatpush1.xpose.msra.mxu0 0.0
        %1820 = vmatprep.subr.mxu0 0.0
        %1821 = vmatpush1.xpose.msra.mxu0 0.0
        %1822 = vmatprep.subr.mxu0 0.0
        %1823 = vmatpush1.xpose.msra.mxu0 0.0
        %1824 = vmatprep.subr.mxu0 0.0
        %1825 = vmatpush1.xpose.msra.mxu0 0.0
        %1826 = vmatprep.subr.mxu0 0.0
        %1827 = vmatpush1.xpose.msra.mxu0 0.0
        %1828 = vmatprep.subr.mxu0 0.0
        %1829 = vmatpush1.xpose.msra.mxu0 0.0
        %1830 = vmatprep.subr.mxu0 0.0
        %1831 = vmatpush1.xpose.msra.mxu0 0.0
        %1832 = vmatprep.subr.mxu0 0.0
        %1833 = vmatpush1.xpose.msra.mxu0 0.0
        %1834 = vmatprep.subr.mxu0 0.0
        %1835 = vmatpush1.xpose.msra.mxu0 0.0
        %1836 = vmatprep.subr.mxu0 0.0
        %1837 = vmatpush1.xpose.msra.mxu0 0.0
        %1838 = vmatprep.subr.mxu0 0.0
        %1839 = vmatpush1.xpose.msra.mxu0 0.0
        %1840 = vmatprep.subr.mxu0 0.0
        %1841 = vmatpush1.xpose.msra.mxu0 0.0
        %1842 = vmatprep.subr.mxu0 0.0
        %1843 = vmatpush1.xpose.msra.mxu0 0.0
        %1844 = vmatprep.subr.mxu0 0.0
        %1845 = vmatpush1.xpose.msra.mxu0 0.0
        %1846 = vmatprep.subr.mxu0 0.0
        %1847 = vmatpush1.xpose.msra.mxu0 0.0
        %1848 = vmatprep.subr.mxu0 0.0
        %1849 = vmatpush1.xpose.msra.mxu0 0.0
        %1850 = vmatprep.subr.mxu0 0.0
        %1851 = vmatpush1.xpose.msra.mxu0 0.0
        %1852 = vmatprep.subr.mxu0 0.0
        %1853 = vmatpush1.xpose.msra.mxu0 0.0
        %1854 = vmatprep.subr.mxu0 0.0
        %1855 = vmatpush1.xpose.msra.mxu0 0.0
        %1856 = vmatprep.subr.mxu0 0.0
        %1857 = vmatpush1.xpose.msra.mxu0 0.0
        %1858 = vmatprep.subr.mxu0 0.0
        %1859 = vmatpush1.xpose.msra.mxu0 0.0
        %1860 = vmatprep.subr.mxu0 0.0
        %1861 = vmatpush1.xpose.msra.mxu0 0.0
        %1862 = vmatprep.subr.mxu0 0.0
        %1863 = vmatpush1.xpose.msra.mxu0 0.0
        %1864 = vmatprep.subr.mxu0 0.0
        %1865 = vmatpush1.xpose.msra.mxu0 0.0
        %1866 = vmatprep.mubr.f32.mxu0 0.0
        %1867 = vmatmul.mubr.f32.gmra.mrb[0].mxu0 %v1797
        %v1868 = vpop.f32.mrb[0].mxu0
        %v1869 = vadd.f32 0.0, %v1868
        %v1870 = vpop.f32.mrb[0].mxu0
        %1871 = vdwg.mxu0
        %v1872 = vmul.f32 %v1869, 0.28867513
        %v1873 = vadd.f32 %v1872, %v603
        %v1874 = vsel %vm963, %v1873, -inf
        %1875 = vmax.xlane.f32.xlu0 %v1874
        %v1876 = vpop.xlane.xlu0 %1875
        %v1877 = vsub.f32 %v1873, %v1876
        %v1878 = vmul.f32 %v1877, 1.442695
        %v1879 = vpow.pop %v1878
        %v1880 = vsel %vm963, %v1879, 0.0
        %1881 = vadd.xlane.f32.xlu0 %v1880
        %v1882 = vpop.xlane.xlu0 %1881
        %v1883 = vrcp.pop %v1882
        %v1884 = vmul.f32 %v1879, %v1883
        %1886 = vrot.lane.b32.xlu0 %v1769, 112
        %v1887 = vpop.permute.xlu0 %1886
        %v1890 = vsel %vm963, %v1884, 0
        %1892 = vmatprep.subr.mxu0 0.0
        %1893 = vmatpush1.msra.mxu0 %v1887
        %1894 = vmatprep.subr.mxu0 0.0
        %1895 = vmatpush1.msra.mxu0 0.0
        %1896 = vmatprep.subr.mxu0 0.0
        %1897 = vmatpush1.msra.mxu0 0.0
        %1898 = vmatprep.subr.mxu0 0.0
        %1899 = vmatpush1.msra.mxu0 0.0
        %1900 = vmatprep.subr.mxu0 0.0
        %1901 = vmatpush1.msra.mxu0 0.0
        %1902 = vmatprep.subr.mxu0 0.0
        %1903 = vmatpush1.msra.mxu0 0.0
        %1904 = vmatprep.subr.mxu0 0.0
        %1905 = vmatpush1.msra.mxu0 0.0
        %1906 = vmatprep.subr.mxu0 0.0
        %1907 = vmatpush1.msra.mxu0 0.0
        %1908 = vmatprep.subr.mxu0 0.0
        %1909 = vmatpush1.msra.mxu0 0.0
        %1910 = vmatprep.subr.mxu0 0.0
        %1911 = vmatpush1.msra.mxu0 0.0
        %1912 = vmatprep.subr.mxu0 0.0
        %1913 = vmatpush1.msra.mxu0 0.0
        %1914 = vmatprep.subr.mxu0 0.0
        %1915 = vmatpush1.msra.mxu0 0.0
        %1916 = vmatprep.subr.mxu0 0.0
        %1917 = vmatpush1.msra.mxu0 0.0
        %1918 = vmatprep.subr.mxu0 0.0
        %1919 = vmatpush1.msra.mxu0 0.0
        %1920 = vmatprep.subr.mxu0 0.0
        %1921 = vmatpush1.msra.mxu0 0.0
        %1922 = vmatprep.subr.mxu0 0.0
        %1923 = vmatpush1.msra.mxu0 0.0
        %1924 = vmatprep.subr.mxu0 0.0
        %1925 = vmatpush1.msra.mxu0 0.0
        %1926 = vmatprep.subr.mxu0 0.0
        %1927 = vmatpush1.msra.mxu0 0.0
        %1928 = vmatprep.subr.mxu0 0.0
        %1929 = vmatpush1.msra.mxu0 0.0
        %1930 = vmatprep.subr.mxu0 0.0
        %1931 = vmatpush1.msra.mxu0 0.0
        %1932 = vmatprep.subr.mxu0 0.0
        %1933 = vmatpush1.msra.mxu0 0.0
        %1934 = vmatprep.subr.mxu0 0.0
        %1935 = vmatpush1.msra.mxu0 0.0
        %1936 = vmatprep.subr.mxu0 0.0
        %1937 = vmatpush1.msra.mxu0 0.0
        %1938 = vmatprep.subr.mxu0 0.0
        %1939 = vmatpush1.msra.mxu0 0.0
        %1940 = vmatprep.subr.mxu0 0.0
        %1941 = vmatpush1.msra.mxu0 0.0
        %1942 = vmatprep.subr.mxu0 0.0
        %1943 = vmatpush1.msra.mxu0 0.0
        %1944 = vmatprep.subr.mxu0 0.0
        %1945 = vmatpush1.msra.mxu0 0.0
        %1946 = vmatprep.subr.mxu0 0.0
        %1947 = vmatpush1.msra.mxu0 0.0
        %1948 = vmatprep.subr.mxu0 0.0
        %1949 = vmatpush1.msra.mxu0 0.0
        %1950 = vmatprep.subr.mxu0 0.0
        %1951 = vmatpush1.msra.mxu0 0.0
        %1952 = vmatprep.subr.mxu0 0.0
        %1953 = vmatpush1.msra.mxu0 0.0
        %1954 = vmatprep.subr.mxu0 0.0
        %1955 = vmatpush1.msra.mxu0 0.0
        %1956 = vmatprep.mubr.f32.mxu0 0.0
        %1957 = vmatmul.mubr.f32.gmra.mrb[0].mxu0 %v1890
        %v1958 = vpop.f32.mrb[0].mxu0
        %v1959 = vadd.f32 0.0, %v1958
        %v1960 = vpop.f32.mrb[0].mxu0
        %1961 = vdwg.mxu0
        %1963 = vrot.lane.b32.xlu0 %v1669, 120
        %v1964 = vpop.permute.xlu0 %1963
        %1966 = vrot.lane.b32.xlu0 %v1778, 116
        %v1967 = vpop.permute.xlu0 %1966
        %v1969 = vsel %vm963, %v1964, %v1967
        %1970 = vrot.lane.b32.xlu0 %v1769, 120
        %v1971 = vpop.permute.xlu0 %1970
        %v1973 = vsel %vm963, %v1971, %v1793
        %v1975 = vsel %vm970, %v1969, 0
        %v1978 = vsel %vm970, %v1973, 0
        %1980 = vmatprep.subr.mxu0 0.0
        %1981 = vmatpush1.xpose.msra.mxu0 %v1978
        %1982 = vmatprep.subr.mxu0 0.0
        %1983 = vmatpush1.xpose.msra.mxu0 0.0
        %1984 = vmatprep.subr.mxu0 0.0
        %1985 = vmatpush1.xpose.msra.mxu0 0.0
        %1986 = vmatprep.subr.mxu0 0.0
        %1987 = vmatpush1.xpose.msra.mxu0 0.0
        %1988 = vmatprep.subr.mxu0 0.0
        %1989 = vmatpush1.xpose.msra.mxu0 0.0
        %1990 = vmatprep.subr.mxu0 0.0
        %1991 = vmatpush1.xpose.msra.mxu0 0.0
        %1992 = vmatprep.subr.mxu0 0.0
        %1993 = vmatpush1.xpose.msra.mxu0 0.0
        %1994 = vmatprep.subr.mxu0 0.0
        %1995 = vmatpush1.xpose.msra.mxu0 0.0
        %1996 = vmatprep.subr.mxu0 0.0
        %1997 = vmatpush1.xpose.msra.mxu0 0.0
        %1998 = vmatprep.subr.mxu0 0.0
        %1999 = vmatpush1.xpose.msra.mxu0 0.0
        %2000 = vmatprep.subr.mxu0 0.0
        %2001 = vmatpush1.xpose.msra.mxu0 0.0
        %2002 = vmatprep.subr.mxu0 0.0
        %2003 = vmatpush1.xpose.msra.mxu0 0.0
        %2004 = vmatprep.subr.mxu0 0.0
        %2005 = vmatpush1.xpose.msra.mxu0 0.0
        %2006 = vmatprep.subr.mxu0 0.0
        %2007 = vmatpush1.xpose.msra.mxu0 0.0
        %2008 = vmatprep.subr.mxu0 0.0
        %2009 = vmatpush1.xpose.msra.mxu0 0.0
        %2010 = vmatprep.subr.mxu0 0.0
        %2011 = vmatpush1.xpose.msra.mxu0 0.0
        %2012 = vmatprep.subr.mxu0 0.0
        %2013 = vmatpush1.xpose.msra.mxu0 0.0
        %2014 = vmatprep.subr.mxu0 0.0
        %2015 = vmatpush1.xpose.msra.mxu0 0.0
        %2016 = vmatprep.subr.mxu0 0.0
        %2017 = vmatpush1.xpose.msra.mxu0 0.0
        %2018 = vmatprep.subr.mxu0 0.0
        %2019 = vmatpush1.xpose.msra.mxu0 0.0
        %2020 = vmatprep.subr.mxu0 0.0
        %2021 = vmatpush1.xpose.msra.mxu0 0.0
        %2022 = vmatprep.subr.mxu0 0.0
        %2023 = vmatpush1.xpose.msra.mxu0 0.0
        %2024 = vmatprep.subr.mxu0 0.0
        %2025 = vmatpush1.xpose.msra.mxu0 0.0
        %2026 = vmatprep.subr.mxu0 0.0
        %2027 = vmatpush1.xpose.msra.mxu0 0.0
        %2028 = vmatprep.subr.mxu0 0.0
        %2029 = vmatpush1.xpose.msra.mxu0 0.0
        %2030 = vmatprep.subr.mxu0 0.0
        %2031 = vmatpush1.xpose.msra.mxu0 0.0
        %2032 = vmatprep.subr.mxu0 0.0
        %2033 = vmatpush1.xpose.msra.mxu0 0.0
        %2034 = vmatprep.subr.mxu0 0.0
        %2035 = vmatpush1.xpose.msra.mxu0 0.0
        %2036 = vmatprep.subr.mxu0 0.0
        %2037 = vmatpush1.xpose.msra.mxu0 0.0
        %2038 = vmatprep.subr.mxu0 0.0
        %2039 = vmatpush1.xpose.msra.mxu0 0.0
        %2040 = vmatprep.subr.mxu0 0.0
        %2041 = vmatpush1.xpose.msra.mxu0 0.0
        %2042 = vmatprep.subr.mxu0 0.0
        %2043 = vmatpush1.xpose.msra.mxu0 0.0
        %2044 = vmatprep.mubr.f32.mxu0 0.0
        %2045 = vmatmul.mubr.f32.gmra.mrb[0].mxu0 %v1975
        %v2046 = vpop.f32.mrb[0].mxu0
        %v2047 = vadd.f32 0.0, %v2046
        %v2048 = vpop.f32.mrb[0].mxu0
        %2049 = vdwg.mxu0
        %v2050 = vmul.f32 %v2047, 0.28867513
        %v2051 = vadd.f32 %v2050, %v603
        %v2052 = vsel %vm963, %v2051, -inf
        %2053 = vmax.xlane.f32.xlu0 %v2052
        %v2054 = vpop.xlane.xlu0 %2053
        %v2055 = vsub.f32 %v2051, %v2054
        %v2056 = vmul.f32 %v2055, 1.442695
        %v2057 = vpow.pop %v2056
        %v2058 = vsel %vm963, %v2057, 0.0
        %2059 = vadd.xlane.f32.xlu0 %v2058
        %v2060 = vpop.xlane.xlu0 %2059
        %v2061 = vrcp.pop %v2060
        %v2062 = vmul.f32 %v2057, %v2061
        %2063 = vrot.lane.b32.xlu0 %v1769, 104
        %v2064 = vpop.permute.xlu0 %2063
        %v2067 = vsel %vm963, %v2062, 0
        %2069 = vmatprep.subr.mxu0 0.0
        %2070 = vmatpush1.msra.mxu0 %v2064
        %2071 = vmatprep.subr.mxu0 0.0
        %2072 = vmatpush1.msra.mxu0 0.0
        %2073 = vmatprep.subr.mxu0 0.0
        %2074 = vmatpush1.msra.mxu0 0.0
        %2075 = vmatprep.subr.mxu0 0.0
        %2076 = vmatpush1.msra.mxu0 0.0
        %2077 = vmatprep.subr.mxu0 0.0
        %2078 = vmatpush1.msra.mxu0 0.0
        %2079 = vmatprep.subr.mxu0 0.0
        %2080 = vmatpush1.msra.mxu0 0.0
        %2081 = vmatprep.subr.mxu0 0.0
        %2082 = vmatpush1.msra.mxu0 0.0
        %2083 = vmatprep.subr.mxu0 0.0
        %2084 = vmatpush1.msra.mxu0 0.0
        %2085 = vmatprep.subr.mxu0 0.0
        %2086 = vmatpush1.msra.mxu0 0.0
        %2087 = vmatprep.subr.mxu0 0.0
        %2088 = vmatpush1.msra.mxu0 0.0
        %2089 = vmatprep.subr.mxu0 0.0
        %2090 = vmatpush1.msra.mxu0 0.0
        %2091 = vmatprep.subr.mxu0 0.0
        %2092 = vmatpush1.msra.mxu0 0.0
        %2093 = vmatprep.subr.mxu0 0.0
        %2094 = vmatpush1.msra.mxu0 0.0
        %2095 = vmatprep.subr.mxu0 0.0
        %2096 = vmatpush1.msra.mxu0 0.0
        %2097 = vmatprep.subr.mxu0 0.0
        %2098 = vmatpush1.msra.mxu0 0.0
        %2099 = vmatprep.subr.mxu0 0.0
        %2100 = vmatpush1.msra.mxu0 0.0
        %2101 = vmatprep.subr.mxu0 0.0
        %2102 = vmatpush1.msra.mxu0 0.0
        %2103 = vmatprep.subr.mxu0 0.0
        %2104 = vmatpush1.msra.mxu0 0.0
        %2105 = vmatprep.subr.mxu0 0.0
        %2106 = vmatpush1.msra.mxu0 0.0
        %2107 = vmatprep.subr.mxu0 0.0
        %2108 = vmatpush1.msra.mxu0 0.0
        %2109 = vmatprep.subr.mxu0 0.0
        %2110 = vmatpush1.msra.mxu0 0.0
        %2111 = vmatprep.subr.mxu0 0.0
        %2112 = vmatpush1.msra.mxu0 0.0
        %2113 = vmatprep.subr.mxu0 0.0
        %2114 = vmatpush1.msra.mxu0 0.0
        %2115 = vmatprep.subr.mxu0 0.0
        %2116 = vmatpush1.msra.mxu0 0.0
        %2117 = vmatprep.subr.mxu0 0.0
        %2118 = vmatpush1.msra.mxu0 0.0
        %2119 = vmatprep.subr.mxu0 0.0
        %2120 = vmatpush1.msra.mxu0 0.0
        %2121 = vmatprep.subr.mxu0 0.0
        %2122 = vmatpush1.msra.mxu0 0.0
        %2123 = vmatprep.subr.mxu0 0.0
        %2124 = vmatpush1.msra.mxu0 0.0
        %2125 = vmatprep.subr.mxu0 0.0
        %2126 = vmatpush1.msra.mxu0 0.0
        %2127 = vmatprep.subr.mxu0 0.0
        %2128 = vmatpush1.msra.mxu0 0.0
        %2129 = vmatprep.subr.mxu0 0.0
        %2130 = vmatpush1.msra.mxu0 0.0
        %2131 = vmatprep.subr.mxu0 0.0
        %2132 = vmatpush1.msra.mxu0 0.0
        %2133 = vmatprep.mubr.f32.mxu0 0.0
        %2134 = vmatmul.mubr.f32.gmra.mrb[0].mxu0 %v2067
        %v2135 = vpop.f32.mrb[0].mxu0
        %v2136 = vadd.f32 0.0, %v2135
        %v2137 = vpop.f32.mrb[0].mxu0
        %2138 = vdwg.mxu0
        %2140 = vrot.lane.b32.xlu0 %v2136, 8
        %v2141 = vpop.permute.xlu0 %2140
        %v2143 = vsel %vm963, %v1959, %v2141
        %s2144 = scalar_lea.vmem %s12, 16
        %v2145 = vld [vmem:[%s2144] sm:$0xff]
        %v2146 = vld [vmem:[%s2144 + $0x8] sm:$0xff]
        %v2148 = vsel %vm834, %v2143, 0
        %2150 = vmatprep.subr.mxu0 0.0
        %2151 = vmatpush1.msra.mxu0 %v2145
        %2152 = vmatprep.subr.mxu0 0.0
        %2153 = vmatpush1.msra.mxu0 %v2146
        %2154 = vmatprep.subr.mxu0 0.0
        %2155 = vmatpush1.msra.mxu0 0.0
        %2156 = vmatprep.subr.mxu0 0.0
        %2157 = vmatpush1.msra.mxu0 0.0
        %2158 = vmatprep.subr.mxu0 0.0
        %2159 = vmatpush1.msra.mxu0 0.0
        %2160 = vmatprep.subr.mxu0 0.0
        %2161 = vmatpush1.msra.mxu0 0.0
        %2162 = vmatprep.subr.mxu0 0.0
        %2163 = vmatpush1.msra.mxu0 0.0
        %2164 = vmatprep.subr.mxu0 0.0
        %2165 = vmatpush1.msra.mxu0 0.0
        %2166 = vmatprep.subr.mxu0 0.0
        %2167 = vmatpush1.msra.mxu0 0.0
        %2168 = vmatprep.subr.mxu0 0.0
        %2169 = vmatpush1.msra.mxu0 0.0
        %2170 = vmatprep.subr.mxu0 0.0
        %2171 = vmatpush1.msra.mxu0 0.0
        %2172 = vmatprep.subr.mxu0 0.0
        %2173 = vmatpush1.msra.mxu0 0.0
        %2174 = vmatprep.subr.mxu0 0.0
        %2175 = vmatpush1.msra.mxu0 0.0
        %2176 = vmatprep.subr.mxu0 0.0
        %2177 = vmatpush1.msra.mxu0 0.0
        %2178 = vmatprep.subr.mxu0 0.0
        %2179 = vmatpush1.msra.mxu0 0.0
        %2180 = vmatprep.subr.mxu0 0.0
        %2181 = vmatpush1.msra.mxu0 0.0
        %2182 = vmatprep.subr.mxu0 0.0
        %2183 = vmatpush1.msra.mxu0 0.0
        %2184 = vmatprep.subr.mxu0 0.0
        %2185 = vmatpush1.msra.mxu0 0.0
        %2186 = vmatprep.subr.mxu0 0.0
        %2187 = vmatpush1.msra.mxu0 0.0
        %2188 = vmatprep.subr.mxu0 0.0
        %2189 = vmatpush1.msra.mxu0 0.0
        %2190 = vmatprep.subr.mxu0 0.0
        %2191 = vmatpush1.msra.mxu0 0.0
        %2192 = vmatprep.subr.mxu0 0.0
        %2193 = vmatpush1.msra.mxu0 0.0
        %2194 = vmatprep.subr.mxu0 0.0
        %2195 = vmatpush1.msra.mxu0 0.0
        %2196 = vmatprep.subr.mxu0 0.0
        %2197 = vmatpush1.msra.mxu0 0.0
        %2198 = vmatprep.subr.mxu0 0.0
        %2199 = vmatpush1.msra.mxu0 0.0
        %2200 = vmatprep.subr.mxu0 0.0
        %2201 = vmatpush1.msra.mxu0 0.0
        %2202 = vmatprep.subr.mxu0 0.0
        %2203 = vmatpush1.msra.mxu0 0.0
        %2204 = vmatprep.subr.mxu0 0.0
        %2205 = vmatpush1.msra.mxu0 0.0
        %2206 = vmatprep.subr.mxu0 0.0
        %2207 = vmatpush1.msra.mxu0 0.0
        %2208 = vmatprep.subr.mxu0 0.0
        %2209 = vmatpush1.msra.mxu0 0.0
        %2210 = vmatprep.subr.mxu0 0.0
        %2211 = vmatpush1.msra.mxu0 0.0
        %2212 = vmatprep.subr.mxu0 0.0
        %2213 = vmatpush1.msra.mxu0 0.0
        %2214 = vmatprep.mubr.f32.mxu0 0.0
        %2215 = vmatmul.mubr.f32.gmra.mrb[0].mxu0 %v2148
        %v2216 = vpop.f32.mrb[0].mxu0
        %v2217 = vadd.f32 0.0, %v2216
        %v2218 = vpop.f32.mrb[0].mxu0
        %2219 = vdwg.mxu0
        %v2220 = vadd.f32 %v1579, %v2217
        %v2221 = vld [vmem:[%s13 + $0x1] sm:$0x1]
        %v2222 = vmul.f32 %v2220, %v2220
        %v2223 = vsel %vm737, %v2222, 0.0
        %2224 = vadd.xlane.f32.xlu0 %v2223
        %v2225 = vpop.xlane.xlu0 %2224
        %v2226 = vmul.f32 %v2225, %v741
        %v2227 = vadd.f32 %v2226, 1e-06
        %v2228 = vrsqrt.pop %v2227
        %v2229 = vmul.f32 %v2220, %v2228
        %v2230 = vlaneseq
        %v2231 = vshrl.u32 %v2230, 7
        %v2232 = vsub.s32 0, %v2231
        %v2233 = vrot.slane %v2221, %v2232
        %v2234 = vmul.f32 %v2229, %v2233
        %s2235 = scalar_lea.vmem %s14, 32
        %v2236 = vld [vmem:[%s2235] sm:$0xff]
        %v2237 = vld [vmem:[%s2235 + $0x8] sm:$0xff]
        %v2238 = vld [vmem:[%s2235 + $0x10] sm:$0xff]
        %v2239 = vld [vmem:[%s2235 + $0x18] sm:$0xff]
        %v2241 = vsel %vm737, %v2234, 0
        %2243 = vmatprep.subr.mxu0 0.0
        %2244 = vmatpush1.msra.mxu0 %v2236
        %2245 = vmatprep.subr.mxu0 0.0
        %2246 = vmatpush1.msra.mxu0 %v2237
        %2247 = vmatprep.subr.mxu0 0.0
        %2248 = vmatpush1.msra.mxu0 %v2238
        %2249 = vmatprep.subr.mxu0 0.0
        %2250 = vmatpush1.msra.mxu0 %v2239
        %2251 = vmatprep.subr.mxu0 0.0
        %2252 = vmatpush1.msra.mxu0 0.0
        %2253 = vmatprep.subr.mxu0 0.0
        %2254 = vmatpush1.msra.mxu0 0.0
        %2255 = vmatprep.subr.mxu0 0.0
        %2256 = vmatpush1.msra.mxu0 0.0
        %2257 = vmatprep.subr.mxu0 0.0
        %2258 = vmatpush1.msra.mxu0 0.0
        %2259 = vmatprep.subr.mxu0 0.0
        %2260 = vmatpush1.msra.mxu0 0.0
        %2261 = vmatprep.subr.mxu0 0.0
        %2262 = vmatpush1.msra.mxu0 0.0
        %2263 = vmatprep.subr.mxu0 0.0
        %2264 = vmatpush1.msra.mxu0 0.0
        %2265 = vmatprep.subr.mxu0 0.0
        %2266 = vmatpush1.msra.mxu0 0.0
        %2267 = vmatprep.subr.mxu0 0.0
        %2268 = vmatpush1.msra.mxu0 0.0
        %2269 = vmatprep.subr.mxu0 0.0
        %2270 = vmatpush1.msra.mxu0 0.0
        %2271 = vmatprep.subr.mxu0 0.0
        %2272 = vmatpush1.msra.mxu0 0.0
        %2273 = vmatprep.subr.mxu0 0.0
        %2274 = vmatpush1.msra.mxu0 0.0
        %2275 = vmatprep.subr.mxu0 0.0
        %2276 = vmatpush1.msra.mxu0 0.0
        %2277 = vmatprep.subr.mxu0 0.0
        %2278 = vmatpush1.msra.mxu0 0.0
        %2279 = vmatprep.subr.mxu0 0.0
        %2280 = vmatpush1.msra.mxu0 0.0
        %2281 = vmatprep.subr.mxu0 0.0
        %2282 = vmatpush1.msra.mxu0 0.0
        %2283 = vmatprep.subr.mxu0 0.0
        %2284 = vmatpush1.msra.mxu0 0.0
        %2285 = vmatprep.subr.mxu0 0.0
        %2286 = vmatpush1.msra.mxu0 0.0
        %2287 = vmatprep.subr.mxu0 0.0
        %2288 = vmatpush1.msra.mxu0 0.0
        %2289 = vmatprep.subr.mxu0 0.0
        %2290 = vmatpush1.msra.mxu0 0.0
        %2291 = vmatprep.subr.mxu0 0.0
        %2292 = vmatpush1.msra.mxu0 0.0
        %2293 = vmatprep.subr.mxu0 0.0
        %2294 = vmatpush1.msra.mxu0 0.0
        %2295 = vmatprep.subr.mxu0 0.0
        %2296 = vmatpush1.msra.mxu0 0.0
        %2297 = vmatprep.subr.mxu0 0.0
        %2298 = vmatpush1.msra.mxu0 0.0
        %2299 = vmatprep.subr.mxu0 0.0
        %2300 = vmatpush1.msra.mxu0 0.0
        %2301 = vmatprep.subr.mxu0 0.0
        %2302 = vmatpush1.msra.mxu0 0.0
        %2303 = vmatprep.subr.mxu0 0.0
        %2304 = vmatpush1.msra.mxu0 0.0
        %2305 = vmatprep.subr.mxu0 0.0
        %2306 = vmatpush1.msra.mxu0 0.0
        %2307 = vmatprep.mubr.f32.mxu0 0.0
        %2308 = vmatmul.mubr.f32.gmra.mrb[0].mxu0 %v2241
        %v2309 = vpop.f32.mrb[0].mxu0
        %v2310 = vadd.f32 0.0, %v2309
        %v2311 = vpop.f32.mrb[0].mxu0
        %2312 = vdwg.mxu0
        %v2313 = vxor.u32 %v2310, 2147483648
        %v2314 = vmul.f32 %v2313, 1.442695
        %v2315 = vpow.pop %v2314
        %v2316 = vadd.f32 %v2315, 1.0
        %v2317 = vrcp.pop %v2316
        %v2318 = vmul.f32 1.0, %v2317
        %v2319 = vmul.f32 %v2310, %v2318
        %2321 = vrot.lane.b32.xlu0 %v2310, 64
        %v2322 = vpop.permute.xlu0 %2321
        %v2324 = vmul.f32 %v2319, %v2322
        %s2325 = scalar_lea.vmem %s15, 64
        %v2326 = vld [vmem:[%s2325] sm:$0xff]
        %v2327 = vld [vmem:[%s2325 + $0x8] sm:$0xff]
        %v2328 = vld [vmem:[%s2325 + $0x10] sm:$0xff]
        %v2329 = vld [vmem:[%s2325 + $0x18] sm:$0xff]
        %v2330 = vld [vmem:[%s2325 + $0x20] sm:$0xff]
        %v2331 = vld [vmem:[%s2325 + $0x28] sm:$0xff]
        %v2332 = vld [vmem:[%s2325 + $0x30] sm:$0xff]
        %v2333 = vld [vmem:[%s2325 + $0x38] sm:$0xff]
        %v2335 = vsel %vm609, %v2324, 0
        %2337 = vmatprep.subr.mxu0 0.0
        %2338 = vmatpush1.msra.mxu0 %v2326
        %2339 = vmatprep.subr.mxu0 0.0
        %2340 = vmatpush1.msra.mxu0 %v2327
        %2341 = vmatprep.subr.mxu0 0.0
        %2342 = vmatpush1.msra.mxu0 %v2328
        %2343 = vmatprep.subr.mxu0 0.0
        %2344 = vmatpush1.msra.mxu0 %v2329
        %2345 = vmatprep.subr.mxu0 0.0
        %2346 = vmatpush1.msra.mxu0 %v2330
        %2347 = vmatprep.subr.mxu0 0.0
        %2348 = vmatpush1.msra.mxu0 %v2331
        %2349 = vmatprep.subr.mxu0 0.0
        %2350 = vmatpush1.msra.mxu0 %v2332
        %2351 = vmatprep.subr.mxu0 0.0
        %2352 = vmatpush1.msra.mxu0 %v2333
        %2353 = vmatprep.subr.mxu0 0.0
        %2354 = vmatpush1.msra.mxu0 0.0
        %2355 = vmatprep.subr.mxu0 0.0
        %2356 = vmatpush1.msra.mxu0 0.0
        %2357 = vmatprep.subr.mxu0 0.0
        %2358 = vmatpush1.msra.mxu0 0.0
        %2359 = vmatprep.subr.mxu0 0.0
        %2360 = vmatpush1.msra.mxu0 0.0
        %2361 = vmatprep.subr.mxu0 0.0
        %2362 = vmatpush1.msra.mxu0 0.0
        %2363 = vmatprep.subr.mxu0 0.0
        %2364 = vmatpush1.msra.mxu0 0.0
        %2365 = vmatprep.subr.mxu0 0.0
        %2366 = vmatpush1.msra.mxu0 0.0
        %2367 = vmatprep.subr.mxu0 0.0
        %2368 = vmatpush1.msra.mxu0 0.0
        %2369 = vmatprep.subr.mxu0 0.0
        %2370 = vmatpush1.msra.mxu0 0.0
        %2371 = vmatprep.subr.mxu0 0.0
        %2372 = vmatpush1.msra.mxu0 0.0
        %2373 = vmatprep.subr.mxu0 0.0
        %2374 = vmatpush1.msra.mxu0 0.0
        %2375 = vmatprep.subr.mxu0 0.0
        %2376 = vmatpush1.msra.mxu0 0.0
        %2377 = vmatprep.subr.mxu0 0.0
        %2378 = vmatpush1.msra.mxu0 0.0
        %2379 = vmatprep.subr.mxu0 0.0
        %2380 = vmatpush1.msra.mxu0 0.0
        %2381 = vmatprep.subr.mxu0 0.0
        %2382 = vmatpush1.msra.mxu0 0.0
        %2383 = vmatprep.subr.mxu0 0.0
        %2384 = vmatpush1.msra.mxu0 0.0
        %2385 = vmatprep.subr.mxu0 0.0
        %2386 = vmatpush1.msra.mxu0 0.0
        %2387 = vmatprep.subr.mxu0 0.0
        %2388 = vmatpush1.msra.mxu0 0.0
        %2389 = vmatprep.subr.mxu0 0.0
        %2390 = vmatpush1.msra.mxu0 0.0
        %2391 = vmatprep.subr.mxu0 0.0
        %2392 = vmatpush1.msra.mxu0 0.0
        %2393 = vmatprep.subr.mxu0 0.0
        %2394 = vmatpush1.msra.mxu0 0.0
        %2395 = vmatprep.subr.mxu0 0.0
        %2396 = vmatpush1.msra.mxu0 0.0
        %2397 = vmatprep.subr.mxu0 0.0
        %2398 = vmatpush1.msra.mxu0 0.0
        %2399 = vmatprep.subr.mxu0 0.0
        %2400 = vmatpush1.msra.mxu0 0.0
        %2401 = vmatprep.mubr.f32.mxu0 0.0
        %2402 = vmatmul.mubr.f32.gmra.mrb[0].mxu0 %v2335
        %v2403 = vpop.f32.mrb[0].mxu0
        %v2404 = vadd.f32 0.0, %v2403
        %v2405 = vpop.f32.mrb[0].mxu0
        %2406 = vdwg.mxu0
        %v2407 = vadd.f32 %v2220, %v2404
        %v2408 = vld [vmem:[%s16] sm:$0x1]
        %v2409 = vmul.f32 %v2407, %v2407
        %vm2410 = vcmask 253952
        %v2411 = vsel %vm2410, %v2409, 0.0
        %2412 = vadd.xlane.f32.xlu0 %v2411
        %v2413 = vpop.xlane.xlu0 %2412
        %v2414 = vmul.f32 %v2413, %v741
        %v2415 = vadd.f32 %v2414, 1e-06
        %v2416 = vrsqrt.pop %v2415
        %v2417 = vmul.f32 %v2407, %v2416
        %v2418 = vmul.f32 %v2417, %v2408
        %v2419 = vld [vmem:[%s17] sm:$0xff]
        %v2420 = vld [vmem:[%s17 + $0x8] sm:$0xff]
        %v2421 = vld [vmem:[%s17 + $0x10] sm:$0xff]
        %v2422 = vld [vmem:[%s17 + $0x18] sm:$0xff]
        %v2423 = vld [vmem:[%s18] sm:$0x1]
        %v2425 = vsel %vm737, %v2418, 0
        %2427 = vmatprep.subr.mxu0 0.0
        %2428 = vmatpush1.msra.mxu0 %v2419
        %2429 = vmatprep.subr.mxu0 0.0
        %2430 = vmatpush1.msra.mxu0 %v2420
        %2431 = vmatprep.subr.mxu0 0.0
        %2432 = vmatpush1.msra.mxu0 %v2421
        %2433 = vmatprep.subr.mxu0 0.0
        %2434 = vmatpush1.msra.mxu0 %v2422
        %2435 = vmatprep.subr.mxu0 0.0
        %2436 = vmatpush1.msra.mxu0 0.0
        %2437 = vmatprep.subr.mxu0 0.0
        %2438 = vmatpush1.msra.mxu0 0.0
        %2439 = vmatprep.subr.mxu0 0.0
        %2440 = vmatpush1.msra.mxu0 0.0
        %2441 = vmatprep.subr.mxu0 0.0
        %2442 = vmatpush1.msra.mxu0 0.0
        %2443 = vmatprep.subr.mxu0 0.0
        %2444 = vmatpush1.msra.mxu0 0.0
        %2445 = vmatprep.subr.mxu0 0.0
        %2446 = vmatpush1.msra.mxu0 0.0
        %2447 = vmatprep.subr.mxu0 0.0
        %2448 = vmatpush1.msra.mxu0 0.0
        %2449 = vmatprep.subr.mxu0 0.0
        %2450 = vmatpush1.msra.mxu0 0.0
        %2451 = vmatprep.subr.mxu0 0.0
        %2452 = vmatpush1.msra.mxu0 0.0
        %2453 = vmatprep.subr.mxu0 0.0
        %2454 = vmatpush1.msra.mxu0 0.0
        %2455 = vmatprep.subr.mxu0 0.0
        %2456 = vmatpush1.msra.mxu0 0.0
        %2457 = vmatprep.subr.mxu0 0.0
        %2458 = vmatpush1.msra.mxu0 0.0
        %2459 = vmatprep.subr.mxu0 0.0
        %2460 = vmatpush1.msra.mxu0 0.0
        %2461 = vmatprep.subr.mxu0 0.0
        %2462 = vmatpush1.msra.mxu0 0.0
        %2463 = vmatprep.subr.mxu0 0.0
        %2464 = vmatpush1.msra.mxu0 0.0
        %2465 = vmatprep.subr.mxu0 0.0
        %2466 = vmatpush1.msra.mxu0 0.0
        %2467 = vmatprep.subr.mxu0 0.0
        %2468 = vmatpush1.msra.mxu0 0.0
        %2469 = vmatprep.subr.mxu0 0.0
        %2470 = vmatpush1.msra.mxu0 0.0
        %2471 = vmatprep.subr.mxu0 0.0
        %2472 = vmatpush1.msra.mxu0 0.0
        %2473 = vmatprep.subr.mxu0 0.0
        %2474 = vmatpush1.msra.mxu0 0.0
        %2475 = vmatprep.subr.mxu0 0.0
        %2476 = vmatpush1.msra.mxu0 0.0
        %2477 = vmatprep.subr.mxu0 0.0
        %2478 = vmatpush1.msra.mxu0 0.0
        %2479 = vmatprep.subr.mxu0 0.0
        %2480 = vmatpush1.msra.mxu0 0.0
        %2481 = vmatprep.subr.mxu0 0.0
        %2482 = vmatpush1.msra.mxu0 0.0
        %2483 = vmatprep.subr.mxu0 0.0
        %2484 = vmatpush1.msra.mxu0 0.0
        %2485 = vmatprep.subr.mxu0 0.0
        %2486 = vmatpush1.msra.mxu0 0.0
        %2487 = vmatprep.subr.mxu0 0.0
        %2488 = vmatpush1.msra.mxu0 0.0
        %2489 = vmatprep.subr.mxu0 0.0
        %2490 = vmatpush1.msra.mxu0 0.0
        %2491 = vmatprep.mubr.f32.mxu0 0.0
        %2492 = vmatmul.mubr.f32.gmra.mrb[0].mxu0 %v2425
        %v2493 = vpop.f32.mrb[0].mxu0
        %v2494 = vadd.f32 %v2423, %v2493
        %v2495 = vpop.f32.mrb[0].mxu0
        %2496 = vdwg.mxu0
        %vm2497 = vcmask 73728
        %2498 = vst.msk [vmem:[%s594] sm:$0x1] %vm2497, %v2494
        %s2499 = sand.u32 %s445, 1
        %s2500 = scalar_lea.sflag [#allocation3], %s2499
        %s2501 = sand.u32 %s445, 1
        %s2502 = scalar_lea.vmem [#allocation2], %s2501
        // Predicated region
        $region97: #{vit_forward.1} parent=95 // pred_check
          %p2503 = pneg %p455
        $region98: #{vit_forward.1} parent=95 // pred_check_branch
          %2505 = sbr.rel (%p2503) target = $region100
        $region99: #{vit_forward.1} parent=95 // pred_region
          %s2507 = ssub.s32 16, 16
          %2508 = vsyncadd %s2500, %s2507
          %s2509 = smul.addr %s33, 16
          %s2510 = scalar_lea.hbm %s19, %s2509
          %s2512 = sshll.u32 %s2502, 4
          %s2513 = int_to_ptr.vmem [resolvable:$true] %s2512
          %2515 = dma.vmem_to_hbm [thread:$0]  %s2513, 16, %s2510, %s2500
        $region100: #{vit_forward.1} parent=95 // pred_fallthru
          _
      $region96: #{vit_forward.1} parent=5 // pred_fallthru
        _
      %p2516 = scmp.le.s32.totalorder 2, %s28
      // Predicated region
      $region101: #{vit_forward.1} parent=5 // pred_check
        %p2517 = pneg %p2516
      $region102: #{vit_forward.1} parent=5 // pred_check_branch
        %2519 = sbr.rel (%p2517) target = $region104
      $region103: #{vit_forward.1} parent=5 // pred_region
        %s2520 = ssub.s32 %s28, 2
        // Predicated region
        $region105: #{vit_forward.1} parent=103 // pred_check
          %p2521 = pneg %p461
        $region106: #{vit_forward.1} parent=103 // pred_check_branch
          %2523 = sbr.rel (%p2521) target = $region108
        $region107: #{vit_forward.1} parent=103 // pred_region
          %s2524 = sand.u32 %s446, 1
          %s2525 = scalar_lea.sflag [#allocation3], %s2524
          %s2526 = sand.u32 %s446, 1
          %s2527 = scalar_lea.vmem [#allocation2], %s2526
          %2528 = dma.done %s2525, 16
        $region108: #{vit_forward.1} parent=103 // pred_fallthru
          _
      $region104: #{vit_forward.1} parent=5 // pred_fallthru
        _
    $region6: #{vit_forward.1} parent=1 // loop_footer
      %s32 = sadd.s32 1, %s28
    $region7: #{vit_forward.1} parent=1 // loop_footer_branch
      %27 = sbr.rel target = $region3
    $region8: #{vit_forward.1} parent=1 // loop_exit
      _
    %2529 = vsyncpa [#allocation3], 1
    %s2530 = scalar_lea.sflag [#allocation3], 1
    %2531 = vsyncpa %s2530, 1

</llo_original>
